<compile_context>
chip_gen: v6e
topology: v6e:2x2x1
jax: 0.10.0
libtpu: 0.0.40
codegen_flags: <defaults>
</compile_context>

<pallas_src>
import jax
import jax.numpy as jnp
from jax import lax
from jax.experimental import pallas as pl
from jax.experimental.pallas import tpu as pltpu

BN_EPS = 1e-5  # nn.BatchNorm3d default


# ---------------- host-side weight / constant refolding ----------------
def _banded_w_matrices(w, W):
    """Fold a (F, C, K, K, K) conv weight into per-(kd,kh) banded matrices
    B[kd*K+kh, ci*W+wi, o*W+wo] = w[o, ci, kd, kh, wi-wo+p] (0 outside band),
    so the conv over (ci, kw) becomes one (rows, C*W) @ (C*W, F*W) matmul per
    (kd, kh) tap; W-direction zero padding is implicit in the band."""
    F, C, K = w.shape[0], w.shape[1], w.shape[2]
    p = K // 2
    wi = jnp.arange(W)[:, None]
    wo = jnp.arange(W)[None, :]
    kw = wi - wo + p                                   # (W, W)
    valid = (kw >= 0) & (kw < K)
    kw_c = jnp.clip(kw, 0, K - 1)
    g = w[:, :, :, :, kw_c]                            # (F, C, K, K, W, W)
    g = g * valid[None, None, None, None, :, :].astype(w.dtype)
    g = jnp.transpose(g, (2, 3, 1, 4, 0, 5))           # (kd, kh, ci, wi, o, wo)
    return g.reshape(K * K, C * W, F * W)


# ---------------- fused forward ----------------
def convblock_forward(x, params):
    N, C, D, H, W = x.shape
    w3, w5 = params["conv3_w"], params["conv5_w"]
    F = w3.shape[0]
    assert D % 2 == 0 and H % 2 == 0 and W % 2 == 0
    add_residual = (C != 1)                 # PyTorch branches on in_channels
    if add_residual:
        assert C == F, "residual branch (xall + cat(x,x)) needs in_channels == filter_number"
    Do, Ho, Wo = D // 2, H // 2, W // 2
    CW, FW, FWo = C * W, F * W, F * Wo
    DH, DoHo = D * H, Do * Ho

    # Merged banded conv weights (bf16): tap (kd, kh) of the 5x5 (d, h) window
    # carries the conv5 contribution in lanes [FW, 2FW) and, for the inner 3x3
    # taps, the conv3 contribution in lanes [0, FW).  34 -> 25 matmuls, N=2*FW.
    b3 = _banded_w_matrices(w3, W)                       # (9,  CW, FW)
    b5 = _banded_w_matrices(w5, W)                       # (25, CW, FW)
    inner = jnp.array([(kd + 1) * 5 + (kh + 1) for kd in range(3) for kh in range(3)])
    b3_full = jnp.zeros((25, CW, FW), w3.dtype).at[inner].set(b3)
    bw = jnp.concatenate([b3_full, b5], axis=-1).astype(jnp.bfloat16)   # (25, CW, 2FW)

    # BatchNorm3d (eval) folded into the lane-pool matrix + a pre-pooled bias:
    # avgpool(scale*y + bias) = scale*avgpool(y) + bias (per channel; pool linear).
    scale_c = params["bn_gamma"] * lax.rsqrt(params["bn_var"] + BN_EPS)  # (2F,)
    bias_c = params["bn_beta"] - params["bn_mean"] * scale_c
    li = jnp.arange(2 * FW)
    lo = jnp.arange(2 * FWo)
    q = ((li[:, None] // W == lo[None, :] // Wo)
         & ((li[:, None] % W) // 2 == lo[None, :] % Wo)).astype(jnp.float32) * 0.5
    q_bn = q * scale_c[lo // Wo][None, :]                # (2FW, 2FWo), BN scale folded
    bias = (bias_c[lo // Wo])[None, :]                   # (1, 2FWo), pre-pooled bias

    # Per-batch row pool (rows = (d, h)); block-diagonality over n is handled
    # by the grid, so this stays (Do*Ho, D*H) instead of quadratic in N*D*H.
    ri = jnp.arange(DH)
    ro = jnp.arange(DoHo)
    p_pool = ((ro[:, None] // Ho == (ri[None, :] // H) // 2)
              & (ro[:, None] % Ho == (ri[None, :] % H) // 2)).astype(jnp.float32) * 0.25

    # Channels packed into lanes (lane = ci*W + w), (d, h) padded by 2 for the
    # k=5 window (k=3 uses the inner offsets of the same pad).  bf16 storage.
    # TODO(synk): this wrapper transpose+pad costs one extra HBM pass over x;
    #             an in-kernel per-channel DMA pack into a zeroed VMEM scratch
    #             would remove it.
    x_cl = jnp.transpose(x, (0, 2, 3, 1, 4)).reshape(N, D, H, CW)
    xp = jnp.pad(x_cl, ((0, 0), (2, 2), (2, 2), (0, 0))).astype(jnp.bfloat16)

    def kernel(xp_ref, bw_ref, p_ref, q_ref, bias_ref, o_ref):
        x_blk = xp_ref[0]                                # (D+4, H+4, CW) bf16
        # 25 merged banded taps -> ONE (DH, 2FW) f32 accumulator on the MXU.
        acc = jnp.zeros((DH, 2 * FW), jnp.float32)
        for kd in range(5):
            for kh in range(5):
                xs = x_blk[kd:kd + D, kh:kh + H, :].reshape(DH, CW)
                acc = acc + jnp.dot(xs, bw_ref[kd * 5 + kh],
                                    preferred_element_type=jnp.float32)
        y = jnp.maximum(acc, 0.0)                        # ReLU in f32 (VPU)
        if add_residual:                                 # xall + cat(x, x): both halves get x
            xc = x_blk[2:2 + D, 2:2 + H, :].reshape(DH, CW).astype(jnp.float32)
            y = y + jnp.concatenate([xc, xc], axis=-1)
        # AvgPool3d(2,2,2) + folded BatchNorm: per-batch row-pool matmul, then
        # BN-scaled lane-pool matmul, then pre-pooled bias.  Output written as
        # a single full-width lane-dense store.
        pooled = jnp.dot(p_ref[...], y, preferred_element_type=jnp.float32)    # (DoHo, 2FW)
        out = jnp.dot(pooled, q_ref[...], preferred_element_type=jnp.float32)  # (DoHo, 2FWo)
        o_ref[0] = out + bias_ref[...]
        # TODO(synk): nn.Dropout3d(p=0.1) is identity in eval mode (no RNG applied).
        # TODO(synk): BatchNorm3d uses eval-mode running stats; training-mode batch
        #             statistics are not computed in-kernel.

    flops = int(2 * N * DH * CW * (2 * FW) * 25
                + 2 * N * DoHo * DH * (2 * FW)
                + 2 * N * DoHo * (2 * FW) * (2 * FWo))
    bytes_acc = int(xp.size * 2 + bw.size * 2
                    + (p_pool.size + q_bn.size + bias.size) * 4
                    + N * DoHo * 2 * FWo * 4)

    # Resident VMEM: double-buffered in/out blocks + constants + live values.
    resident = int(2 * (D + 4) * (H + 4) * CW * 2 + bw.size * 2
                   + (p_pool.size + q_bn.size + bias.size) * 4
                   + 2 * DoHo * 2 * FWo * 4 + 4 * DH * 2 * FW * 4)
    vmem_limit = int(min(64 * 1024 * 1024, max(16 * 1024 * 1024, 4 * resident)))

    out3d = pl.pallas_call(
        kernel,
        out_shape=jax.ShapeDtypeStruct((N, DoHo, 2 * FWo), jnp.float32),
        grid=(N,),
        in_specs=[
            pl.BlockSpec((1, D + 4, H + 4, CW), lambda n: (n, 0, 0, 0)),
            pl.BlockSpec((25, CW, 2 * FW), lambda n: (0, 0, 0)),
            pl.BlockSpec((DoHo, DH), lambda n: (0, 0)),
            pl.BlockSpec((2 * FW, 2 * FWo), lambda n: (0, 0)),
            pl.BlockSpec((1, 2 * FWo), lambda n: (0, 0)),
        ],
        out_specs=pl.BlockSpec((1, DoHo, 2 * FWo), lambda n: (n, 0, 0)),
        compiler_params=pltpu.CompilerParams(
            dimension_semantics=("parallel",),
            vmem_limit_bytes=vmem_limit),
        cost_estimate=pl.CostEstimate(flops=flops, transcendentals=0,
                                      bytes_accessed=bytes_acc),
    )(xp, bw, p_pool, q_bn, bias)

    # rows = (do, ho), lanes = (c2, wo)  ->  NCDHW
    y = out3d.reshape(N, Do, Ho, 2 * F, Wo)
    return jnp.transpose(y, (0, 3, 1, 2, 4))             # (N, 2F, D/2, H/2, W/2)


# ---------------- pure-JAX reference (for self-check) ----------------
def convblock_reference(x, params):
    dn = ('NCDHW', 'OIDHW', 'NCDHW')

    def conv(inp, w, p):
        return lax.conv_general_dilated(inp, w, window_strides=(1, 1, 1),
                                        padding=[(p, p)] * 3, dimension_numbers=dn,
                                        precision=lax.Precision.HIGHEST)

    x3 = jnp.maximum(conv(x, params["conv3_w"], 1), 0.0)
    x5 = jnp.maximum(conv(x, params["conv5_w"], 2), 0.0)
    xall = jnp.concatenate([x3, x5], axis=1)
    if x.shape[1] != 1:
        xall = xall + jnp.concatenate([x, x], axis=1)
    scale = params["bn_gamma"] * lax.rsqrt(params["bn_var"] + BN_EPS)
    bias = params["bn_beta"] - params["bn_mean"] * scale
    bn = xall * scale[None, :, None, None, None] + bias[None, :, None, None, None]
    N_, C2, D_, H_, W_ = bn.shape
    return bn.reshape(N_, C2, D_ // 2, 2, H_ // 2, 2, W_ // 2, 2).mean(axis=(3, 5, 7))


def init_params(key, in_channels, filter_number):
    ks = jax.random.split(key, 6)
    c2 = 2 * filter_number
    return {
        "conv3_w": 0.05 * jax.random.normal(ks[0], (filter_number, in_channels, 3, 3, 3), jnp.float32),
        "conv5_w": 0.02 * jax.random.normal(ks[1], (filter_number, in_channels, 5, 5, 5), jnp.float32),
        "bn_gamma": 1.0 + 0.1 * jax.random.normal(ks[2], (c2,), jnp.float32),
        "bn_beta": 0.1 * jax.random.normal(ks[3], (c2,), jnp.float32),
        "bn_mean": 0.1 * jax.random.normal(ks[4], (c2,), jnp.float32),
        "bn_var": jax.random.uniform(ks[5], (c2,), jnp.float32, 0.5, 1.5),
    }


if __name__ == "__main__":
    key = jax.random.PRNGKey(0)
    kx, kp = jax.random.split(key)
    N, C, FN = 2, 4, 4          # in_channels=4 -> exercises the residual (else) branch
    D, H, W = 8, 8, 16
    x = jax.random.normal(kx, (N, C, D, H, W), jnp.float32)
    params = init_params(kp, C, FN)

    out = jax.jit(convblock_forward)(x, params)
    out = jax.block_until_ready(out)
    assert out.shape == (N, 2 * FN, D // 2, H // 2, W // 2)
    assert bool(jnp.all(jnp.isfinite(out)))

    ref = convblock_reference(x, params)
    err = float(jnp.max(jnp.abs(out - ref)))
    # bf16 MXU operands (weights + packed activations); f32 accumulation/VPU.
    assert err < 3e-2, f"max abs error vs reference: {err}"
    print("KERNEL_OK")
</pallas_src>

<mosaic_0001>
module attributes {stable_mosaic.version = 11 : i64} {
  func.func @kernel(%arg0: i32, %arg1: memref<1x12x12x64xbf16, #tpu.memory_space<vmem>>, %arg2: memref<25x64x128xbf16, #tpu.memory_space<vmem>>, %arg3: memref<16x64xf32, #tpu.memory_space<vmem>>, %arg4: memref<128x64xf32, #tpu.memory_space<vmem>>, %arg5: memref<1x64xf32, #tpu.memory_space<vmem>>, %arg6: memref<1x16x64xf32, #tpu.memory_space<vmem>>) attributes {dimension_semantics = [#tpu.dimension_semantics<parallel>], iteration_bounds = array<i64: 2>, scalar_prefetch = 0 : i64, scratch_operands = 0 : i64, tpu.core_type = #tpu.core_type<tc>, window_params = [{transform_indices = @transform_0, window_bounds = array<i64: 1, 12, 12, 64>}, {pipeline_mode = #tpu.pipeline_mode<synchronous>, transform_indices = @transform_1, window_bounds = array<i64: 25, 64, 128>}, {pipeline_mode = #tpu.pipeline_mode<synchronous>, transform_indices = @transform_2, window_bounds = array<i64: 16, 64>}, {pipeline_mode = #tpu.pipeline_mode<synchronous>, transform_indices = @transform_3, window_bounds = array<i64: 128, 64>}, {pipeline_mode = #tpu.pipeline_mode<synchronous>, transform_indices = @transform_4, window_bounds = array<i64: 1, 64>}, {transform_indices = @transform_5, window_bounds = array<i64: 1, 16, 64>}]} {
    %c0 = arith.constant 0 : index
    %c0_0 = arith.constant 0 : index
    %c0_1 = arith.constant 0 : index
    %c0_2 = arith.constant 0 : index
    %0 = vector.load %arg1[%c0, %c0_0, %c0_1, %c0_2] : memref<1x12x12x64xbf16, #tpu.memory_space<vmem>>, vector<1x12x12x64xbf16>
    %1 = vector.shape_cast %0 : vector<1x12x12x64xbf16> to vector<12x12x64xbf16>
    %cst = arith.constant 0.000000e+00 : f32
    %2 = vector.broadcast %cst : f32 to vector<64x128xf32>
    %3 = vector.extract_strided_slice %1 {offsets = [0, 0, 0], sizes = [8, 8, 64], strides = [1, 1, 1]} : vector<12x12x64xbf16> to vector<8x8x64xbf16>
    %4 = vector.shape_cast %3 : vector<8x8x64xbf16> to vector<64x64xbf16>
    %c0_3 = arith.constant 0 : index
    %c0_4 = arith.constant 0 : index
    %c0_5 = arith.constant 0 : index
    %5 = vector.load %arg2[%c0_3, %c0_4, %c0_5] : memref<25x64x128xbf16, #tpu.memory_space<vmem>>, vector<1x64x128xbf16>
    %6 = vector.shape_cast %5 : vector<1x64x128xbf16> to vector<64x128xbf16>
    %cst_6 = arith.constant dense<0.000000e+00> : vector<64x128xf32>
    %7 = tpu.matmul %4, %6, %cst_6 {dimension_numbers = #tpu.dot_dimension_numbers<[1], [0], [0], [1], [0, 0, 1, 1], [], []>} : vector<64x64xbf16>, vector<64x128xbf16>, vector<64x128xf32> -> vector<64x128xf32>
    %8 = arith.addf %2, %7 : vector<64x128xf32>
    %9 = vector.extract_strided_slice %1 {offsets = [0, 1, 0], sizes = [8, 8, 64], strides = [1, 1, 1]} : vector<12x12x64xbf16> to vector<8x8x64xbf16>
    %10 = vector.shape_cast %9 : vector<8x8x64xbf16> to vector<64x64xbf16>
    %c1 = arith.constant 1 : index
    %c0_7 = arith.constant 0 : index
    %c0_8 = arith.constant 0 : index
    %11 = vector.load %arg2[%c1, %c0_7, %c0_8] : memref<25x64x128xbf16, #tpu.memory_space<vmem>>, vector<1x64x128xbf16>
    %12 = vector.shape_cast %11 : vector<1x64x128xbf16> to vector<64x128xbf16>
    %cst_9 = arith.constant dense<0.000000e+00> : vector<64x128xf32>
    %13 = tpu.matmul %10, %12, %cst_9 {dimension_numbers = #tpu.dot_dimension_numbers<[1], [0], [0], [1], [0, 0, 1, 1], [], []>} : vector<64x64xbf16>, vector<64x128xbf16>, vector<64x128xf32> -> vector<64x128xf32>
    %14 = arith.addf %8, %13 : vector<64x128xf32>
    %15 = vector.extract_strided_slice %1 {offsets = [0, 2, 0], sizes = [8, 8, 64], strides = [1, 1, 1]} : vector<12x12x64xbf16> to vector<8x8x64xbf16>
    %16 = vector.shape_cast %15 : vector<8x8x64xbf16> to vector<64x64xbf16>
    %c2 = arith.constant 2 : index
    %c0_10 = arith.constant 0 : index
    %c0_11 = arith.constant 0 : index
    %17 = vector.load %arg2[%c2, %c0_10, %c0_11] : memref<25x64x128xbf16, #tpu.memory_space<vmem>>, vector<1x64x128xbf16>
    %18 = vector.shape_cast %17 : vector<1x64x128xbf16> to vector<64x128xbf16>
    %cst_12 = arith.constant dense<0.000000e+00> : vector<64x128xf32>
    %19 = tpu.matmul %16, %18, %cst_12 {dimension_numbers = #tpu.dot_dimension_numbers<[1], [0], [0], [1], [0, 0, 1, 1], [], []>} : vector<64x64xbf16>, vector<64x128xbf16>, vector<64x128xf32> -> vector<64x128xf32>
    %20 = arith.addf %14, %19 : vector<64x128xf32>
    %21 = vector.extract_strided_slice %1 {offsets = [0, 3, 0], sizes = [8, 8, 64], strides = [1, 1, 1]} : vector<12x12x64xbf16> to vector<8x8x64xbf16>
    %22 = vector.shape_cast %21 : vector<8x8x64xbf16> to vector<64x64xbf16>
    %c3 = arith.constant 3 : index
    %c0_13 = arith.constant 0 : index
    %c0_14 = arith.constant 0 : index
    %23 = vector.load %arg2[%c3, %c0_13, %c0_14] : memref<25x64x128xbf16, #tpu.memory_space<vmem>>, vector<1x64x128xbf16>
    %24 = vector.shape_cast %23 : vector<1x64x128xbf16> to vector<64x128xbf16>
    %cst_15 = arith.constant dense<0.000000e+00> : vector<64x128xf32>
    %25 = tpu.matmul %22, %24, %cst_15 {dimension_numbers = #tpu.dot_dimension_numbers<[1], [0], [0], [1], [0, 0, 1, 1], [], []>} : vector<64x64xbf16>, vector<64x128xbf16>, vector<64x128xf32> -> vector<64x128xf32>
    %26 = arith.addf %20, %25 : vector<64x128xf32>
    %27 = vector.extract_strided_slice %1 {offsets = [0, 4, 0], sizes = [8, 8, 64], strides = [1, 1, 1]} : vector<12x12x64xbf16> to vector<8x8x64xbf16>
    %28 = vector.shape_cast %27 : vector<8x8x64xbf16> to vector<64x64xbf16>
    %c4 = arith.constant 4 : index
    %c0_16 = arith.constant 0 : index
    %c0_17 = arith.constant 0 : index
    %29 = vector.load %arg2[%c4, %c0_16, %c0_17] : memref<25x64x128xbf16, #tpu.memory_space<vmem>>, vector<1x64x128xbf16>
    %30 = vector.shape_cast %29 : vector<1x64x128xbf16> to vector<64x128xbf16>
    %cst_18 = arith.constant dense<0.000000e+00> : vector<64x128xf32>
    %31 = tpu.matmul %28, %30, %cst_18 {dimension_numbers = #tpu.dot_dimension_numbers<[1], [0], [0], [1], [0, 0, 1, 1], [], []>} : vector<64x64xbf16>, vector<64x128xbf16>, vector<64x128xf32> -> vector<64x128xf32>
    %32 = arith.addf %26, %31 : vector<64x128xf32>
    %33 = vector.extract_strided_slice %1 {offsets = [1, 0, 0], sizes = [8, 8, 64], strides = [1, 1, 1]} : vector<12x12x64xbf16> to vector<8x8x64xbf16>
    %34 = vector.shape_cast %33 : vector<8x8x64xbf16> to vector<64x64xbf16>
    %c5 = arith.constant 5 : index
    %c0_19 = arith.constant 0 : index
    %c0_20 = arith.constant 0 : index
    %35 = vector.load %arg2[%c5, %c0_19, %c0_20] : memref<25x64x128xbf16, #tpu.memory_space<vmem>>, vector<1x64x128xbf16>
    %36 = vector.shape_cast %35 : vector<1x64x128xbf16> to vector<64x128xbf16>
    %cst_21 = arith.constant dense<0.000000e+00> : vector<64x128xf32>
    %37 = tpu.matmul %34, %36, %cst_21 {dimension_numbers = #tpu.dot_dimension_numbers<[1], [0], [0], [1], [0, 0, 1, 1], [], []>} : vector<64x64xbf16>, vector<64x128xbf16>, vector<64x128xf32> -> vector<64x128xf32>
    %38 = arith.addf %32, %37 : vector<64x128xf32>
    %39 = vector.extract_strided_slice %1 {offsets = [1, 1, 0], sizes = [8, 8, 64], strides = [1, 1, 1]} : vector<12x12x64xbf16> to vector<8x8x64xbf16>
    %40 = vector.shape_cast %39 : vector<8x8x64xbf16> to vector<64x64xbf16>
    %c6 = arith.constant 6 : index
    %c0_22 = arith.constant 0 : index
    %c0_23 = arith.constant 0 : index
    %41 = vector.load %arg2[%c6, %c0_22, %c0_23] : memref<25x64x128xbf16, #tpu.memory_space<vmem>>, vector<1x64x128xbf16>
    %42 = vector.shape_cast %41 : vector<1x64x128xbf16> to vector<64x128xbf16>
    %cst_24 = arith.constant dense<0.000000e+00> : vector<64x128xf32>
    %43 = tpu.matmul %40, %42, %cst_24 {dimension_numbers = #tpu.dot_dimension_numbers<[1], [0], [0], [1], [0, 0, 1, 1], [], []>} : vector<64x64xbf16>, vector<64x128xbf16>, vector<64x128xf32> -> vector<64x128xf32>
    %44 = arith.addf %38, %43 : vector<64x128xf32>
    %45 = vector.extract_strided_slice %1 {offsets = [1, 2, 0], sizes = [8, 8, 64], strides = [1, 1, 1]} : vector<12x12x64xbf16> to vector<8x8x64xbf16>
    %46 = vector.shape_cast %45 : vector<8x8x64xbf16> to vector<64x64xbf16>
    %c7 = arith.constant 7 : index
    %c0_25 = arith.constant 0 : index
    %c0_26 = arith.constant 0 : index
    %47 = vector.load %arg2[%c7, %c0_25, %c0_26] : memref<25x64x128xbf16, #tpu.memory_space<vmem>>, vector<1x64x128xbf16>
    %48 = vector.shape_cast %47 : vector<1x64x128xbf16> to vector<64x128xbf16>
    %cst_27 = arith.constant dense<0.000000e+00> : vector<64x128xf32>
    %49 = tpu.matmul %46, %48, %cst_27 {dimension_numbers = #tpu.dot_dimension_numbers<[1], [0], [0], [1], [0, 0, 1, 1], [], []>} : vector<64x64xbf16>, vector<64x128xbf16>, vector<64x128xf32> -> vector<64x128xf32>
    %50 = arith.addf %44, %49 : vector<64x128xf32>
    %51 = vector.extract_strided_slice %1 {offsets = [1, 3, 0], sizes = [8, 8, 64], strides = [1, 1, 1]} : vector<12x12x64xbf16> to vector<8x8x64xbf16>
    %52 = vector.shape_cast %51 : vector<8x8x64xbf16> to vector<64x64xbf16>
    %c8 = arith.constant 8 : index
    %c0_28 = arith.constant 0 : index
    %c0_29 = arith.constant 0 : index
    %53 = vector.load %arg2[%c8, %c0_28, %c0_29] : memref<25x64x128xbf16, #tpu.memory_space<vmem>>, vector<1x64x128xbf16>
    %54 = vector.shape_cast %53 : vector<1x64x128xbf16> to vector<64x128xbf16>
    %cst_30 = arith.constant dense<0.000000e+00> : vector<64x128xf32>
    %55 = tpu.matmul %52, %54, %cst_30 {dimension_numbers = #tpu.dot_dimension_numbers<[1], [0], [0], [1], [0, 0, 1, 1], [], []>} : vector<64x64xbf16>, vector<64x128xbf16>, vector<64x128xf32> -> vector<64x128xf32>
    %56 = arith.addf %50, %55 : vector<64x128xf32>
    %57 = vector.extract_strided_slice %1 {offsets = [1, 4, 0], sizes = [8, 8, 64], strides = [1, 1, 1]} : vector<12x12x64xbf16> to vector<8x8x64xbf16>
    %58 = vector.shape_cast %57 : vector<8x8x64xbf16> to vector<64x64xbf16>
    %c9 = arith.constant 9 : index
    %c0_31 = arith.constant 0 : index
    %c0_32 = arith.constant 0 : index
    %59 = vector.load %arg2[%c9, %c0_31, %c0_32] : memref<25x64x128xbf16, #tpu.memory_space<vmem>>, vector<1x64x128xbf16>
    %60 = vector.shape_cast %59 : vector<1x64x128xbf16> to vector<64x128xbf16>
    %cst_33 = arith.constant dense<0.000000e+00> : vector<64x128xf32>
    %61 = tpu.matmul %58, %60, %cst_33 {dimension_numbers = #tpu.dot_dimension_numbers<[1], [0], [0], [1], [0, 0, 1, 1], [], []>} : vector<64x64xbf16>, vector<64x128xbf16>, vector<64x128xf32> -> vector<64x128xf32>
    %62 = arith.addf %56, %61 : vector<64x128xf32>
    %63 = vector.extract_strided_slice %1 {offsets = [2, 0, 0], sizes = [8, 8, 64], strides = [1, 1, 1]} : vector<12x12x64xbf16> to vector<8x8x64xbf16>
    %64 = vector.shape_cast %63 : vector<8x8x64xbf16> to vector<64x64xbf16>
    %c10 = arith.constant 10 : index
    %c0_34 = arith.constant 0 : index
    %c0_35 = arith.constant 0 : index
    %65 = vector.load %arg2[%c10, %c0_34, %c0_35] : memref<25x64x128xbf16, #tpu.memory_space<vmem>>, vector<1x64x128xbf16>
    %66 = vector.shape_cast %65 : vector<1x64x128xbf16> to vector<64x128xbf16>
    %cst_36 = arith.constant dense<0.000000e+00> : vector<64x128xf32>
    %67 = tpu.matmul %64, %66, %cst_36 {dimension_numbers = #tpu.dot_dimension_numbers<[1], [0], [0], [1], [0, 0, 1, 1], [], []>} : vector<64x64xbf16>, vector<64x128xbf16>, vector<64x128xf32> -> vector<64x128xf32>
    %68 = arith.addf %62, %67 : vector<64x128xf32>
    %69 = vector.extract_strided_slice %1 {offsets = [2, 1, 0], sizes = [8, 8, 64], strides = [1, 1, 1]} : vector<12x12x64xbf16> to vector<8x8x64xbf16>
    %70 = vector.shape_cast %69 : vector<8x8x64xbf16> to vector<64x64xbf16>
    %c11 = arith.constant 11 : index
    %c0_37 = arith.constant 0 : index
    %c0_38 = arith.constant 0 : index
    %71 = vector.load %arg2[%c11, %c0_37, %c0_38] : memref<25x64x128xbf16, #tpu.memory_space<vmem>>, vector<1x64x128xbf16>
    %72 = vector.shape_cast %71 : vector<1x64x128xbf16> to vector<64x128xbf16>
    %cst_39 = arith.constant dense<0.000000e+00> : vector<64x128xf32>
    %73 = tpu.matmul %70, %72, %cst_39 {dimension_numbers = #tpu.dot_dimension_numbers<[1], [0], [0], [1], [0, 0, 1, 1], [], []>} : vector<64x64xbf16>, vector<64x128xbf16>, vector<64x128xf32> -> vector<64x128xf32>
    %74 = arith.addf %68, %73 : vector<64x128xf32>
    %75 = vector.extract_strided_slice %1 {offsets = [2, 2, 0], sizes = [8, 8, 64], strides = [1, 1, 1]} : vector<12x12x64xbf16> to vector<8x8x64xbf16>
    %76 = vector.shape_cast %75 : vector<8x8x64xbf16> to vector<64x64xbf16>
    %c12 = arith.constant 12 : index
    %c0_40 = arith.constant 0 : index
    %c0_41 = arith.constant 0 : index
    %77 = vector.load %arg2[%c12, %c0_40, %c0_41] : memref<25x64x128xbf16, #tpu.memory_space<vmem>>, vector<1x64x128xbf16>
    %78 = vector.shape_cast %77 : vector<1x64x128xbf16> to vector<64x128xbf16>
    %cst_42 = arith.constant dense<0.000000e+00> : vector<64x128xf32>
    %79 = tpu.matmul %76, %78, %cst_42 {dimension_numbers = #tpu.dot_dimension_numbers<[1], [0], [0], [1], [0, 0, 1, 1], [], []>} : vector<64x64xbf16>, vector<64x128xbf16>, vector<64x128xf32> -> vector<64x128xf32>
    %80 = arith.addf %74, %79 : vector<64x128xf32>
    %81 = vector.extract_strided_slice %1 {offsets = [2, 3, 0], sizes = [8, 8, 64], strides = [1, 1, 1]} : vector<12x12x64xbf16> to vector<8x8x64xbf16>
    %82 = vector.shape_cast %81 : vector<8x8x64xbf16> to vector<64x64xbf16>
    %c13 = arith.constant 13 : index
    %c0_43 = arith.constant 0 : index
    %c0_44 = arith.constant 0 : index
    %83 = vector.load %arg2[%c13, %c0_43, %c0_44] : memref<25x64x128xbf16, #tpu.memory_space<vmem>>, vector<1x64x128xbf16>
    %84 = vector.shape_cast %83 : vector<1x64x128xbf16> to vector<64x128xbf16>
    %cst_45 = arith.constant dense<0.000000e+00> : vector<64x128xf32>
    %85 = tpu.matmul %82, %84, %cst_45 {dimension_numbers = #tpu.dot_dimension_numbers<[1], [0], [0], [1], [0, 0, 1, 1], [], []>} : vector<64x64xbf16>, vector<64x128xbf16>, vector<64x128xf32> -> vector<64x128xf32>
    %86 = arith.addf %80, %85 : vector<64x128xf32>
    %87 = vector.extract_strided_slice %1 {offsets = [2, 4, 0], sizes = [8, 8, 64], strides = [1, 1, 1]} : vector<12x12x64xbf16> to vector<8x8x64xbf16>
    %88 = vector.shape_cast %87 : vector<8x8x64xbf16> to vector<64x64xbf16>
    %c14 = arith.constant 14 : index
    %c0_46 = arith.constant 0 : index
    %c0_47 = arith.constant 0 : index
    %89 = vector.load %arg2[%c14, %c0_46, %c0_47] : memref<25x64x128xbf16, #tpu.memory_space<vmem>>, vector<1x64x128xbf16>
    %90 = vector.shape_cast %89 : vector<1x64x128xbf16> to vector<64x128xbf16>
    %cst_48 = arith.constant dense<0.000000e+00> : vector<64x128xf32>
    %91 = tpu.matmul %88, %90, %cst_48 {dimension_numbers = #tpu.dot_dimension_numbers<[1], [0], [0], [1], [0, 0, 1, 1], [], []>} : vector<64x64xbf16>, vector<64x128xbf16>, vector<64x128xf32> -> vector<64x128xf32>
    %92 = arith.addf %86, %91 : vector<64x128xf32>
    %93 = vector.extract_strided_slice %1 {offsets = [3, 0, 0], sizes = [8, 8, 64], strides = [1, 1, 1]} : vector<12x12x64xbf16> to vector<8x8x64xbf16>
    %94 = vector.shape_cast %93 : vector<8x8x64xbf16> to vector<64x64xbf16>
    %c15 = arith.constant 15 : index
    %c0_49 = arith.constant 0 : index
    %c0_50 = arith.constant 0 : index
    %95 = vector.load %arg2[%c15, %c0_49, %c0_50] : memref<25x64x128xbf16, #tpu.memory_space<vmem>>, vector<1x64x128xbf16>
    %96 = vector.shape_cast %95 : vector<1x64x128xbf16> to vector<64x128xbf16>
    %cst_51 = arith.constant dense<0.000000e+00> : vector<64x128xf32>
    %97 = tpu.matmul %94, %96, %cst_51 {dimension_numbers = #tpu.dot_dimension_numbers<[1], [0], [0], [1], [0, 0, 1, 1], [], []>} : vector<64x64xbf16>, vector<64x128xbf16>, vector<64x128xf32> -> vector<64x128xf32>
    %98 = arith.addf %92, %97 : vector<64x128xf32>
    %99 = vector.extract_strided_slice %1 {offsets = [3, 1, 0], sizes = [8, 8, 64], strides = [1, 1, 1]} : vector<12x12x64xbf16> to vector<8x8x64xbf16>
    %100 = vector.shape_cast %99 : vector<8x8x64xbf16> to vector<64x64xbf16>
    %c16 = arith.constant 16 : index
    %c0_52 = arith.constant 0 : index
    %c0_53 = arith.constant 0 : index
    %101 = vector.load %arg2[%c16, %c0_52, %c0_53] : memref<25x64x128xbf16, #tpu.memory_space<vmem>>, vector<1x64x128xbf16>
    %102 = vector.shape_cast %101 : vector<1x64x128xbf16> to vector<64x128xbf16>
    %cst_54 = arith.constant dense<0.000000e+00> : vector<64x128xf32>
    %103 = tpu.matmul %100, %102, %cst_54 {dimension_numbers = #tpu.dot_dimension_numbers<[1], [0], [0], [1], [0, 0, 1, 1], [], []>} : vector<64x64xbf16>, vector<64x128xbf16>, vector<64x128xf32> -> vector<64x128xf32>
    %104 = arith.addf %98, %103 : vector<64x128xf32>
    %105 = vector.extract_strided_slice %1 {offsets = [3, 2, 0], sizes = [8, 8, 64], strides = [1, 1, 1]} : vector<12x12x64xbf16> to vector<8x8x64xbf16>
    %106 = vector.shape_cast %105 : vector<8x8x64xbf16> to vector<64x64xbf16>
    %c17 = arith.constant 17 : index
    %c0_55 = arith.constant 0 : index
    %c0_56 = arith.constant 0 : index
    %107 = vector.load %arg2[%c17, %c0_55, %c0_56] : memref<25x64x128xbf16, #tpu.memory_space<vmem>>, vector<1x64x128xbf16>
    %108 = vector.shape_cast %107 : vector<1x64x128xbf16> to vector<64x128xbf16>
    %cst_57 = arith.constant dense<0.000000e+00> : vector<64x128xf32>
    %109 = tpu.matmul %106, %108, %cst_57 {dimension_numbers = #tpu.dot_dimension_numbers<[1], [0], [0], [1], [0, 0, 1, 1], [], []>} : vector<64x64xbf16>, vector<64x128xbf16>, vector<64x128xf32> -> vector<64x128xf32>
    %110 = arith.addf %104, %109 : vector<64x128xf32>
    %111 = vector.extract_strided_slice %1 {offsets = [3, 3, 0], sizes = [8, 8, 64], strides = [1, 1, 1]} : vector<12x12x64xbf16> to vector<8x8x64xbf16>
    %112 = vector.shape_cast %111 : vector<8x8x64xbf16> to vector<64x64xbf16>
    %c18 = arith.constant 18 : index
    %c0_58 = arith.constant 0 : index
    %c0_59 = arith.constant 0 : index
    %113 = vector.load %arg2[%c18, %c0_58, %c0_59] : memref<25x64x128xbf16, #tpu.memory_space<vmem>>, vector<1x64x128xbf16>
    %114 = vector.shape_cast %113 : vector<1x64x128xbf16> to vector<64x128xbf16>
    %cst_60 = arith.constant dense<0.000000e+00> : vector<64x128xf32>
    %115 = tpu.matmul %112, %114, %cst_60 {dimension_numbers = #tpu.dot_dimension_numbers<[1], [0], [0], [1], [0, 0, 1, 1], [], []>} : vector<64x64xbf16>, vector<64x128xbf16>, vector<64x128xf32> -> vector<64x128xf32>
    %116 = arith.addf %110, %115 : vector<64x128xf32>
    %117 = vector.extract_strided_slice %1 {offsets = [3, 4, 0], sizes = [8, 8, 64], strides = [1, 1, 1]} : vector<12x12x64xbf16> to vector<8x8x64xbf16>
    %118 = vector.shape_cast %117 : vector<8x8x64xbf16> to vector<64x64xbf16>
    %c19 = arith.constant 19 : index
    %c0_61 = arith.constant 0 : index
    %c0_62 = arith.constant 0 : index
    %119 = vector.load %arg2[%c19, %c0_61, %c0_62] : memref<25x64x128xbf16, #tpu.memory_space<vmem>>, vector<1x64x128xbf16>
    %120 = vector.shape_cast %119 : vector<1x64x128xbf16> to vector<64x128xbf16>
    %cst_63 = arith.constant dense<0.000000e+00> : vector<64x128xf32>
    %121 = tpu.matmul %118, %120, %cst_63 {dimension_numbers = #tpu.dot_dimension_numbers<[1], [0], [0], [1], [0, 0, 1, 1], [], []>} : vector<64x64xbf16>, vector<64x128xbf16>, vector<64x128xf32> -> vector<64x128xf32>
    %122 = arith.addf %116, %121 : vector<64x128xf32>
    %123 = vector.extract_strided_slice %1 {offsets = [4, 0, 0], sizes = [8, 8, 64], strides = [1, 1, 1]} : vector<12x12x64xbf16> to vector<8x8x64xbf16>
    %124 = vector.shape_cast %123 : vector<8x8x64xbf16> to vector<64x64xbf16>
    %c20 = arith.constant 20 : index
    %c0_64 = arith.constant 0 : index
    %c0_65 = arith.constant 0 : index
    %125 = vector.load %arg2[%c20, %c0_64, %c0_65] : memref<25x64x128xbf16, #tpu.memory_space<vmem>>, vector<1x64x128xbf16>
    %126 = vector.shape_cast %125 : vector<1x64x128xbf16> to vector<64x128xbf16>
    %cst_66 = arith.constant dense<0.000000e+00> : vector<64x128xf32>
    %127 = tpu.matmul %124, %126, %cst_66 {dimension_numbers = #tpu.dot_dimension_numbers<[1], [0], [0], [1], [0, 0, 1, 1], [], []>} : vector<64x64xbf16>, vector<64x128xbf16>, vector<64x128xf32> -> vector<64x128xf32>
    %128 = arith.addf %122, %127 : vector<64x128xf32>
    %129 = vector.extract_strided_slice %1 {offsets = [4, 1, 0], sizes = [8, 8, 64], strides = [1, 1, 1]} : vector<12x12x64xbf16> to vector<8x8x64xbf16>
    %130 = vector.shape_cast %129 : vector<8x8x64xbf16> to vector<64x64xbf16>
    %c21 = arith.constant 21 : index
    %c0_67 = arith.constant 0 : index
    %c0_68 = arith.constant 0 : index
    %131 = vector.load %arg2[%c21, %c0_67, %c0_68] : memref<25x64x128xbf16, #tpu.memory_space<vmem>>, vector<1x64x128xbf16>
    %132 = vector.shape_cast %131 : vector<1x64x128xbf16> to vector<64x128xbf16>
    %cst_69 = arith.constant dense<0.000000e+00> : vector<64x128xf32>
    %133 = tpu.matmul %130, %132, %cst_69 {dimension_numbers = #tpu.dot_dimension_numbers<[1], [0], [0], [1], [0, 0, 1, 1], [], []>} : vector<64x64xbf16>, vector<64x128xbf16>, vector<64x128xf32> -> vector<64x128xf32>
    %134 = arith.addf %128, %133 : vector<64x128xf32>
    %135 = vector.extract_strided_slice %1 {offsets = [4, 2, 0], sizes = [8, 8, 64], strides = [1, 1, 1]} : vector<12x12x64xbf16> to vector<8x8x64xbf16>
    %136 = vector.shape_cast %135 : vector<8x8x64xbf16> to vector<64x64xbf16>
    %c22 = arith.constant 22 : index
    %c0_70 = arith.constant 0 : index
    %c0_71 = arith.constant 0 : index
    %137 = vector.load %arg2[%c22, %c0_70, %c0_71] : memref<25x64x128xbf16, #tpu.memory_space<vmem>>, vector<1x64x128xbf16>
    %138 = vector.shape_cast %137 : vector<1x64x128xbf16> to vector<64x128xbf16>
    %cst_72 = arith.constant dense<0.000000e+00> : vector<64x128xf32>
    %139 = tpu.matmul %136, %138, %cst_72 {dimension_numbers = #tpu.dot_dimension_numbers<[1], [0], [0], [1], [0, 0, 1, 1], [], []>} : vector<64x64xbf16>, vector<64x128xbf16>, vector<64x128xf32> -> vector<64x128xf32>
    %140 = arith.addf %134, %139 : vector<64x128xf32>
    %141 = vector.extract_strided_slice %1 {offsets = [4, 3, 0], sizes = [8, 8, 64], strides = [1, 1, 1]} : vector<12x12x64xbf16> to vector<8x8x64xbf16>
    %142 = vector.shape_cast %141 : vector<8x8x64xbf16> to vector<64x64xbf16>
    %c23 = arith.constant 23 : index
    %c0_73 = arith.constant 0 : index
    %c0_74 = arith.constant 0 : index
    %143 = vector.load %arg2[%c23, %c0_73, %c0_74] : memref<25x64x128xbf16, #tpu.memory_space<vmem>>, vector<1x64x128xbf16>
    %144 = vector.shape_cast %143 : vector<1x64x128xbf16> to vector<64x128xbf16>
    %cst_75 = arith.constant dense<0.000000e+00> : vector<64x128xf32>
    %145 = tpu.matmul %142, %144, %cst_75 {dimension_numbers = #tpu.dot_dimension_numbers<[1], [0], [0], [1], [0, 0, 1, 1], [], []>} : vector<64x64xbf16>, vector<64x128xbf16>, vector<64x128xf32> -> vector<64x128xf32>
    %146 = arith.addf %140, %145 : vector<64x128xf32>
    %147 = vector.extract_strided_slice %1 {offsets = [4, 4, 0], sizes = [8, 8, 64], strides = [1, 1, 1]} : vector<12x12x64xbf16> to vector<8x8x64xbf16>
    %148 = vector.shape_cast %147 : vector<8x8x64xbf16> to vector<64x64xbf16>
    %c24 = arith.constant 24 : index
    %c0_76 = arith.constant 0 : index
    %c0_77 = arith.constant 0 : index
    %149 = vector.load %arg2[%c24, %c0_76, %c0_77] : memref<25x64x128xbf16, #tpu.memory_space<vmem>>, vector<1x64x128xbf16>
    %150 = vector.shape_cast %149 : vector<1x64x128xbf16> to vector<64x128xbf16>
    %cst_78 = arith.constant dense<0.000000e+00> : vector<64x128xf32>
    %151 = tpu.matmul %148, %150, %cst_78 {dimension_numbers = #tpu.dot_dimension_numbers<[1], [0], [0], [1], [0, 0, 1, 1], [], []>} : vector<64x64xbf16>, vector<64x128xbf16>, vector<64x128xf32> -> vector<64x128xf32>
    %152 = arith.addf %146, %151 : vector<64x128xf32>
    %cst_79 = arith.constant 0.000000e+00 : f32
    %153 = vector.broadcast %cst_79 : f32 to vector<64x128xf32>
    %154 = arith.maximumf %152, %153 : vector<64x128xf32>
    %155 = vector.extract_strided_slice %1 {offsets = [2, 2, 0], sizes = [8, 8, 64], strides = [1, 1, 1]} : vector<12x12x64xbf16> to vector<8x8x64xbf16>
    %156 = vector.shape_cast %155 : vector<8x8x64xbf16> to vector<64x64xbf16>
    %157 = arith.extf %156 : vector<64x64xbf16> to vector<64x64xf32>
    %158 = tpu.concatenate %157, %157 in 1 : vector<64x64xf32>, vector<64x64xf32> -> vector<64x128xf32>
    %159 = arith.addf %154, %158 : vector<64x128xf32>
    %c0_80 = arith.constant 0 : index
    %c0_81 = arith.constant 0 : index
    %160 = vector.load %arg3[%c0_80, %c0_81] : memref<16x64xf32, #tpu.memory_space<vmem>>, vector<16x64xf32>
    %cst_82 = arith.constant dense<0.000000e+00> : vector<16x128xf32>
    %161 = tpu.matmul %160, %159, %cst_82 {dimension_numbers = #tpu.dot_dimension_numbers<[1], [0], [0], [1], [0, 0, 1, 1], [], []>} : vector<16x64xf32>, vector<64x128xf32>, vector<16x128xf32> -> vector<16x128xf32>
    %c0_83 = arith.constant 0 : index
    %c0_84 = arith.constant 0 : index
    %162 = vector.load %arg4[%c0_83, %c0_84] : memref<128x64xf32, #tpu.memory_space<vmem>>, vector<128x64xf32>
    %cst_85 = arith.constant dense<0.000000e+00> : vector<16x64xf32>
    %163 = tpu.matmul %161, %162, %cst_85 {dimension_numbers = #tpu.dot_dimension_numbers<[1], [0], [0], [1], [0, 0, 1, 1], [], []>} : vector<16x128xf32>, vector<128x64xf32>, vector<16x64xf32> -> vector<16x64xf32>
    %c0_86 = arith.constant 0 : index
    %c0_87 = arith.constant 0 : index
    %164 = vector.load %arg5[%c0_86, %c0_87] : memref<1x64xf32, #tpu.memory_space<vmem>>, vector<1x64xf32>
    %165 = vector.broadcast %164 : vector<1x64xf32> to vector<16x64xf32>
    %166 = arith.addf %163, %165 : vector<16x64xf32>
    %c0_88 = arith.constant 0 : index
    %c0_89 = arith.constant 0 : index
    %c0_90 = arith.constant 0 : index
    %167 = vector.load %arg6[%c0_88, %c0_89, %c0_90] : memref<1x16x64xf32, #tpu.memory_space<vmem>>, vector<1x16x64xf32>
    %168 = vector.shape_cast %167 : vector<1x16x64xf32> to vector<16x64xf32>
    %169 = vector.shape_cast %166 : vector<16x64xf32> to vector<1x16x64xf32>
    tpu.vector_store %arg6[%c0_88, %c0_89, %c0_90], %169 {strides = array<i32>} : memref<1x16x64xf32, #tpu.memory_space<vmem>>, vector<1x16x64xf32>,
    return
  }
  func.func @transform_0(%arg0: i32) -> (i32, i32, i32, i32) {
    %c0_i32 = arith.constant 0 : i32
    %c0_i32_0 = arith.constant 0 : i32
    %c0_i32_1 = arith.constant 0 : i32
    %c0_i32_2 = arith.constant 0 : i32
    return %arg0, %c0_i32, %c0_i32_0, %c0_i32_1 : i32, i32, i32, i32
  }
  func.func @transform_1(%arg0: i32) -> (i32, i32, i32) {
    %c0_i32 = arith.constant 0 : i32
    %c0_i32_0 = arith.constant 0 : i32
    %c0_i32_1 = arith.constant 0 : i32
    %c0_i32_2 = arith.constant 0 : i32
    return %c0_i32, %c0_i32_0, %c0_i32_1 : i32, i32, i32
  }
  func.func @transform_2(%arg0: i32) -> (i32, i32) {
    %c0_i32 = arith.constant 0 : i32
    %c0_i32_0 = arith.constant 0 : i32
    %c0_i32_1 = arith.constant 0 : i32
    return %c0_i32, %c0_i32_0 : i32, i32
  }
  func.func @transform_3(%arg0: i32) -> (i32, i32) {
    %c0_i32 = arith.constant 0 : i32
    %c0_i32_0 = arith.constant 0 : i32
    %c0_i32_1 = arith.constant 0 : i32
    return %c0_i32, %c0_i32_0 : i32, i32
  }
  func.func @transform_4(%arg0: i32) -> (i32, i32) {
    %c0_i32 = arith.constant 0 : i32
    %c0_i32_0 = arith.constant 0 : i32
    %c0_i32_1 = arith.constant 0 : i32
    return %c0_i32, %c0_i32_0 : i32, i32
  }
  func.func @transform_5(%arg0: i32) -> (i32, i32, i32) {
    %c0_i32 = arith.constant 0 : i32
    %c0_i32_0 = arith.constant 0 : i32
    %c0_i32_1 = arith.constant 0 : i32
    return %arg0, %c0_i32, %c0_i32_0 : i32, i32, i32
  }
}

</mosaic_0001>

<llo_original>
// kernel: convblock_forward.1
$region0: #{convblock_forward.1}
  #allocation0 [shape = 'u32[]', space=smem, size = 0x4, offset = 0x4, fixed_abs, tag = 'smem constant byte address 0x4 - core index']
  #allocation1 [shape = 'u32[144,128]{1,0:T(1,128)}', space=vmem, size = 0x12000, scoped, tag = 'internal scratch']
  %s0 = inlined_call_operand.vmem [shape: bf16[2,12,12,64], index: 0, kind: input, shape index: {}]
  %s1 = inlined_call_operand.vmem [shape: bf16[25,64,128], index: 1, kind: input, shape index: {}]
  %s2 = inlined_call_operand.vmem [shape: f32[16,64], index: 2, kind: input, shape index: {}]
  %s3 = inlined_call_operand.vmem [shape: f32[128,64], index: 3, kind: input, shape index: {}]
  %s4 = inlined_call_operand.vmem [shape: f32[1,64], index: 4, kind: input, shape index: {}]
  %s5 = inlined_call_operand.vmem [shape: f32[2,16,64], index: 5, kind: output, shape index: {}]
  %s6 = sld [smem:[#allocation0]]
  $region53: #{convblock_forward.1} parent=0
    _
  %s8 = ssub.s32 1, %s6
  %s9 = scalar_select 0, %s8, %s6
  loop: start=0, step=1, limit=4
  $region2: #{convblock_forward.1} parent=0 // loop_pre_header
    _
  $region3: #{convblock_forward.1} parent=0 // loop_header
    %s11 = sphi 0, %s15
    %p12 = scmp.ge.s32.totalorder %s11, 4
    %s21 = sphi 0, %s23
    %s24 = sphi 0, %s21
    %s25 = sphi 0, %s24
    %s41 = sphi 0, %s25
    %s45 = sphi 0, %s45
    %s47 = sphi 0, %s45
    %s48 = sphi 0, %s47
    %s62 = sphi 0, %s48
    %s66 = sphi 0, %s66
    %s68 = sphi 0, %s66
    %s69 = sphi 0, %s68
    %s83 = sphi 0, %s69
    %s87 = sphi 0, %s87
    %s89 = sphi 0, %s87
    %s90 = sphi 0, %s89
    %s104 = sphi 0, %s90
    %s108 = sphi 0, %s108
    %s110 = sphi 0, %s108
    %s111 = sphi 0, %s110
    %s125 = sphi 0, %s111
    %s131 = sphi 0, %s133
    %s134 = sphi 0, %s131
    %s135 = sphi 0, %s134
    %s151 = sphi 0, %s135
  $region4: #{convblock_forward.1} parent=0 // loop_header_branch
    %14 = sbr.rel (%p12) target = $region8
  $region5: #{convblock_forward.1} parent=0 // loop_body
    %s16 = ssub.s32 %s11, 1
    %s17 = ssub.s32 %s11, 2
    %s18 = sadd.s32 %s11, 1
    %s19 = ssub.s32 %s11, %s18
    %p20 = scmp.eq.s32.totalorder %s19, 0
    %s22 = sadd.s32 %s21, 1
    %s23 = scalar_select %p20, %s21, %s22
    %p26 = pneg %p20
    %p27 = scmp.eq.s32.totalorder %s11, 1
    %p28 = por %p26, %p27
    %p29 = scmp.ne.s32.totalorder %s21, %s24
    %p30 = scmp.eq.s32.totalorder %s11, 0
    %p31 = por %p29, %p30
    %p32 = scmp.ne.s32.totalorder %s21, %s24
    %p33 = scmp.eq.s32.totalorder %s16, 1
    %p34 = por %p32, %p33
    %p35 = scmp.ne.s32.totalorder %s24, %s25
    %p36 = scmp.eq.s32.totalorder %s16, 0
    %p37 = por %p35, %p36
    %p38 = scmp.ne.s32.totalorder %s24, %s25
    %p39 = scmp.eq.s32.totalorder %s17, 1
    %p40 = por %p38, %p39
    %p42 = scmp.ne.s32.totalorder %s25, %s41
    %p43 = scmp.eq.s32.totalorder %s17, 0
    %p44 = por %p42, %p43
    %s46 = sadd.s32 %s45, 1
    %p49 = scmp.eq.s32.totalorder %s11, 1
    %p50 = scmp.ne.s32.totalorder %s45, %s47
    %p51 = scmp.eq.s32.totalorder %s11, 0
    %p52 = por %p50, %p51
    %p53 = scmp.ne.s32.totalorder %s45, %s47
    %p54 = scmp.eq.s32.totalorder %s16, 1
    %p55 = por %p53, %p54
    %p56 = scmp.ne.s32.totalorder %s47, %s48
    %p57 = scmp.eq.s32.totalorder %s16, 0
    %p58 = por %p56, %p57
    %p59 = scmp.ne.s32.totalorder %s47, %s48
    %p60 = scmp.eq.s32.totalorder %s17, 1
    %p61 = por %p59, %p60
    %p63 = scmp.ne.s32.totalorder %s48, %s62
    %p64 = scmp.eq.s32.totalorder %s17, 0
    %p65 = por %p63, %p64
    %s67 = sadd.s32 %s66, 1
    %p70 = scmp.eq.s32.totalorder %s11, 1
    %p71 = scmp.ne.s32.totalorder %s66, %s68
    %p72 = scmp.eq.s32.totalorder %s11, 0
    %p73 = por %p71, %p72
    %p74 = scmp.ne.s32.totalorder %s66, %s68
    %p75 = scmp.eq.s32.totalorder %s16, 1
    %p76 = por %p74, %p75
    %p77 = scmp.ne.s32.totalorder %s68, %s69
    %p78 = scmp.eq.s32.totalorder %s16, 0
    %p79 = por %p77, %p78
    %p80 = scmp.ne.s32.totalorder %s68, %s69
    %p81 = scmp.eq.s32.totalorder %s17, 1
    %p82 = por %p80, %p81
    %p84 = scmp.ne.s32.totalorder %s69, %s83
    %p85 = scmp.eq.s32.totalorder %s17, 0
    %p86 = por %p84, %p85
    %s88 = sadd.s32 %s87, 1
    %p91 = scmp.eq.s32.totalorder %s11, 1
    %p92 = scmp.ne.s32.totalorder %s87, %s89
    %p93 = scmp.eq.s32.totalorder %s11, 0
    %p94 = por %p92, %p93
    %p95 = scmp.ne.s32.totalorder %s87, %s89
    %p96 = scmp.eq.s32.totalorder %s16, 1
    %p97 = por %p95, %p96
    %p98 = scmp.ne.s32.totalorder %s89, %s90
    %p99 = scmp.eq.s32.totalorder %s16, 0
    %p100 = por %p98, %p99
    %p101 = scmp.ne.s32.totalorder %s89, %s90
    %p102 = scmp.eq.s32.totalorder %s17, 1
    %p103 = por %p101, %p102
    %p105 = scmp.ne.s32.totalorder %s90, %s104
    %p106 = scmp.eq.s32.totalorder %s17, 0
    %p107 = por %p105, %p106
    %s109 = sadd.s32 %s108, 1
    %p112 = scmp.eq.s32.totalorder %s11, 1
    %p113 = scmp.ne.s32.totalorder %s108, %s110
    %p114 = scmp.eq.s32.totalorder %s11, 0
    %p115 = por %p113, %p114
    %p116 = scmp.ne.s32.totalorder %s108, %s110
    %p117 = scmp.eq.s32.totalorder %s16, 1
    %p118 = por %p116, %p117
    %p119 = scmp.ne.s32.totalorder %s110, %s111
    %p120 = scmp.eq.s32.totalorder %s16, 0
    %p121 = por %p119, %p120
    %p122 = scmp.ne.s32.totalorder %s110, %s111
    %p123 = scmp.eq.s32.totalorder %s17, 1
    %p124 = por %p122, %p123
    %p126 = scmp.ne.s32.totalorder %s111, %s125
    %p127 = scmp.eq.s32.totalorder %s17, 0
    %p128 = por %p126, %p127
    %s129 = ssub.s32 %s11, %s18
    %p130 = scmp.eq.s32.totalorder %s129, 0
    %s132 = sadd.s32 %s131, 1
    %s133 = scalar_select %p130, %s131, %s132
    %p136 = pneg %p130
    %p137 = scmp.eq.s32.totalorder %s11, 1
    %p138 = por %p136, %p137
    %p139 = scmp.ne.s32.totalorder %s131, %s134
    %p140 = scmp.eq.s32.totalorder %s11, 0
    %p141 = por %p139, %p140
    %p142 = scmp.ne.s32.totalorder %s131, %s134
    %p143 = scmp.eq.s32.totalorder %s16, 1
    %p144 = por %p142, %p143
    %p145 = scmp.ne.s32.totalorder %s134, %s135
    %p146 = scmp.eq.s32.totalorder %s16, 0
    %p147 = por %p145, %p146
    %p148 = scmp.ne.s32.totalorder %s134, %s135
    %p149 = scmp.eq.s32.totalorder %s17, 1
    %p150 = por %p148, %p149
    %p152 = scmp.ne.s32.totalorder %s135, %s151
    %p153 = scmp.eq.s32.totalorder %s17, 0
    %p154 = por %p152, %p153
    %p155 = scmp.le.s32.totalorder 1, %s11
    %p156 = scmp.lt.s32.totalorder %s11, 3
    %p157 = pnand %p155, %p156
    %p158 = pneg %p157
    // Predicated region
    $region9: #{convblock_forward.1} parent=5 // pred_check
      _
    $region10: #{convblock_forward.1} parent=5 // pred_check_branch
      %160 = sbr.rel (%p157) target = $region12
    $region11: #{convblock_forward.1} parent=5 // pred_region
      %s161 = ssub.s32 %s11, 1
      // Predicated region
      $region13: #{convblock_forward.1} parent=11 // pred_check
        %p162 = pneg %p58
      $region14: #{convblock_forward.1} parent=11 // pred_check_branch
        %164 = sbr.rel (%p162) target = $region16
      $region15: #{convblock_forward.1} parent=11 // pred_region
        _
      $region16: #{convblock_forward.1} parent=11 // pred_fallthru
        _
      // Predicated region
      $region17: #{convblock_forward.1} parent=11 // pred_check
        %p165 = pneg %p79
      $region18: #{convblock_forward.1} parent=11 // pred_check_branch
        %167 = sbr.rel (%p165) target = $region20
      $region19: #{convblock_forward.1} parent=11 // pred_region
        _
      $region20: #{convblock_forward.1} parent=11 // pred_fallthru
        _
      // Predicated region
      $region21: #{convblock_forward.1} parent=11 // pred_check
        %p168 = pneg %p100
      $region22: #{convblock_forward.1} parent=11 // pred_check_branch
        %170 = sbr.rel (%p168) target = $region24
      $region23: #{convblock_forward.1} parent=11 // pred_region
        _
      $region24: #{convblock_forward.1} parent=11 // pred_fallthru
        _
      // Predicated region
      $region25: #{convblock_forward.1} parent=11 // pred_check
        %p171 = pneg %p121
      $region26: #{convblock_forward.1} parent=11 // pred_check_branch
        %173 = sbr.rel (%p171) target = $region28
      $region27: #{convblock_forward.1} parent=11 // pred_region
        _
      $region28: #{convblock_forward.1} parent=11 // pred_fallthru
        _
    $region12: #{convblock_forward.1} parent=5 // pred_fallthru
      _
    %p174 = scmp.lt.s32.totalorder %s11, 2
    // Predicated region
    $region29: #{convblock_forward.1} parent=5 // pred_check
      %p175 = pneg %p174
    $region30: #{convblock_forward.1} parent=5 // pred_check_branch
      %177 = sbr.rel (%p175) target = $region32
    $region31: #{convblock_forward.1} parent=5 // pred_region
      // Predicated region
      $region33: #{convblock_forward.1} parent=31 // pred_check
        %p178 = pneg %p31
      $region34: #{convblock_forward.1} parent=31 // pred_check_branch
        %180 = sbr.rel (%p178) target = $region36
      $region35: #{convblock_forward.1} parent=31 // pred_region
        %p181 = scmp.lt.s32.totalorder %s11, 1
        %s182 = scalar_select %p181, %s11, 1
        %s183 = smul.addr %s182, 24
        %s184 = smul.addr %s183, 4
        %s185 = scalar_lea.vmem %s0, %s184
      $region36: #{convblock_forward.1} parent=31 // pred_fallthru
        _
    $region32: #{convblock_forward.1} parent=5 // pred_fallthru
      _
    %p186 = scmp.le.s32.totalorder 1, %s11
    %p187 = scmp.lt.s32.totalorder %s11, 3
    %p188 = pnand %p186, %p187
    %p189 = pneg %p188
    // Predicated region
    $region37: #{convblock_forward.1} parent=5 // pred_check
      _
    $region38: #{convblock_forward.1} parent=5 // pred_check_branch
      %191 = sbr.rel (%p188) target = $region40
    $region39: #{convblock_forward.1} parent=5 // pred_region
      %s192 = ssub.s32 %s11, 1
      %p193 = scmp.lt.s32.totalorder %s16, 1
      %s194 = scalar_select %p193, %s16, 1
      %s195 = smul.addr %s194, 24
      %s196 = smul.addr %s195, 4
      %s197 = scalar_lea.vmem %s0, %s196
      %p198 = pneg %p37
      %p199 = pneg %p34
      %p200 = pneg %p58
      %p201 = pneg %p55
      %p202 = pneg %p79
      %p203 = pneg %p76
      %p204 = pneg %p100
      %p205 = pneg %p97
      %p206 = pneg %p121
      %p207 = pneg %p118
      %p208 = pneg %p147
      %p209 = pneg %p144
      %p210 = scmp.lt.s32.totalorder %s16, 1
      %s211 = scalar_select %p210, %s16, 1
      %s212 = smul.addr %s211, 2
      %s213 = smul.addr %s212, 8
      %s214 = scalar_lea.vmem %s5, %s213
      %p215 = scmp.lt.s32.totalorder %s16, 1
      %s216 = scalar_select %p215, %s16, 1
      %s217 = smul.addr %s216, 24
      %s218 = smul.addr %s217, 4
      %s219 = scalar_lea.vmem %s0, %s218
      %p220 = scmp.lt.s32.totalorder %s16, 1
      %s221 = scalar_select %p220, %s16, 1
      %s222 = smul.addr %s221, 2
      %s223 = smul.addr %s222, 8
      %s224 = scalar_lea.vmem %s5, %s223
      %v226 = vld [vmem:[%s219] sm:$0xf]
      %v227 = vld [vmem:[%s219 + $0x4] sm:$0x3]
      %v228 = vld [vmem:[%s219 + $0x8] sm:$0xf]
      %v229 = vld [vmem:[%s219 + $0xc] sm:$0x3]
      %v230 = vld [vmem:[%s219 + $0x10] sm:$0xf]
      %v231 = vld [vmem:[%s219 + $0x14] sm:$0x3]
      %v232 = vld [vmem:[%s219 + $0x18] sm:$0xf]
      %v233 = vld [vmem:[%s219 + $0x1c] sm:$0x3]
      %v234 = vld [vmem:[%s219 + $0x20] sm:$0xf]
      %v235 = vld [vmem:[%s219 + $0x24] sm:$0x3]
      %v236 = vld [vmem:[%s219 + $0x28] sm:$0xf]
      %v237 = vld [vmem:[%s219 + $0x2c] sm:$0x3]
      %v238 = vld [vmem:[%s219 + $0x30] sm:$0xf]
      %v239 = vld [vmem:[%s219 + $0x34] sm:$0x3]
      %v240 = vld [vmem:[%s219 + $0x38] sm:$0xf]
      %v241 = vld [vmem:[%s219 + $0x3c] sm:$0x3]
      %v242 = vld [vmem:[%s219 + $0x40] sm:$0xf]
      %v243 = vld [vmem:[%s219 + $0x44] sm:$0x3]
      %v244 = vld [vmem:[%s219 + $0x48] sm:$0xf]
      %v245 = vld [vmem:[%s219 + $0x4c] sm:$0x3]
      %v246 = vld [vmem:[%s219 + $0x50] sm:$0xf]
      %v247 = vld [vmem:[%s219 + $0x54] sm:$0x3]
      %v248 = vld [vmem:[%s219 + $0x58] sm:$0xf]
      %v249 = vld [vmem:[%s219 + $0x5c] sm:$0x3]
      %v250 = vld [vmem:[%s1] sm:$0xf]
      %v251 = vld [vmem:[%s1 + $0x4] sm:$0xf]
      %v252 = vld [vmem:[%s1 + $0x8] sm:$0xf]
      %v253 = vld [vmem:[%s1 + $0xc] sm:$0xf]
      %v254 = vld [vmem:[%s1 + $0x10] sm:$0xf]
      %v255 = vld [vmem:[%s1 + $0x14] sm:$0xf]
      %v256 = vld [vmem:[%s1 + $0x18] sm:$0xf]
      %v257 = vld [vmem:[%s1 + $0x1c] sm:$0xf]
      %vm258 = vsmask.f32 3328
      %vm259 = vsmask.f32 7440
      %vm260 = vmor %vm258, %vm259
      %v262 = vshrl.u32 %v226, 16
      %v264 = vrot.slane %v262, 4
      %v265 = vshll.u32 %v226, 16
      %v267 = vrot.slane %v265, 5
      %v268 = vor.u32 %v264, %v267
      %v269 = vrot.slane %v268, 4
      %v271 = vshll.u32 %v227, 16
      %v273 = vrot.slane %v271, 5
      %v274 = vsel %vm260, %v269, %v273
      %v276 = vshrl.u32 %v228, 16
      %v278 = vrot.slane %v276, 4
      %v279 = vshll.u32 %v228, 16
      %v281 = vrot.slane %v279, 5
      %v282 = vor.u32 %v278, %v281
      %v283 = vrot.slane %v282, 4
      %v285 = vshll.u32 %v229, 16
      %v287 = vrot.slane %v285, 5
      %v288 = vsel %vm260, %v283, %v287
      %v290 = vshrl.u32 %v230, 16
      %v292 = vrot.slane %v290, 4
      %v293 = vshll.u32 %v230, 16
      %v295 = vrot.slane %v293, 5
      %v296 = vor.u32 %v292, %v295
      %v297 = vrot.slane %v296, 4
      %v299 = vshll.u32 %v231, 16
      %v301 = vrot.slane %v299, 5
      %v302 = vsel %vm260, %v297, %v301
      %v304 = vshrl.u32 %v232, 16
      %v306 = vrot.slane %v304, 4
      %v307 = vshll.u32 %v232, 16
      %v309 = vrot.slane %v307, 5
      %v310 = vor.u32 %v306, %v309
      %v311 = vrot.slane %v310, 4
      %v313 = vshll.u32 %v233, 16
      %v315 = vrot.slane %v313, 5
      %v316 = vsel %vm260, %v311, %v315
      %v318 = vshrl.u32 %v234, 16
      %v320 = vrot.slane %v318, 4
      %v321 = vshll.u32 %v234, 16
      %v323 = vrot.slane %v321, 5
      %v324 = vor.u32 %v320, %v323
      %v325 = vrot.slane %v324, 4
      %v327 = vshll.u32 %v235, 16
      %v329 = vrot.slane %v327, 5
      %v330 = vsel %vm260, %v325, %v329
      %v332 = vshrl.u32 %v236, 16
      %v334 = vrot.slane %v332, 4
      %v335 = vshll.u32 %v236, 16
      %v337 = vrot.slane %v335, 5
      %v338 = vor.u32 %v334, %v337
      %v339 = vrot.slane %v338, 4
      %v341 = vshll.u32 %v237, 16
      %v343 = vrot.slane %v341, 5
      %v344 = vsel %vm260, %v339, %v343
      %v346 = vshrl.u32 %v238, 16
      %v348 = vrot.slane %v346, 4
      %v349 = vshll.u32 %v238, 16
      %v351 = vrot.slane %v349, 5
      %v352 = vor.u32 %v348, %v351
      %v353 = vrot.slane %v352, 4
      %v355 = vshll.u32 %v239, 16
      %v357 = vrot.slane %v355, 5
      %v358 = vsel %vm260, %v353, %v357
      %v360 = vshrl.u32 %v240, 16
      %v362 = vrot.slane %v360, 4
      %v363 = vshll.u32 %v240, 16
      %v365 = vrot.slane %v363, 5
      %v366 = vor.u32 %v362, %v365
      %v367 = vrot.slane %v366, 4
      %v369 = vshll.u32 %v241, 16
      %v371 = vrot.slane %v369, 5
      %v372 = vsel %vm260, %v367, %v371
      %s373 = scalar_lea.vmem %s1, 32
      %v374 = vld [vmem:[%s373] sm:$0xf]
      %v375 = vld [vmem:[%s373 + $0x4] sm:$0xf]
      %v376 = vld [vmem:[%s373 + $0x8] sm:$0xf]
      %v377 = vld [vmem:[%s373 + $0xc] sm:$0xf]
      %v378 = vld [vmem:[%s373 + $0x10] sm:$0xf]
      %v379 = vld [vmem:[%s373 + $0x14] sm:$0xf]
      %v380 = vld [vmem:[%s373 + $0x18] sm:$0xf]
      %v381 = vld [vmem:[%s373 + $0x1c] sm:$0xf]
      %v382 = vunpack.c.l.b16 %v274
      %v383 = vunpack.c.l.b16 %v288
      %v384 = vunpack.c.l.b16 %v302
      %v385 = vunpack.c.l.b16 %v316
      %v386 = vunpack.c.l.b16 %v330
      %v387 = vunpack.c.l.b16 %v344
      %v388 = vunpack.c.l.b16 %v358
      %v389 = vunpack.c.l.b16 %v372
      %v390 = vpack.c.b16 %v383, %v382
      %v391 = vpack.c.b16 %v385, %v384
      %v392 = vpack.c.b16 %v387, %v386
      %v393 = vpack.c.b16 %v389, %v388
      %v402 = vunpack.c.l.b16 %v374
      %v403 = vunpack.c.l.b16 %v375
      %v404 = vunpack.c.l.b16 %v376
      %v405 = vunpack.c.l.b16 %v377
      %v406 = vunpack.c.l.b16 %v378
      %v407 = vunpack.c.l.b16 %v379
      %v408 = vunpack.c.l.b16 %v380
      %v409 = vunpack.c.l.b16 %v381
      %v410 = vpack.c.b16 %v403, %v402
      %v411 = vpack.c.b16 %v405, %v404
      %v412 = vpack.c.b16 %v407, %v406
      %v413 = vpack.c.b16 %v409, %v408
      %vm418 = vcmask 523264
      %v420 = vsel %vm418, %v390, 0
      %v423 = vsel %vm418, %v391, 0
      %v426 = vsel %vm418, %v392, 0
      %v429 = vsel %vm418, %v393, 0
      %431 = vmatprep.subr.bf16.mxu0 0
      %432 = vmatpush1.bf16.msra.mxu0 0
      %433 = vmatprep.subr.bf16.mxu0 0
      %434 = vmatpush1.bf16.msra.mxu0 0
      %435 = vmatprep.subr.bf16.mxu0 0
      %436 = vmatpush1.bf16.msra.mxu0 0
      %437 = vmatprep.subr.bf16.mxu0 0
      %438 = vmatpush1.bf16.msra.mxu0 0
      %439 = vmatprep.subr.bf16.mxu0 0
      %440 = vmatpush1.bf16.msra.mxu0 %v413
      %441 = vmatprep.subr.bf16.mxu0 0
      %442 = vmatpush1.bf16.msra.mxu0 %v412
      %443 = vmatprep.subr.bf16.mxu0 0
      %444 = vmatpush1.bf16.msra.mxu0 %v411
      %445 = vmatprep.subr.bf16.mxu0 0
      %446 = vmatpush1.bf16.msra.mxu0 %v410
      %447 = vmatprep.subr.bf16.mxu0 0
      %448 = vmatpush2.bf16.msra.mxu0 0
      %449 = vmatprep.subr.bf16.mxu0 0
      %450 = vmatpush2.bf16.msra.mxu0 0
      %451 = vmatprep.subr.bf16.mxu0 0
      %452 = vmatpush2.bf16.msra.mxu0 0
      %453 = vmatprep.subr.bf16.mxu0 0
      %454 = vmatpush2.bf16.msra.mxu0 0
      %455 = vmatprep.subr.bf16.mxu0 0
      %456 = vmatpush2.bf16.msra.mxu0 0
      %457 = vmatprep.subr.bf16.mxu0 0
      %458 = vmatpush2.bf16.msra.mxu0 0
      %459 = vmatprep.subr.bf16.mxu0 0
      %460 = vmatpush2.bf16.msra.mxu0 0
      %461 = vmatprep.subr.bf16.mxu0 0
      %462 = vmatpush2.bf16.msra.mxu0 0
      %463 = vmatprep.mubr.bf16.mxu0 0
      %464 = vmatmul.mubr.bf16.gmra.mxu0 %v420
      %v465 = vpop.f32.mrf.mxu0
      %v466 = vadd.f32 0.0, %v465
      %v467 = vpop.f32.mrf.mxu0
      %v468 = vpop.f32.mrf.mxu0
      %v469 = vadd.f32 0.0, %v468
      %v470 = vpop.f32.mrf.mxu0
      %471 = vmatprep.mubr.bf16.mxu0 0
      %472 = vmatmul.mubr.bf16.gmra.mxu0 %v423
      %v473 = vpop.f32.mrf.mxu0
      %v474 = vadd.f32 0.0, %v473
      %v475 = vpop.f32.mrf.mxu0
      %v476 = vpop.f32.mrf.mxu0
      %v477 = vadd.f32 0.0, %v476
      %v478 = vpop.f32.mrf.mxu0
      %479 = vmatprep.mubr.bf16.mxu0 0
      %480 = vmatmul.mubr.bf16.gmra.mxu0 %v426
      %v481 = vpop.f32.mrf.mxu0
      %v482 = vadd.f32 0.0, %v481
      %v483 = vpop.f32.mrf.mxu0
      %v484 = vpop.f32.mrf.mxu0
      %v485 = vadd.f32 0.0, %v484
      %v486 = vpop.f32.mrf.mxu0
      %487 = vmatprep.mubr.bf16.mxu0 0
      %488 = vmatmul.mubr.bf16.gmra.mxu0 %v429
      %v489 = vpop.f32.mrf.mxu0
      %v490 = vadd.f32 0.0, %v489
      %v491 = vpop.f32.mrf.mxu0
      %v492 = vpop.f32.mrf.mxu0
      %v493 = vadd.f32 0.0, %v492
      %v494 = vpop.f32.mrf.mxu0
      %495 = vdwg.mxu0
      %v504 = vunpack.c.l.b16 %v226
      %v505 = vunpack.c.l.b16 %v228
      %v506 = vunpack.c.l.b16 %v230
      %v507 = vunpack.c.l.b16 %v232
      %v508 = vunpack.c.l.b16 %v234
      %v509 = vunpack.c.l.b16 %v236
      %v510 = vunpack.c.l.b16 %v238
      %v511 = vunpack.c.l.b16 %v240
      %v512 = vpack.c.b16 %v505, %v504
      %v513 = vpack.c.b16 %v507, %v506
      %v514 = vpack.c.b16 %v509, %v508
      %v515 = vpack.c.b16 %v511, %v510
      %v524 = vunpack.c.l.b16 %v250
      %v525 = vunpack.c.l.b16 %v251
      %v526 = vunpack.c.l.b16 %v252
      %v527 = vunpack.c.l.b16 %v253
      %v528 = vunpack.c.l.b16 %v254
      %v529 = vunpack.c.l.b16 %v255
      %v530 = vunpack.c.l.b16 %v256
      %v531 = vunpack.c.l.b16 %v257
      %v532 = vpack.c.b16 %v525, %v524
      %v533 = vpack.c.b16 %v527, %v526
      %v534 = vpack.c.b16 %v529, %v528
      %v535 = vpack.c.b16 %v531, %v530
      %v541 = vsel %vm418, %v512, 0
      %v544 = vsel %vm418, %v513, 0
      %v547 = vsel %vm418, %v514, 0
      %v550 = vsel %vm418, %v515, 0
      %552 = vmatprep.subr.bf16.mxu0 0
      %553 = vmatpush1.bf16.msra.mxu0 0
      %554 = vmatprep.subr.bf16.mxu0 0
      %555 = vmatpush1.bf16.msra.mxu0 0
      %556 = vmatprep.subr.bf16.mxu0 0
      %557 = vmatpush1.bf16.msra.mxu0 0
      %558 = vmatprep.subr.bf16.mxu0 0
      %559 = vmatpush1.bf16.msra.mxu0 0
      %560 = vmatprep.subr.bf16.mxu0 0
      %561 = vmatpush1.bf16.msra.mxu0 %v535
      %562 = vmatprep.subr.bf16.mxu0 0
      %563 = vmatpush1.bf16.msra.mxu0 %v534
      %564 = vmatprep.subr.bf16.mxu0 0
      %565 = vmatpush1.bf16.msra.mxu0 %v533
      %566 = vmatprep.subr.bf16.mxu0 0
      %567 = vmatpush1.bf16.msra.mxu0 %v532
      %568 = vmatprep.subr.bf16.mxu0 0
      %569 = vmatpush2.bf16.msra.mxu0 0
      %570 = vmatprep.subr.bf16.mxu0 0
      %571 = vmatpush2.bf16.msra.mxu0 0
      %572 = vmatprep.subr.bf16.mxu0 0
      %573 = vmatpush2.bf16.msra.mxu0 0
      %574 = vmatprep.subr.bf16.mxu0 0
      %575 = vmatpush2.bf16.msra.mxu0 0
      %576 = vmatprep.subr.bf16.mxu0 0
      %577 = vmatpush2.bf16.msra.mxu0 0
      %578 = vmatprep.subr.bf16.mxu0 0
      %579 = vmatpush2.bf16.msra.mxu0 0
      %580 = vmatprep.subr.bf16.mxu0 0
      %581 = vmatpush2.bf16.msra.mxu0 0
      %582 = vmatprep.subr.bf16.mxu0 0
      %583 = vmatpush2.bf16.msra.mxu0 0
      %584 = vmatprep.mubr.bf16.mxu0 0
      %585 = vmatmul.mubr.bf16.gmra.mxu0 %v541
      %v586 = vpop.f32.mrf.mxu0
      %v587 = vadd.f32 %v466, %v586
      %v588 = vpop.f32.mrf.mxu0
      %v589 = vpop.f32.mrf.mxu0
      %v590 = vadd.f32 %v469, %v589
      %v591 = vpop.f32.mrf.mxu0
      %592 = vmatprep.mubr.bf16.mxu0 0
      %593 = vmatmul.mubr.bf16.gmra.mxu0 %v544
      %v594 = vpop.f32.mrf.mxu0
      %v595 = vadd.f32 %v474, %v594
      %v596 = vpop.f32.mrf.mxu0
      %v597 = vpop.f32.mrf.mxu0
      %v598 = vadd.f32 %v477, %v597
      %v599 = vpop.f32.mrf.mxu0
      %600 = vmatprep.mubr.bf16.mxu0 0
      %601 = vmatmul.mubr.bf16.gmra.mxu0 %v547
      %v602 = vpop.f32.mrf.mxu0
      %v603 = vadd.f32 %v482, %v602
      %v604 = vpop.f32.mrf.mxu0
      %v605 = vpop.f32.mrf.mxu0
      %v606 = vadd.f32 %v485, %v605
      %v607 = vpop.f32.mrf.mxu0
      %608 = vmatprep.mubr.bf16.mxu0 0
      %609 = vmatmul.mubr.bf16.gmra.mxu0 %v550
      %v610 = vpop.f32.mrf.mxu0
      %v611 = vadd.f32 %v490, %v610
      %v612 = vpop.f32.mrf.mxu0
      %v613 = vpop.f32.mrf.mxu0
      %v614 = vadd.f32 %v493, %v613
      %v615 = vpop.f32.mrf.mxu0
      %616 = vdwg.mxu0
      %vm625 = vcmask 1042432
      %vm626 = vcmask 1046532
      %vm627 = vmor %vm625, %vm626
      %v628 = vrot.slane %v226, 5
      %v629 = vrot.slane %v628, 4
      %v630 = vrot.slane %v227, 5
      %v631 = vsel %vm627, %v629, %v630
      %v632 = vrot.slane %v228, 5
      %v633 = vrot.slane %v632, 4
      %v634 = vrot.slane %v229, 5
      %v635 = vsel %vm627, %v633, %v634
      %v636 = vrot.slane %v230, 5
      %v637 = vrot.slane %v636, 4
      %v638 = vrot.slane %v231, 5
      %v639 = vsel %vm627, %v637, %v638
      %v640 = vrot.slane %v232, 5
      %v641 = vrot.slane %v640, 4
      %v642 = vrot.slane %v233, 5
      %v643 = vsel %vm627, %v641, %v642
      %v644 = vrot.slane %v234, 5
      %v645 = vrot.slane %v644, 4
      %v646 = vrot.slane %v235, 5
      %v647 = vsel %vm627, %v645, %v646
      %v648 = vrot.slane %v236, 5
      %v649 = vrot.slane %v648, 4
      %v650 = vrot.slane %v237, 5
      %v651 = vsel %vm627, %v649, %v650
      %v652 = vrot.slane %v238, 5
      %v653 = vrot.slane %v652, 4
      %v654 = vrot.slane %v239, 5
      %v655 = vsel %vm627, %v653, %v654
      %v656 = vrot.slane %v240, 5
      %v657 = vrot.slane %v656, 4
      %v658 = vrot.slane %v241, 5
      %v659 = vsel %vm627, %v657, %v658
      %s660 = scalar_lea.vmem %s1, 64
      %v661 = vld [vmem:[%s660] sm:$0xf]
      %v662 = vld [vmem:[%s660 + $0x4] sm:$0xf]
      %v663 = vld [vmem:[%s660 + $0x8] sm:$0xf]
      %v664 = vld [vmem:[%s660 + $0xc] sm:$0xf]
      %v665 = vld [vmem:[%s660 + $0x10] sm:$0xf]
      %v666 = vld [vmem:[%s660 + $0x14] sm:$0xf]
      %v667 = vld [vmem:[%s660 + $0x18] sm:$0xf]
      %v668 = vld [vmem:[%s660 + $0x1c] sm:$0xf]
      %v669 = vunpack.c.l.b16 %v631
      %v670 = vunpack.c.l.b16 %v635
      %v671 = vunpack.c.l.b16 %v639
      %v672 = vunpack.c.l.b16 %v643
      %v673 = vunpack.c.l.b16 %v647
      %v674 = vunpack.c.l.b16 %v651
      %v675 = vunpack.c.l.b16 %v655
      %v676 = vunpack.c.l.b16 %v659
      %v677 = vpack.c.b16 %v670, %v669
      %v678 = vpack.c.b16 %v672, %v671
      %v679 = vpack.c.b16 %v674, %v673
      %v680 = vpack.c.b16 %v676, %v675
      %v689 = vunpack.c.l.b16 %v661
      %v690 = vunpack.c.l.b16 %v662
      %v691 = vunpack.c.l.b16 %v663
      %v692 = vunpack.c.l.b16 %v664
      %v693 = vunpack.c.l.b16 %v665
      %v694 = vunpack.c.l.b16 %v666
      %v695 = vunpack.c.l.b16 %v667
      %v696 = vunpack.c.l.b16 %v668
      %v697 = vpack.c.b16 %v690, %v689
      %v698 = vpack.c.b16 %v692, %v691
      %v699 = vpack.c.b16 %v694, %v693
      %v700 = vpack.c.b16 %v696, %v695
      %v706 = vsel %vm418, %v677, 0
      %v709 = vsel %vm418, %v678, 0
      %v712 = vsel %vm418, %v679, 0
      %v715 = vsel %vm418, %v680, 0
      %717 = vmatprep.subr.bf16.mxu0 0
      %718 = vmatpush1.bf16.msra.mxu0 0
      %719 = vmatprep.subr.bf16.mxu0 0
      %720 = vmatpush1.bf16.msra.mxu0 0
      %721 = vmatprep.subr.bf16.mxu0 0
      %722 = vmatpush1.bf16.msra.mxu0 0
      %723 = vmatprep.subr.bf16.mxu0 0
      %724 = vmatpush1.bf16.msra.mxu0 0
      %725 = vmatprep.subr.bf16.mxu0 0
      %726 = vmatpush1.bf16.msra.mxu0 %v700
      %727 = vmatprep.subr.bf16.mxu0 0
      %728 = vmatpush1.bf16.msra.mxu0 %v699
      %729 = vmatprep.subr.bf16.mxu0 0
      %730 = vmatpush1.bf16.msra.mxu0 %v698
      %731 = vmatprep.subr.bf16.mxu0 0
      %732 = vmatpush1.bf16.msra.mxu0 %v697
      %733 = vmatprep.subr.bf16.mxu0 0
      %734 = vmatpush2.bf16.msra.mxu0 0
      %735 = vmatprep.subr.bf16.mxu0 0
      %736 = vmatpush2.bf16.msra.mxu0 0
      %737 = vmatprep.subr.bf16.mxu0 0
      %738 = vmatpush2.bf16.msra.mxu0 0
      %739 = vmatprep.subr.bf16.mxu0 0
      %740 = vmatpush2.bf16.msra.mxu0 0
      %741 = vmatprep.subr.bf16.mxu0 0
      %742 = vmatpush2.bf16.msra.mxu0 0
      %743 = vmatprep.subr.bf16.mxu0 0
      %744 = vmatpush2.bf16.msra.mxu0 0
      %745 = vmatprep.subr.bf16.mxu0 0
      %746 = vmatpush2.bf16.msra.mxu0 0
      %747 = vmatprep.subr.bf16.mxu0 0
      %748 = vmatpush2.bf16.msra.mxu0 0
      %749 = vmatprep.mubr.bf16.mxu0 0
      %750 = vmatmul.mubr.bf16.gmra.mxu0 %v706
      %v751 = vpop.f32.mrf.mxu0
      %v752 = vadd.f32 0.0, %v751
      %v753 = vpop.f32.mrf.mxu0
      %v754 = vpop.f32.mrf.mxu0
      %v755 = vadd.f32 0.0, %v754
      %v756 = vpop.f32.mrf.mxu0
      %757 = vmatprep.mubr.bf16.mxu0 0
      %758 = vmatmul.mubr.bf16.gmra.mxu0 %v709
      %v759 = vpop.f32.mrf.mxu0
      %v760 = vadd.f32 0.0, %v759
      %v761 = vpop.f32.mrf.mxu0
      %v762 = vpop.f32.mrf.mxu0
      %v763 = vadd.f32 0.0, %v762
      %v764 = vpop.f32.mrf.mxu0
      %765 = vmatprep.mubr.bf16.mxu0 0
      %766 = vmatmul.mubr.bf16.gmra.mxu0 %v712
      %v767 = vpop.f32.mrf.mxu0
      %v768 = vadd.f32 0.0, %v767
      %v769 = vpop.f32.mrf.mxu0
      %v770 = vpop.f32.mrf.mxu0
      %v771 = vadd.f32 0.0, %v770
      %v772 = vpop.f32.mrf.mxu0
      %773 = vmatprep.mubr.bf16.mxu0 0
      %774 = vmatmul.mubr.bf16.gmra.mxu0 %v715
      %v775 = vpop.f32.mrf.mxu0
      %v776 = vadd.f32 0.0, %v775
      %v777 = vpop.f32.mrf.mxu0
      %v778 = vpop.f32.mrf.mxu0
      %v779 = vadd.f32 0.0, %v778
      %v780 = vpop.f32.mrf.mxu0
      %781 = vdwg.mxu0
      %v782 = vadd.f32 %v587, %v752
      %v783 = vadd.f32 %v590, %v755
      %v784 = vadd.f32 %v595, %v760
      %v785 = vadd.f32 %v598, %v763
      %v786 = vadd.f32 %v603, %v768
      %v787 = vadd.f32 %v606, %v771
      %v788 = vadd.f32 %v611, %v776
      %v789 = vadd.f32 %v614, %v779
      %vm790 = vsmask.f32 2304
      %vm791 = vsmask.f32 6416
      %vm792 = vmor %vm790, %vm791
      %v793 = vrot.slane %v262, 5
      %v794 = vrot.slane %v265, 6
      %v795 = vor.u32 %v793, %v794
      %v796 = vrot.slane %v795, 4
      %v797 = vshrl.u32 %v227, 16
      %v799 = vrot.slane %v797, 5
      %v800 = vrot.slane %v271, 6
      %v801 = vor.u32 %v799, %v800
      %v802 = vsel %vm792, %v796, %v801
      %v803 = vrot.slane %v276, 5
      %v804 = vrot.slane %v279, 6
      %v805 = vor.u32 %v803, %v804
      %v806 = vrot.slane %v805, 4
      %v807 = vshrl.u32 %v229, 16
      %v809 = vrot.slane %v807, 5
      %v810 = vrot.slane %v285, 6
      %v811 = vor.u32 %v809, %v810
      %v812 = vsel %vm792, %v806, %v811
      %v813 = vrot.slane %v290, 5
      %v814 = vrot.slane %v293, 6
      %v815 = vor.u32 %v813, %v814
      %v816 = vrot.slane %v815, 4
      %v817 = vshrl.u32 %v231, 16
      %v819 = vrot.slane %v817, 5
      %v820 = vrot.slane %v299, 6
      %v821 = vor.u32 %v819, %v820
      %v822 = vsel %vm792, %v816, %v821
      %v823 = vrot.slane %v304, 5
      %v824 = vrot.slane %v307, 6
      %v825 = vor.u32 %v823, %v824
      %v826 = vrot.slane %v825, 4
      %v827 = vshrl.u32 %v233, 16
      %v829 = vrot.slane %v827, 5
      %v830 = vrot.slane %v313, 6
      %v831 = vor.u32 %v829, %v830
      %v832 = vsel %vm792, %v826, %v831
      %v833 = vrot.slane %v318, 5
      %v834 = vrot.slane %v321, 6
      %v835 = vor.u32 %v833, %v834
      %v836 = vrot.slane %v835, 4
      %v837 = vshrl.u32 %v235, 16
      %v839 = vrot.slane %v837, 5
      %v840 = vrot.slane %v327, 6
      %v841 = vor.u32 %v839, %v840
      %v842 = vsel %vm792, %v836, %v841
      %v843 = vrot.slane %v332, 5
      %v844 = vrot.slane %v335, 6
      %v845 = vor.u32 %v843, %v844
      %v846 = vrot.slane %v845, 4
      %v847 = vshrl.u32 %v237, 16
      %v849 = vrot.slane %v847, 5
      %v850 = vrot.slane %v341, 6
      %v851 = vor.u32 %v849, %v850
      %v852 = vsel %vm792, %v846, %v851
      %v853 = vrot.slane %v346, 5
      %v854 = vrot.slane %v349, 6
      %v855 = vor.u32 %v853, %v854
      %v856 = vrot.slane %v855, 4
      %v857 = vshrl.u32 %v239, 16
      %v859 = vrot.slane %v857, 5
      %v860 = vrot.slane %v355, 6
      %v861 = vor.u32 %v859, %v860
      %v862 = vsel %vm792, %v856, %v861
      %v863 = vrot.slane %v360, 5
      %v864 = vrot.slane %v363, 6
      %v865 = vor.u32 %v863, %v864
      %v866 = vrot.slane %v865, 4
      %v867 = vshrl.u32 %v241, 16
      %v869 = vrot.slane %v867, 5
      %v870 = vrot.slane %v369, 6
      %v871 = vor.u32 %v869, %v870
      %v872 = vsel %vm792, %v866, %v871
      %s873 = scalar_lea.vmem %s1, 96
      %v874 = vld [vmem:[%s873] sm:$0xf]
      %v875 = vld [vmem:[%s873 + $0x4] sm:$0xf]
      %v876 = vld [vmem:[%s873 + $0x8] sm:$0xf]
      %v877 = vld [vmem:[%s873 + $0xc] sm:$0xf]
      %v878 = vld [vmem:[%s873 + $0x10] sm:$0xf]
      %v879 = vld [vmem:[%s873 + $0x14] sm:$0xf]
      %v880 = vld [vmem:[%s873 + $0x18] sm:$0xf]
      %v881 = vld [vmem:[%s873 + $0x1c] sm:$0xf]
      %v882 = vunpack.c.l.b16 %v802
      %v883 = vunpack.c.l.b16 %v812
      %v884 = vunpack.c.l.b16 %v822
      %v885 = vunpack.c.l.b16 %v832
      %v886 = vunpack.c.l.b16 %v842
      %v887 = vunpack.c.l.b16 %v852
      %v888 = vunpack.c.l.b16 %v862
      %v889 = vunpack.c.l.b16 %v872
      %v890 = vpack.c.b16 %v883, %v882
      %v891 = vpack.c.b16 %v885, %v884
      %v892 = vpack.c.b16 %v887, %v886
      %v893 = vpack.c.b16 %v889, %v888
      %v902 = vunpack.c.l.b16 %v874
      %v903 = vunpack.c.l.b16 %v875
      %v904 = vunpack.c.l.b16 %v876
      %v905 = vunpack.c.l.b16 %v877
      %v906 = vunpack.c.l.b16 %v878
      %v907 = vunpack.c.l.b16 %v879
      %v908 = vunpack.c.l.b16 %v880
      %v909 = vunpack.c.l.b16 %v881
      %v910 = vpack.c.b16 %v903, %v902
      %v911 = vpack.c.b16 %v905, %v904
      %v912 = vpack.c.b16 %v907, %v906
      %v913 = vpack.c.b16 %v909, %v908
      %v919 = vsel %vm418, %v890, 0
      %v922 = vsel %vm418, %v891, 0
      %v925 = vsel %vm418, %v892, 0
      %v928 = vsel %vm418, %v893, 0
      %930 = vmatprep.subr.bf16.mxu0 0
      %931 = vmatpush1.bf16.msra.mxu0 0
      %932 = vmatprep.subr.bf16.mxu0 0
      %933 = vmatpush1.bf16.msra.mxu0 0
      %934 = vmatprep.subr.bf16.mxu0 0
      %935 = vmatpush1.bf16.msra.mxu0 0
      %936 = vmatprep.subr.bf16.mxu0 0
      %937 = vmatpush1.bf16.msra.mxu0 0
      %938 = vmatprep.subr.bf16.mxu0 0
      %939 = vmatpush1.bf16.msra.mxu0 %v913
      %940 = vmatprep.subr.bf16.mxu0 0
      %941 = vmatpush1.bf16.msra.mxu0 %v912
      %942 = vmatprep.subr.bf16.mxu0 0
      %943 = vmatpush1.bf16.msra.mxu0 %v911
      %944 = vmatprep.subr.bf16.mxu0 0
      %945 = vmatpush1.bf16.msra.mxu0 %v910
      %946 = vmatprep.subr.bf16.mxu0 0
      %947 = vmatpush2.bf16.msra.mxu0 0
      %948 = vmatprep.subr.bf16.mxu0 0
      %949 = vmatpush2.bf16.msra.mxu0 0
      %950 = vmatprep.subr.bf16.mxu0 0
      %951 = vmatpush2.bf16.msra.mxu0 0
      %952 = vmatprep.subr.bf16.mxu0 0
      %953 = vmatpush2.bf16.msra.mxu0 0
      %954 = vmatprep.subr.bf16.mxu0 0
      %955 = vmatpush2.bf16.msra.mxu0 0
      %956 = vmatprep.subr.bf16.mxu0 0
      %957 = vmatpush2.bf16.msra.mxu0 0
      %958 = vmatprep.subr.bf16.mxu0 0
      %959 = vmatpush2.bf16.msra.mxu0 0
      %960 = vmatprep.subr.bf16.mxu0 0
      %961 = vmatpush2.bf16.msra.mxu0 0
      %962 = vmatprep.mubr.bf16.mxu0 0
      %963 = vmatmul.mubr.bf16.gmra.mxu0 %v919
      %v964 = vpop.f32.mrf.mxu0
      %v965 = vadd.f32 0.0, %v964
      %v966 = vpop.f32.mrf.mxu0
      %v967 = vpop.f32.mrf.mxu0
      %v968 = vadd.f32 0.0, %v967
      %v969 = vpop.f32.mrf.mxu0
      %970 = vmatprep.mubr.bf16.mxu0 0
      %971 = vmatmul.mubr.bf16.gmra.mxu0 %v922
      %v972 = vpop.f32.mrf.mxu0
      %v973 = vadd.f32 0.0, %v972
      %v974 = vpop.f32.mrf.mxu0
      %v975 = vpop.f32.mrf.mxu0
      %v976 = vadd.f32 0.0, %v975
      %v977 = vpop.f32.mrf.mxu0
      %978 = vmatprep.mubr.bf16.mxu0 0
      %979 = vmatmul.mubr.bf16.gmra.mxu0 %v925
      %v980 = vpop.f32.mrf.mxu0
      %v981 = vadd.f32 0.0, %v980
      %v982 = vpop.f32.mrf.mxu0
      %v983 = vpop.f32.mrf.mxu0
      %v984 = vadd.f32 0.0, %v983
      %v985 = vpop.f32.mrf.mxu0
      %986 = vmatprep.mubr.bf16.mxu0 0
      %987 = vmatmul.mubr.bf16.gmra.mxu0 %v928
      %v988 = vpop.f32.mrf.mxu0
      %v989 = vadd.f32 0.0, %v988
      %v990 = vpop.f32.mrf.mxu0
      %v991 = vpop.f32.mrf.mxu0
      %v992 = vadd.f32 0.0, %v991
      %v993 = vpop.f32.mrf.mxu0
      %994 = vdwg.mxu0
      %v995 = vadd.f32 %v782, %v965
      %v996 = vadd.f32 %v783, %v968
      %v997 = vadd.f32 %v784, %v973
      %v998 = vadd.f32 %v785, %v976
      %v999 = vadd.f32 %v786, %v981
      %v1000 = vadd.f32 %v787, %v984
      %v1001 = vadd.f32 %v788, %v989
      %v1002 = vadd.f32 %v789, %v992
      %vm1003 = vcmask 1041408
      %vm1004 = vcmask 1045508
      %vm1005 = vmor %vm1003, %vm1004
      %v1006 = vrot.slane %v226, 6
      %v1007 = vrot.slane %v1006, 4
      %v1008 = vrot.slane %v227, 6
      %v1009 = vsel %vm1005, %v1007, %v1008
      %v1010 = vrot.slane %v228, 6
      %v1011 = vrot.slane %v1010, 4
      %v1012 = vrot.slane %v229, 6
      %v1013 = vsel %vm1005, %v1011, %v1012
      %v1014 = vrot.slane %v230, 6
      %v1015 = vrot.slane %v1014, 4
      %v1016 = vrot.slane %v231, 6
      %v1017 = vsel %vm1005, %v1015, %v1016
      %v1018 = vrot.slane %v232, 6
      %v1019 = vrot.slane %v1018, 4
      %v1020 = vrot.slane %v233, 6
      %v1021 = vsel %vm1005, %v1019, %v1020
      %v1022 = vrot.slane %v234, 6
      %v1023 = vrot.slane %v1022, 4
      %v1024 = vrot.slane %v235, 6
      %v1025 = vsel %vm1005, %v1023, %v1024
      %v1026 = vrot.slane %v236, 6
      %v1027 = vrot.slane %v1026, 4
      %v1028 = vrot.slane %v237, 6
      %v1029 = vsel %vm1005, %v1027, %v1028
      %v1030 = vrot.slane %v238, 6
      %v1031 = vrot.slane %v1030, 4
      %v1032 = vrot.slane %v239, 6
      %v1033 = vsel %vm1005, %v1031, %v1032
      %v1034 = vrot.slane %v240, 6
      %v1035 = vrot.slane %v1034, 4
      %v1036 = vrot.slane %v241, 6
      %v1037 = vsel %vm1005, %v1035, %v1036
      %s1038 = scalar_lea.vmem %s1, 128
      %v1039 = vld [vmem:[%s1038] sm:$0xf]
      %v1040 = vld [vmem:[%s1038 + $0x4] sm:$0xf]
      %v1041 = vld [vmem:[%s1038 + $0x8] sm:$0xf]
      %v1042 = vld [vmem:[%s1038 + $0xc] sm:$0xf]
      %v1043 = vld [vmem:[%s1038 + $0x10] sm:$0xf]
      %v1044 = vld [vmem:[%s1038 + $0x14] sm:$0xf]
      %v1045 = vld [vmem:[%s1038 + $0x18] sm:$0xf]
      %v1046 = vld [vmem:[%s1038 + $0x1c] sm:$0xf]
      %v1047 = vunpack.c.l.b16 %v1009
      %v1048 = vunpack.c.l.b16 %v1013
      %v1049 = vunpack.c.l.b16 %v1017
      %v1050 = vunpack.c.l.b16 %v1021
      %v1051 = vunpack.c.l.b16 %v1025
      %v1052 = vunpack.c.l.b16 %v1029
      %v1053 = vunpack.c.l.b16 %v1033
      %v1054 = vunpack.c.l.b16 %v1037
      %v1055 = vpack.c.b16 %v1048, %v1047
      %v1056 = vpack.c.b16 %v1050, %v1049
      %v1057 = vpack.c.b16 %v1052, %v1051
      %v1058 = vpack.c.b16 %v1054, %v1053
      %v1067 = vunpack.c.l.b16 %v1039
      %v1068 = vunpack.c.l.b16 %v1040
      %v1069 = vunpack.c.l.b16 %v1041
      %v1070 = vunpack.c.l.b16 %v1042
      %v1071 = vunpack.c.l.b16 %v1043
      %v1072 = vunpack.c.l.b16 %v1044
      %v1073 = vunpack.c.l.b16 %v1045
      %v1074 = vunpack.c.l.b16 %v1046
      %v1075 = vpack.c.b16 %v1068, %v1067
      %v1076 = vpack.c.b16 %v1070, %v1069
      %v1077 = vpack.c.b16 %v1072, %v1071
      %v1078 = vpack.c.b16 %v1074, %v1073
      %v1084 = vsel %vm418, %v1055, 0
      %v1087 = vsel %vm418, %v1056, 0
      %v1090 = vsel %vm418, %v1057, 0
      %v1093 = vsel %vm418, %v1058, 0
      %1095 = vmatprep.subr.bf16.mxu0 0
      %1096 = vmatpush1.bf16.msra.mxu0 0
      %1097 = vmatprep.subr.bf16.mxu0 0
      %1098 = vmatpush1.bf16.msra.mxu0 0
      %1099 = vmatprep.subr.bf16.mxu0 0
      %1100 = vmatpush1.bf16.msra.mxu0 0
      %1101 = vmatprep.subr.bf16.mxu0 0
      %1102 = vmatpush1.bf16.msra.mxu0 0
      %1103 = vmatprep.subr.bf16.mxu0 0
      %1104 = vmatpush1.bf16.msra.mxu0 %v1078
      %1105 = vmatprep.subr.bf16.mxu0 0
      %1106 = vmatpush1.bf16.msra.mxu0 %v1077
      %1107 = vmatprep.subr.bf16.mxu0 0
      %1108 = vmatpush1.bf16.msra.mxu0 %v1076
      %1109 = vmatprep.subr.bf16.mxu0 0
      %1110 = vmatpush1.bf16.msra.mxu0 %v1075
      %1111 = vmatprep.subr.bf16.mxu0 0
      %1112 = vmatpush2.bf16.msra.mxu0 0
      %1113 = vmatprep.subr.bf16.mxu0 0
      %1114 = vmatpush2.bf16.msra.mxu0 0
      %1115 = vmatprep.subr.bf16.mxu0 0
      %1116 = vmatpush2.bf16.msra.mxu0 0
      %1117 = vmatprep.subr.bf16.mxu0 0
      %1118 = vmatpush2.bf16.msra.mxu0 0
      %1119 = vmatprep.subr.bf16.mxu0 0
      %1120 = vmatpush2.bf16.msra.mxu0 0
      %1121 = vmatprep.subr.bf16.mxu0 0
      %1122 = vmatpush2.bf16.msra.mxu0 0
      %1123 = vmatprep.subr.bf16.mxu0 0
      %1124 = vmatpush2.bf16.msra.mxu0 0
      %1125 = vmatprep.subr.bf16.mxu0 0
      %1126 = vmatpush2.bf16.msra.mxu0 0
      %1127 = vmatprep.mubr.bf16.mxu0 0
      %1128 = vmatmul.mubr.bf16.gmra.mxu0 %v1084
      %v1129 = vpop.f32.mrf.mxu0
      %v1130 = vadd.f32 0.0, %v1129
      %v1131 = vpop.f32.mrf.mxu0
      %v1132 = vpop.f32.mrf.mxu0
      %v1133 = vadd.f32 0.0, %v1132
      %v1134 = vpop.f32.mrf.mxu0
      %1135 = vmatprep.mubr.bf16.mxu0 0
      %1136 = vmatmul.mubr.bf16.gmra.mxu0 %v1087
      %v1137 = vpop.f32.mrf.mxu0
      %v1138 = vadd.f32 0.0, %v1137
      %v1139 = vpop.f32.mrf.mxu0
      %v1140 = vpop.f32.mrf.mxu0
      %v1141 = vadd.f32 0.0, %v1140
      %v1142 = vpop.f32.mrf.mxu0
      %1143 = vmatprep.mubr.bf16.mxu0 0
      %1144 = vmatmul.mubr.bf16.gmra.mxu0 %v1090
      %v1145 = vpop.f32.mrf.mxu0
      %v1146 = vadd.f32 0.0, %v1145
      %v1147 = vpop.f32.mrf.mxu0
      %v1148 = vpop.f32.mrf.mxu0
      %v1149 = vadd.f32 0.0, %v1148
      %v1150 = vpop.f32.mrf.mxu0
      %1151 = vmatprep.mubr.bf16.mxu0 0
      %1152 = vmatmul.mubr.bf16.gmra.mxu0 %v1093
      %v1153 = vpop.f32.mrf.mxu0
      %v1154 = vadd.f32 0.0, %v1153
      %v1155 = vpop.f32.mrf.mxu0
      %v1156 = vpop.f32.mrf.mxu0
      %v1157 = vadd.f32 0.0, %v1156
      %v1158 = vpop.f32.mrf.mxu0
      %1159 = vdwg.mxu0
      %v1160 = vadd.f32 %v995, %v1130
      %v1161 = vadd.f32 %v996, %v1133
      %v1162 = vadd.f32 %v997, %v1138
      %v1163 = vadd.f32 %v998, %v1141
      %v1164 = vadd.f32 %v999, %v1146
      %v1165 = vadd.f32 %v1000, %v1149
      %v1166 = vadd.f32 %v1001, %v1154
      %v1167 = vadd.f32 %v1002, %v1157
      %s1168 = scalar_lea.vmem %s1, 160
      %v1169 = vld [vmem:[%s1168] sm:$0xf]
      %v1170 = vld [vmem:[%s1168 + $0x4] sm:$0xf]
      %v1171 = vld [vmem:[%s1168 + $0x8] sm:$0xf]
      %v1172 = vld [vmem:[%s1168 + $0xc] sm:$0xf]
      %v1173 = vld [vmem:[%s1168 + $0x10] sm:$0xf]
      %v1174 = vld [vmem:[%s1168 + $0x14] sm:$0xf]
      %v1175 = vld [vmem:[%s1168 + $0x18] sm:$0xf]
      %v1176 = vld [vmem:[%s1168 + $0x1c] sm:$0xf]
      %v1178 = vunpack.c.l.b16 %v242
      %v1179 = vpack.c.b16 %v506, %v505
      %v1180 = vpack.c.b16 %v508, %v507
      %v1181 = vpack.c.b16 %v510, %v509
      %v1182 = vpack.c.b16 %v1178, %v511
      %v1191 = vunpack.c.l.b16 %v1169
      %v1192 = vunpack.c.l.b16 %v1170
      %v1193 = vunpack.c.l.b16 %v1171
      %v1194 = vunpack.c.l.b16 %v1172
      %v1195 = vunpack.c.l.b16 %v1173
      %v1196 = vunpack.c.l.b16 %v1174
      %v1197 = vunpack.c.l.b16 %v1175
      %v1198 = vunpack.c.l.b16 %v1176
      %v1199 = vpack.c.b16 %v1192, %v1191
      %v1200 = vpack.c.b16 %v1194, %v1193
      %v1201 = vpack.c.b16 %v1196, %v1195
      %v1202 = vpack.c.b16 %v1198, %v1197
      %v1208 = vsel %vm418, %v1179, 0
      %v1211 = vsel %vm418, %v1180, 0
      %v1214 = vsel %vm418, %v1181, 0
      %v1217 = vsel %vm418, %v1182, 0
      %1219 = vmatprep.subr.bf16.mxu0 0
      %1220 = vmatpush1.bf16.msra.mxu0 0
      %1221 = vmatprep.subr.bf16.mxu0 0
      %1222 = vmatpush1.bf16.msra.mxu0 0
      %1223 = vmatprep.subr.bf16.mxu0 0
      %1224 = vmatpush1.bf16.msra.mxu0 0
      %1225 = vmatprep.subr.bf16.mxu0 0
      %1226 = vmatpush1.bf16.msra.mxu0 0
      %1227 = vmatprep.subr.bf16.mxu0 0
      %1228 = vmatpush1.bf16.msra.mxu0 %v1202
      %1229 = vmatprep.subr.bf16.mxu0 0
      %1230 = vmatpush1.bf16.msra.mxu0 %v1201
      %1231 = vmatprep.subr.bf16.mxu0 0
      %1232 = vmatpush1.bf16.msra.mxu0 %v1200
      %1233 = vmatprep.subr.bf16.mxu0 0
      %1234 = vmatpush1.bf16.msra.mxu0 %v1199
      %1235 = vmatprep.subr.bf16.mxu0 0
      %1236 = vmatpush2.bf16.msra.mxu0 0
      %1237 = vmatprep.subr.bf16.mxu0 0
      %1238 = vmatpush2.bf16.msra.mxu0 0
      %1239 = vmatprep.subr.bf16.mxu0 0
      %1240 = vmatpush2.bf16.msra.mxu0 0
      %1241 = vmatprep.subr.bf16.mxu0 0
      %1242 = vmatpush2.bf16.msra.mxu0 0
      %1243 = vmatprep.subr.bf16.mxu0 0
      %1244 = vmatpush2.bf16.msra.mxu0 0
      %1245 = vmatprep.subr.bf16.mxu0 0
      %1246 = vmatpush2.bf16.msra.mxu0 0
      %1247 = vmatprep.subr.bf16.mxu0 0
      %1248 = vmatpush2.bf16.msra.mxu0 0
      %1249 = vmatprep.subr.bf16.mxu0 0
      %1250 = vmatpush2.bf16.msra.mxu0 0
      %1251 = vmatprep.mubr.bf16.mxu0 0
      %1252 = vmatmul.mubr.bf16.gmra.mxu0 %v1208
      %v1253 = vpop.f32.mrf.mxu0
      %v1254 = vadd.f32 0.0, %v1253
      %v1255 = vpop.f32.mrf.mxu0
      %v1256 = vpop.f32.mrf.mxu0
      %v1257 = vadd.f32 0.0, %v1256
      %v1258 = vpop.f32.mrf.mxu0
      %1259 = vmatprep.mubr.bf16.mxu0 0
      %1260 = vmatmul.mubr.bf16.gmra.mxu0 %v1211
      %v1261 = vpop.f32.mrf.mxu0
      %v1262 = vadd.f32 0.0, %v1261
      %v1263 = vpop.f32.mrf.mxu0
      %v1264 = vpop.f32.mrf.mxu0
      %v1265 = vadd.f32 0.0, %v1264
      %v1266 = vpop.f32.mrf.mxu0
      %1267 = vmatprep.mubr.bf16.mxu0 0
      %1268 = vmatmul.mubr.bf16.gmra.mxu0 %v1214
      %v1269 = vpop.f32.mrf.mxu0
      %v1270 = vadd.f32 0.0, %v1269
      %v1271 = vpop.f32.mrf.mxu0
      %v1272 = vpop.f32.mrf.mxu0
      %v1273 = vadd.f32 0.0, %v1272
      %v1274 = vpop.f32.mrf.mxu0
      %1275 = vmatprep.mubr.bf16.mxu0 0
      %1276 = vmatmul.mubr.bf16.gmra.mxu0 %v1217
      %v1277 = vpop.f32.mrf.mxu0
      %v1278 = vadd.f32 0.0, %v1277
      %v1279 = vpop.f32.mrf.mxu0
      %v1280 = vpop.f32.mrf.mxu0
      %v1281 = vadd.f32 0.0, %v1280
      %v1282 = vpop.f32.mrf.mxu0
      %1283 = vdwg.mxu0
      %v1284 = vadd.f32 %v1160, %v1254
      %v1285 = vadd.f32 %v1161, %v1257
      %v1286 = vadd.f32 %v1162, %v1262
      %v1287 = vadd.f32 %v1163, %v1265
      %v1288 = vadd.f32 %v1164, %v1270
      %v1289 = vadd.f32 %v1165, %v1273
      %v1290 = vadd.f32 %v1166, %v1278
      %v1291 = vadd.f32 %v1167, %v1281
      %v1293 = vshrl.u32 %v242, 16
      %v1295 = vrot.slane %v1293, 4
      %v1296 = vshll.u32 %v242, 16
      %v1298 = vrot.slane %v1296, 5
      %v1299 = vor.u32 %v1295, %v1298
      %v1300 = vrot.slane %v1299, 4
      %v1302 = vshll.u32 %v243, 16
      %v1304 = vrot.slane %v1302, 5
      %v1305 = vsel %vm260, %v1300, %v1304
      %s1306 = scalar_lea.vmem %s1, 192
      %v1307 = vld [vmem:[%s1306] sm:$0xf]
      %v1308 = vld [vmem:[%s1306 + $0x4] sm:$0xf]
      %v1309 = vld [vmem:[%s1306 + $0x8] sm:$0xf]
      %v1310 = vld [vmem:[%s1306 + $0xc] sm:$0xf]
      %v1311 = vld [vmem:[%s1306 + $0x10] sm:$0xf]
      %v1312 = vld [vmem:[%s1306 + $0x14] sm:$0xf]
      %v1313 = vld [vmem:[%s1306 + $0x18] sm:$0xf]
      %v1314 = vld [vmem:[%s1306 + $0x1c] sm:$0xf]
      %v1315 = vunpack.c.l.b16 %v1305
      %v1316 = vpack.c.b16 %v384, %v383
      %v1317 = vpack.c.b16 %v386, %v385
      %v1318 = vpack.c.b16 %v388, %v387
      %v1319 = vpack.c.b16 %v1315, %v389
      %v1328 = vunpack.c.l.b16 %v1307
      %v1329 = vunpack.c.l.b16 %v1308
      %v1330 = vunpack.c.l.b16 %v1309
      %v1331 = vunpack.c.l.b16 %v1310
      %v1332 = vunpack.c.l.b16 %v1311
      %v1333 = vunpack.c.l.b16 %v1312
      %v1334 = vunpack.c.l.b16 %v1313
      %v1335 = vunpack.c.l.b16 %v1314
      %v1336 = vpack.c.b16 %v1329, %v1328
      %v1337 = vpack.c.b16 %v1331, %v1330
      %v1338 = vpack.c.b16 %v1333, %v1332
      %v1339 = vpack.c.b16 %v1335, %v1334
      %v1345 = vsel %vm418, %v1316, 0
      %v1348 = vsel %vm418, %v1317, 0
      %v1351 = vsel %vm418, %v1318, 0
      %v1354 = vsel %vm418, %v1319, 0
      %1356 = vmatprep.subr.bf16.mxu0 0
      %1357 = vmatpush1.bf16.msra.mxu0 0
      %1358 = vmatprep.subr.bf16.mxu0 0
      %1359 = vmatpush1.bf16.msra.mxu0 0
      %1360 = vmatprep.subr.bf16.mxu0 0
      %1361 = vmatpush1.bf16.msra.mxu0 0
      %1362 = vmatprep.subr.bf16.mxu0 0
      %1363 = vmatpush1.bf16.msra.mxu0 0
      %1364 = vmatprep.subr.bf16.mxu0 0
      %1365 = vmatpush1.bf16.msra.mxu0 %v1339
      %1366 = vmatprep.subr.bf16.mxu0 0
      %1367 = vmatpush1.bf16.msra.mxu0 %v1338
      %1368 = vmatprep.subr.bf16.mxu0 0
      %1369 = vmatpush1.bf16.msra.mxu0 %v1337
      %1370 = vmatprep.subr.bf16.mxu0 0
      %1371 = vmatpush1.bf16.msra.mxu0 %v1336
      %1372 = vmatprep.subr.bf16.mxu0 0
      %1373 = vmatpush2.bf16.msra.mxu0 0
      %1374 = vmatprep.subr.bf16.mxu0 0
      %1375 = vmatpush2.bf16.msra.mxu0 0
      %1376 = vmatprep.subr.bf16.mxu0 0
      %1377 = vmatpush2.bf16.msra.mxu0 0
      %1378 = vmatprep.subr.bf16.mxu0 0
      %1379 = vmatpush2.bf16.msra.mxu0 0
      %1380 = vmatprep.subr.bf16.mxu0 0
      %1381 = vmatpush2.bf16.msra.mxu0 0
      %1382 = vmatprep.subr.bf16.mxu0 0
      %1383 = vmatpush2.bf16.msra.mxu0 0
      %1384 = vmatprep.subr.bf16.mxu0 0
      %1385 = vmatpush2.bf16.msra.mxu0 0
      %1386 = vmatprep.subr.bf16.mxu0 0
      %1387 = vmatpush2.bf16.msra.mxu0 0
      %1388 = vmatprep.mubr.bf16.mxu0 0
      %1389 = vmatmul.mubr.bf16.gmra.mxu0 %v1345
      %v1390 = vpop.f32.mrf.mxu0
      %v1391 = vadd.f32 0.0, %v1390
      %v1392 = vpop.f32.mrf.mxu0
      %v1393 = vpop.f32.mrf.mxu0
      %v1394 = vadd.f32 0.0, %v1393
      %v1395 = vpop.f32.mrf.mxu0
      %1396 = vmatprep.mubr.bf16.mxu0 0
      %1397 = vmatmul.mubr.bf16.gmra.mxu0 %v1348
      %v1398 = vpop.f32.mrf.mxu0
      %v1399 = vadd.f32 0.0, %v1398
      %v1400 = vpop.f32.mrf.mxu0
      %v1401 = vpop.f32.mrf.mxu0
      %v1402 = vadd.f32 0.0, %v1401
      %v1403 = vpop.f32.mrf.mxu0
      %1404 = vmatprep.mubr.bf16.mxu0 0
      %1405 = vmatmul.mubr.bf16.gmra.mxu0 %v1351
      %v1406 = vpop.f32.mrf.mxu0
      %v1407 = vadd.f32 0.0, %v1406
      %v1408 = vpop.f32.mrf.mxu0
      %v1409 = vpop.f32.mrf.mxu0
      %v1410 = vadd.f32 0.0, %v1409
      %v1411 = vpop.f32.mrf.mxu0
      %1412 = vmatprep.mubr.bf16.mxu0 0
      %1413 = vmatmul.mubr.bf16.gmra.mxu0 %v1354
      %v1414 = vpop.f32.mrf.mxu0
      %v1415 = vadd.f32 0.0, %v1414
      %v1416 = vpop.f32.mrf.mxu0
      %v1417 = vpop.f32.mrf.mxu0
      %v1418 = vadd.f32 0.0, %v1417
      %v1419 = vpop.f32.mrf.mxu0
      %1420 = vdwg.mxu0
      %v1421 = vadd.f32 %v1284, %v1391
      %v1422 = vadd.f32 %v1285, %v1394
      %v1423 = vadd.f32 %v1286, %v1399
      %v1424 = vadd.f32 %v1287, %v1402
      %v1425 = vadd.f32 %v1288, %v1407
      %v1426 = vadd.f32 %v1289, %v1410
      %v1427 = vadd.f32 %v1290, %v1415
      %v1428 = vadd.f32 %v1291, %v1418
      %v1430 = vrot.slane %v242, 5
      %v1431 = vrot.slane %v1430, 4
      %v1432 = vrot.slane %v243, 5
      %v1433 = vsel %vm627, %v1431, %v1432
      %s1434 = scalar_lea.vmem %s1, 224
      %v1435 = vld [vmem:[%s1434] sm:$0xf]
      %v1436 = vld [vmem:[%s1434 + $0x4] sm:$0xf]
      %v1437 = vld [vmem:[%s1434 + $0x8] sm:$0xf]
      %v1438 = vld [vmem:[%s1434 + $0xc] sm:$0xf]
      %v1439 = vld [vmem:[%s1434 + $0x10] sm:$0xf]
      %v1440 = vld [vmem:[%s1434 + $0x14] sm:$0xf]
      %v1441 = vld [vmem:[%s1434 + $0x18] sm:$0xf]
      %v1442 = vld [vmem:[%s1434 + $0x1c] sm:$0xf]
      %v1443 = vunpack.c.l.b16 %v1433
      %v1444 = vpack.c.b16 %v671, %v670
      %v1445 = vpack.c.b16 %v673, %v672
      %v1446 = vpack.c.b16 %v675, %v674
      %v1447 = vpack.c.b16 %v1443, %v676
      %v1456 = vunpack.c.l.b16 %v1435
      %v1457 = vunpack.c.l.b16 %v1436
      %v1458 = vunpack.c.l.b16 %v1437
      %v1459 = vunpack.c.l.b16 %v1438
      %v1460 = vunpack.c.l.b16 %v1439
      %v1461 = vunpack.c.l.b16 %v1440
      %v1462 = vunpack.c.l.b16 %v1441
      %v1463 = vunpack.c.l.b16 %v1442
      %v1464 = vpack.c.b16 %v1457, %v1456
      %v1465 = vpack.c.b16 %v1459, %v1458
      %v1466 = vpack.c.b16 %v1461, %v1460
      %v1467 = vpack.c.b16 %v1463, %v1462
      %v1473 = vsel %vm418, %v1444, 0
      %v1476 = vsel %vm418, %v1445, 0
      %v1479 = vsel %vm418, %v1446, 0
      %v1482 = vsel %vm418, %v1447, 0
      %1484 = vmatprep.subr.bf16.mxu0 0
      %1485 = vmatpush1.bf16.msra.mxu0 0
      %1486 = vmatprep.subr.bf16.mxu0 0
      %1487 = vmatpush1.bf16.msra.mxu0 0
      %1488 = vmatprep.subr.bf16.mxu0 0
      %1489 = vmatpush1.bf16.msra.mxu0 0
      %1490 = vmatprep.subr.bf16.mxu0 0
      %1491 = vmatpush1.bf16.msra.mxu0 0
      %1492 = vmatprep.subr.bf16.mxu0 0
      %1493 = vmatpush1.bf16.msra.mxu0 %v1467
      %1494 = vmatprep.subr.bf16.mxu0 0
      %1495 = vmatpush1.bf16.msra.mxu0 %v1466
      %1496 = vmatprep.subr.bf16.mxu0 0
      %1497 = vmatpush1.bf16.msra.mxu0 %v1465
      %1498 = vmatprep.subr.bf16.mxu0 0
      %1499 = vmatpush1.bf16.msra.mxu0 %v1464
      %1500 = vmatprep.subr.bf16.mxu0 0
      %1501 = vmatpush2.bf16.msra.mxu0 0
      %1502 = vmatprep.subr.bf16.mxu0 0
      %1503 = vmatpush2.bf16.msra.mxu0 0
      %1504 = vmatprep.subr.bf16.mxu0 0
      %1505 = vmatpush2.bf16.msra.mxu0 0
      %1506 = vmatprep.subr.bf16.mxu0 0
      %1507 = vmatpush2.bf16.msra.mxu0 0
      %1508 = vmatprep.subr.bf16.mxu0 0
      %1509 = vmatpush2.bf16.msra.mxu0 0
      %1510 = vmatprep.subr.bf16.mxu0 0
      %1511 = vmatpush2.bf16.msra.mxu0 0
      %1512 = vmatprep.subr.bf16.mxu0 0
      %1513 = vmatpush2.bf16.msra.mxu0 0
      %1514 = vmatprep.subr.bf16.mxu0 0
      %1515 = vmatpush2.bf16.msra.mxu0 0
      %1516 = vmatprep.mubr.bf16.mxu0 0
      %1517 = vmatmul.mubr.bf16.gmra.mxu0 %v1473
      %v1518 = vpop.f32.mrf.mxu0
      %v1519 = vadd.f32 0.0, %v1518
      %v1520 = vpop.f32.mrf.mxu0
      %v1521 = vpop.f32.mrf.mxu0
      %v1522 = vadd.f32 0.0, %v1521
      %v1523 = vpop.f32.mrf.mxu0
      %1524 = vmatprep.mubr.bf16.mxu0 0
      %1525 = vmatmul.mubr.bf16.gmra.mxu0 %v1476
      %v1526 = vpop.f32.mrf.mxu0
      %v1527 = vadd.f32 0.0, %v1526
      %v1528 = vpop.f32.mrf.mxu0
      %v1529 = vpop.f32.mrf.mxu0
      %v1530 = vadd.f32 0.0, %v1529
      %v1531 = vpop.f32.mrf.mxu0
      %1532 = vmatprep.mubr.bf16.mxu0 0
      %1533 = vmatmul.mubr.bf16.gmra.mxu0 %v1479
      %v1534 = vpop.f32.mrf.mxu0
      %v1535 = vadd.f32 0.0, %v1534
      %v1536 = vpop.f32.mrf.mxu0
      %v1537 = vpop.f32.mrf.mxu0
      %v1538 = vadd.f32 0.0, %v1537
      %v1539 = vpop.f32.mrf.mxu0
      %1540 = vmatprep.mubr.bf16.mxu0 0
      %1541 = vmatmul.mubr.bf16.gmra.mxu0 %v1482
      %v1542 = vpop.f32.mrf.mxu0
      %v1543 = vadd.f32 0.0, %v1542
      %v1544 = vpop.f32.mrf.mxu0
      %v1545 = vpop.f32.mrf.mxu0
      %v1546 = vadd.f32 0.0, %v1545
      %v1547 = vpop.f32.mrf.mxu0
      %1548 = vdwg.mxu0
      %v1549 = vadd.f32 %v1421, %v1519
      %v1550 = vadd.f32 %v1422, %v1522
      %v1551 = vadd.f32 %v1423, %v1527
      %v1552 = vadd.f32 %v1424, %v1530
      %v1553 = vadd.f32 %v1425, %v1535
      %v1554 = vadd.f32 %v1426, %v1538
      %v1555 = vadd.f32 %v1427, %v1543
      %v1556 = vadd.f32 %v1428, %v1546
      %v1557 = vrot.slane %v1293, 5
      %v1558 = vrot.slane %v1296, 6
      %v1559 = vor.u32 %v1557, %v1558
      %v1560 = vrot.slane %v1559, 4
      %v1561 = vshrl.u32 %v243, 16
      %v1563 = vrot.slane %v1561, 5
      %v1564 = vrot.slane %v1302, 6
      %v1565 = vor.u32 %v1563, %v1564
      %v1566 = vsel %vm792, %v1560, %v1565
      %s1567 = scalar_lea.vmem %s1, 256
      %v1568 = vld [vmem:[%s1567] sm:$0xf]
      %v1569 = vld [vmem:[%s1567 + $0x4] sm:$0xf]
      %v1570 = vld [vmem:[%s1567 + $0x8] sm:$0xf]
      %v1571 = vld [vmem:[%s1567 + $0xc] sm:$0xf]
      %v1572 = vld [vmem:[%s1567 + $0x10] sm:$0xf]
      %v1573 = vld [vmem:[%s1567 + $0x14] sm:$0xf]
      %v1574 = vld [vmem:[%s1567 + $0x18] sm:$0xf]
      %v1575 = vld [vmem:[%s1567 + $0x1c] sm:$0xf]
      %v1576 = vunpack.c.l.b16 %v1566
      %v1577 = vpack.c.b16 %v884, %v883
      %v1578 = vpack.c.b16 %v886, %v885
      %v1579 = vpack.c.b16 %v888, %v887
      %v1580 = vpack.c.b16 %v1576, %v889
      %v1589 = vunpack.c.l.b16 %v1568
      %v1590 = vunpack.c.l.b16 %v1569
      %v1591 = vunpack.c.l.b16 %v1570
      %v1592 = vunpack.c.l.b16 %v1571
      %v1593 = vunpack.c.l.b16 %v1572
      %v1594 = vunpack.c.l.b16 %v1573
      %v1595 = vunpack.c.l.b16 %v1574
      %v1596 = vunpack.c.l.b16 %v1575
      %v1597 = vpack.c.b16 %v1590, %v1589
      %v1598 = vpack.c.b16 %v1592, %v1591
      %v1599 = vpack.c.b16 %v1594, %v1593
      %v1600 = vpack.c.b16 %v1596, %v1595
      %v1606 = vsel %vm418, %v1577, 0
      %v1609 = vsel %vm418, %v1578, 0
      %v1612 = vsel %vm418, %v1579, 0
      %v1615 = vsel %vm418, %v1580, 0
      %1617 = vmatprep.subr.bf16.mxu0 0
      %1618 = vmatpush1.bf16.msra.mxu0 0
      %1619 = vmatprep.subr.bf16.mxu0 0
      %1620 = vmatpush1.bf16.msra.mxu0 0
      %1621 = vmatprep.subr.bf16.mxu0 0
      %1622 = vmatpush1.bf16.msra.mxu0 0
      %1623 = vmatprep.subr.bf16.mxu0 0
      %1624 = vmatpush1.bf16.msra.mxu0 0
      %1625 = vmatprep.subr.bf16.mxu0 0
      %1626 = vmatpush1.bf16.msra.mxu0 %v1600
      %1627 = vmatprep.subr.bf16.mxu0 0
      %1628 = vmatpush1.bf16.msra.mxu0 %v1599
      %1629 = vmatprep.subr.bf16.mxu0 0
      %1630 = vmatpush1.bf16.msra.mxu0 %v1598
      %1631 = vmatprep.subr.bf16.mxu0 0
      %1632 = vmatpush1.bf16.msra.mxu0 %v1597
      %1633 = vmatprep.subr.bf16.mxu0 0
      %1634 = vmatpush2.bf16.msra.mxu0 0
      %1635 = vmatprep.subr.bf16.mxu0 0
      %1636 = vmatpush2.bf16.msra.mxu0 0
      %1637 = vmatprep.subr.bf16.mxu0 0
      %1638 = vmatpush2.bf16.msra.mxu0 0
      %1639 = vmatprep.subr.bf16.mxu0 0
      %1640 = vmatpush2.bf16.msra.mxu0 0
      %1641 = vmatprep.subr.bf16.mxu0 0
      %1642 = vmatpush2.bf16.msra.mxu0 0
      %1643 = vmatprep.subr.bf16.mxu0 0
      %1644 = vmatpush2.bf16.msra.mxu0 0
      %1645 = vmatprep.subr.bf16.mxu0 0
      %1646 = vmatpush2.bf16.msra.mxu0 0
      %1647 = vmatprep.subr.bf16.mxu0 0
      %1648 = vmatpush2.bf16.msra.mxu0 0
      %1649 = vmatprep.mubr.bf16.mxu0 0
      %1650 = vmatmul.mubr.bf16.gmra.mxu0 %v1606
      %v1651 = vpop.f32.mrf.mxu0
      %v1652 = vadd.f32 0.0, %v1651
      %v1653 = vpop.f32.mrf.mxu0
      %v1654 = vpop.f32.mrf.mxu0
      %v1655 = vadd.f32 0.0, %v1654
      %v1656 = vpop.f32.mrf.mxu0
      %1657 = vmatprep.mubr.bf16.mxu0 0
      %1658 = vmatmul.mubr.bf16.gmra.mxu0 %v1609
      %v1659 = vpop.f32.mrf.mxu0
      %v1660 = vadd.f32 0.0, %v1659
      %v1661 = vpop.f32.mrf.mxu0
      %v1662 = vpop.f32.mrf.mxu0
      %v1663 = vadd.f32 0.0, %v1662
      %v1664 = vpop.f32.mrf.mxu0
      %1665 = vmatprep.mubr.bf16.mxu0 0
      %1666 = vmatmul.mubr.bf16.gmra.mxu0 %v1612
      %v1667 = vpop.f32.mrf.mxu0
      %v1668 = vadd.f32 0.0, %v1667
      %v1669 = vpop.f32.mrf.mxu0
      %v1670 = vpop.f32.mrf.mxu0
      %v1671 = vadd.f32 0.0, %v1670
      %v1672 = vpop.f32.mrf.mxu0
      %1673 = vmatprep.mubr.bf16.mxu0 0
      %1674 = vmatmul.mubr.bf16.gmra.mxu0 %v1615
      %v1675 = vpop.f32.mrf.mxu0
      %v1676 = vadd.f32 0.0, %v1675
      %v1677 = vpop.f32.mrf.mxu0
      %v1678 = vpop.f32.mrf.mxu0
      %v1679 = vadd.f32 0.0, %v1678
      %v1680 = vpop.f32.mrf.mxu0
      %1681 = vdwg.mxu0
      %v1682 = vadd.f32 %v1549, %v1652
      %v1683 = vadd.f32 %v1550, %v1655
      %v1684 = vadd.f32 %v1551, %v1660
      %v1685 = vadd.f32 %v1552, %v1663
      %v1686 = vadd.f32 %v1553, %v1668
      %v1687 = vadd.f32 %v1554, %v1671
      %v1688 = vadd.f32 %v1555, %v1676
      %v1689 = vadd.f32 %v1556, %v1679
      %v1690 = vrot.slane %v242, 6
      %v1691 = vrot.slane %v1690, 4
      %v1692 = vrot.slane %v243, 6
      %v1693 = vsel %vm1005, %v1691, %v1692
      %s1694 = scalar_lea.vmem %s1, 288
      %v1695 = vld [vmem:[%s1694] sm:$0xf]
      %v1696 = vld [vmem:[%s1694 + $0x4] sm:$0xf]
      %v1697 = vld [vmem:[%s1694 + $0x8] sm:$0xf]
      %v1698 = vld [vmem:[%s1694 + $0xc] sm:$0xf]
      %v1699 = vld [vmem:[%s1694 + $0x10] sm:$0xf]
      %v1700 = vld [vmem:[%s1694 + $0x14] sm:$0xf]
      %v1701 = vld [vmem:[%s1694 + $0x18] sm:$0xf]
      %v1702 = vld [vmem:[%s1694 + $0x1c] sm:$0xf]
      %v1703 = vunpack.c.l.b16 %v1693
      %v1704 = vpack.c.b16 %v1049, %v1048
      %v1705 = vpack.c.b16 %v1051, %v1050
      %v1706 = vpack.c.b16 %v1053, %v1052
      %v1707 = vpack.c.b16 %v1703, %v1054
      %v1716 = vunpack.c.l.b16 %v1695
      %v1717 = vunpack.c.l.b16 %v1696
      %v1718 = vunpack.c.l.b16 %v1697
      %v1719 = vunpack.c.l.b16 %v1698
      %v1720 = vunpack.c.l.b16 %v1699
      %v1721 = vunpack.c.l.b16 %v1700
      %v1722 = vunpack.c.l.b16 %v1701
      %v1723 = vunpack.c.l.b16 %v1702
      %v1724 = vpack.c.b16 %v1717, %v1716
      %v1725 = vpack.c.b16 %v1719, %v1718
      %v1726 = vpack.c.b16 %v1721, %v1720
      %v1727 = vpack.c.b16 %v1723, %v1722
      %v1733 = vsel %vm418, %v1704, 0
      %v1736 = vsel %vm418, %v1705, 0
      %v1739 = vsel %vm418, %v1706, 0
      %v1742 = vsel %vm418, %v1707, 0
      %1744 = vmatprep.subr.bf16.mxu0 0
      %1745 = vmatpush1.bf16.msra.mxu0 0
      %1746 = vmatprep.subr.bf16.mxu0 0
      %1747 = vmatpush1.bf16.msra.mxu0 0
      %1748 = vmatprep.subr.bf16.mxu0 0
      %1749 = vmatpush1.bf16.msra.mxu0 0
      %1750 = vmatprep.subr.bf16.mxu0 0
      %1751 = vmatpush1.bf16.msra.mxu0 0
      %1752 = vmatprep.subr.bf16.mxu0 0
      %1753 = vmatpush1.bf16.msra.mxu0 %v1727
      %1754 = vmatprep.subr.bf16.mxu0 0
      %1755 = vmatpush1.bf16.msra.mxu0 %v1726
      %1756 = vmatprep.subr.bf16.mxu0 0
      %1757 = vmatpush1.bf16.msra.mxu0 %v1725
      %1758 = vmatprep.subr.bf16.mxu0 0
      %1759 = vmatpush1.bf16.msra.mxu0 %v1724
      %1760 = vmatprep.subr.bf16.mxu0 0
      %1761 = vmatpush2.bf16.msra.mxu0 0
      %1762 = vmatprep.subr.bf16.mxu0 0
      %1763 = vmatpush2.bf16.msra.mxu0 0
      %1764 = vmatprep.subr.bf16.mxu0 0
      %1765 = vmatpush2.bf16.msra.mxu0 0
      %1766 = vmatprep.subr.bf16.mxu0 0
      %1767 = vmatpush2.bf16.msra.mxu0 0
      %1768 = vmatprep.subr.bf16.mxu0 0
      %1769 = vmatpush2.bf16.msra.mxu0 0
      %1770 = vmatprep.subr.bf16.mxu0 0
      %1771 = vmatpush2.bf16.msra.mxu0 0
      %1772 = vmatprep.subr.bf16.mxu0 0
      %1773 = vmatpush2.bf16.msra.mxu0 0
      %1774 = vmatprep.subr.bf16.mxu0 0
      %1775 = vmatpush2.bf16.msra.mxu0 0
      %1776 = vmatprep.mubr.bf16.mxu0 0
      %1777 = vmatmul.mubr.bf16.gmra.mxu0 %v1733
      %v1778 = vpop.f32.mrf.mxu0
      %v1779 = vadd.f32 0.0, %v1778
      %v1780 = vpop.f32.mrf.mxu0
      %v1781 = vpop.f32.mrf.mxu0
      %v1782 = vadd.f32 0.0, %v1781
      %v1783 = vpop.f32.mrf.mxu0
      %1784 = vmatprep.mubr.bf16.mxu0 0
      %1785 = vmatmul.mubr.bf16.gmra.mxu0 %v1736
      %v1786 = vpop.f32.mrf.mxu0
      %v1787 = vadd.f32 0.0, %v1786
      %v1788 = vpop.f32.mrf.mxu0
      %v1789 = vpop.f32.mrf.mxu0
      %v1790 = vadd.f32 0.0, %v1789
      %v1791 = vpop.f32.mrf.mxu0
      %1792 = vmatprep.mubr.bf16.mxu0 0
      %1793 = vmatmul.mubr.bf16.gmra.mxu0 %v1739
      %v1794 = vpop.f32.mrf.mxu0
      %v1795 = vadd.f32 0.0, %v1794
      %v1796 = vpop.f32.mrf.mxu0
      %v1797 = vpop.f32.mrf.mxu0
      %v1798 = vadd.f32 0.0, %v1797
      %v1799 = vpop.f32.mrf.mxu0
      %1800 = vmatprep.mubr.bf16.mxu0 0
      %1801 = vmatmul.mubr.bf16.gmra.mxu0 %v1742
      %v1802 = vpop.f32.mrf.mxu0
      %v1803 = vadd.f32 0.0, %v1802
      %v1804 = vpop.f32.mrf.mxu0
      %v1805 = vpop.f32.mrf.mxu0
      %v1806 = vadd.f32 0.0, %v1805
      %v1807 = vpop.f32.mrf.mxu0
      %1808 = vdwg.mxu0
      %v1809 = vadd.f32 %v1682, %v1779
      %v1810 = vadd.f32 %v1683, %v1782
      %v1811 = vadd.f32 %v1684, %v1787
      %v1812 = vadd.f32 %v1685, %v1790
      %v1813 = vadd.f32 %v1686, %v1795
      %v1814 = vadd.f32 %v1687, %v1798
      %v1815 = vadd.f32 %v1688, %v1803
      %v1816 = vadd.f32 %v1689, %v1806
      %s1817 = scalar_lea.vmem %s1, 320
      %v1818 = vld [vmem:[%s1817] sm:$0xf]
      %v1819 = vld [vmem:[%s1817 + $0x4] sm:$0xf]
      %v1820 = vld [vmem:[%s1817 + $0x8] sm:$0xf]
      %v1821 = vld [vmem:[%s1817 + $0xc] sm:$0xf]
      %v1822 = vld [vmem:[%s1817 + $0x10] sm:$0xf]
      %v1823 = vld [vmem:[%s1817 + $0x14] sm:$0xf]
      %v1824 = vld [vmem:[%s1817 + $0x18] sm:$0xf]
      %v1825 = vld [vmem:[%s1817 + $0x1c] sm:$0xf]
      %v1827 = vunpack.c.l.b16 %v244
      %v1828 = vpack.c.b16 %v1827, %v1178
      %v1837 = vunpack.c.l.b16 %v1818
      %v1838 = vunpack.c.l.b16 %v1819
      %v1839 = vunpack.c.l.b16 %v1820
      %v1840 = vunpack.c.l.b16 %v1821
      %v1841 = vunpack.c.l.b16 %v1822
      %v1842 = vunpack.c.l.b16 %v1823
      %v1843 = vunpack.c.l.b16 %v1824
      %v1844 = vunpack.c.l.b16 %v1825
      %v1845 = vpack.c.b16 %v1838, %v1837
      %v1846 = vpack.c.b16 %v1840, %v1839
      %v1847 = vpack.c.b16 %v1842, %v1841
      %v1848 = vpack.c.b16 %v1844, %v1843
      %v1854 = vsel %vm418, %v1828, 0
      %1856 = vmatprep.subr.bf16.mxu0 0
      %1857 = vmatpush1.bf16.msra.mxu0 0
      %1858 = vmatprep.subr.bf16.mxu0 0
      %1859 = vmatpush1.bf16.msra.mxu0 0
      %1860 = vmatprep.subr.bf16.mxu0 0
      %1861 = vmatpush1.bf16.msra.mxu0 0
      %1862 = vmatprep.subr.bf16.mxu0 0
      %1863 = vmatpush1.bf16.msra.mxu0 0
      %1864 = vmatprep.subr.bf16.mxu0 0
      %1865 = vmatpush1.bf16.msra.mxu0 %v1848
      %1866 = vmatprep.subr.bf16.mxu0 0
      %1867 = vmatpush1.bf16.msra.mxu0 %v1847
      %1868 = vmatprep.subr.bf16.mxu0 0
      %1869 = vmatpush1.bf16.msra.mxu0 %v1846
      %1870 = vmatprep.subr.bf16.mxu0 0
      %1871 = vmatpush1.bf16.msra.mxu0 %v1845
      %1872 = vmatprep.subr.bf16.mxu0 0
      %1873 = vmatpush2.bf16.msra.mxu0 0
      %1874 = vmatprep.subr.bf16.mxu0 0
      %1875 = vmatpush2.bf16.msra.mxu0 0
      %1876 = vmatprep.subr.bf16.mxu0 0
      %1877 = vmatpush2.bf16.msra.mxu0 0
      %1878 = vmatprep.subr.bf16.mxu0 0
      %1879 = vmatpush2.bf16.msra.mxu0 0
      %1880 = vmatprep.subr.bf16.mxu0 0
      %1881 = vmatpush2.bf16.msra.mxu0 0
      %1882 = vmatprep.subr.bf16.mxu0 0
      %1883 = vmatpush2.bf16.msra.mxu0 0
      %1884 = vmatprep.subr.bf16.mxu0 0
      %1885 = vmatpush2.bf16.msra.mxu0 0
      %1886 = vmatprep.subr.bf16.mxu0 0
      %1887 = vmatpush2.bf16.msra.mxu0 0
      %1888 = vmatprep.mubr.bf16.mxu0 0
      %1889 = vmatmul.mubr.bf16.gmra.mxu0 %v544
      %v1890 = vpop.f32.mrf.mxu0
      %v1891 = vadd.f32 0.0, %v1890
      %v1892 = vpop.f32.mrf.mxu0
      %v1893 = vpop.f32.mrf.mxu0
      %v1894 = vadd.f32 0.0, %v1893
      %v1895 = vpop.f32.mrf.mxu0
      %1896 = vmatprep.mubr.bf16.mxu0 0
      %1897 = vmatmul.mubr.bf16.gmra.mxu0 %v547
      %v1898 = vpop.f32.mrf.mxu0
      %v1899 = vadd.f32 0.0, %v1898
      %v1900 = vpop.f32.mrf.mxu0
      %v1901 = vpop.f32.mrf.mxu0
      %v1902 = vadd.f32 0.0, %v1901
      %v1903 = vpop.f32.mrf.mxu0
      %1904 = vmatprep.mubr.bf16.mxu0 0
      %1905 = vmatmul.mubr.bf16.gmra.mxu0 %v550
      %v1906 = vpop.f32.mrf.mxu0
      %v1907 = vadd.f32 0.0, %v1906
      %v1908 = vpop.f32.mrf.mxu0
      %v1909 = vpop.f32.mrf.mxu0
      %v1910 = vadd.f32 0.0, %v1909
      %v1911 = vpop.f32.mrf.mxu0
      %1912 = vmatprep.mubr.bf16.mxu0 0
      %1913 = vmatmul.mubr.bf16.gmra.mxu0 %v1854
      %v1914 = vpop.f32.mrf.mxu0
      %v1915 = vadd.f32 0.0, %v1914
      %v1916 = vpop.f32.mrf.mxu0
      %v1917 = vpop.f32.mrf.mxu0
      %v1918 = vadd.f32 0.0, %v1917
      %v1919 = vpop.f32.mrf.mxu0
      %1920 = vdwg.mxu0
      %v1921 = vadd.f32 %v1809, %v1891
      %v1922 = vadd.f32 %v1810, %v1894
      %v1923 = vadd.f32 %v1811, %v1899
      %v1924 = vadd.f32 %v1812, %v1902
      %v1925 = vadd.f32 %v1813, %v1907
      %v1926 = vadd.f32 %v1814, %v1910
      %v1927 = vadd.f32 %v1815, %v1915
      %v1928 = vadd.f32 %v1816, %v1918
      %v1930 = vshrl.u32 %v244, 16
      %v1932 = vrot.slane %v1930, 4
      %v1933 = vshll.u32 %v244, 16
      %v1935 = vrot.slane %v1933, 5
      %v1936 = vor.u32 %v1932, %v1935
      %v1937 = vrot.slane %v1936, 4
      %v1939 = vshll.u32 %v245, 16
      %v1941 = vrot.slane %v1939, 5
      %v1942 = vsel %vm260, %v1937, %v1941
      %s1943 = scalar_lea.vmem %s1, 352
      %v1944 = vld [vmem:[%s1943] sm:$0xf]
      %v1945 = vld [vmem:[%s1943 + $0x4] sm:$0xf]
      %v1946 = vld [vmem:[%s1943 + $0x8] sm:$0xf]
      %v1947 = vld [vmem:[%s1943 + $0xc] sm:$0xf]
      %v1948 = vld [vmem:[%s1943 + $0x10] sm:$0xf]
      %v1949 = vld [vmem:[%s1943 + $0x14] sm:$0xf]
      %v1950 = vld [vmem:[%s1943 + $0x18] sm:$0xf]
      %v1951 = vld [vmem:[%s1943 + $0x1c] sm:$0xf]
      %v1952 = vunpack.c.l.b16 %v1942
      %v1953 = vpack.c.b16 %v1952, %v1315
      %v1962 = vunpack.c.l.b16 %v1944
      %v1963 = vunpack.c.l.b16 %v1945
      %v1964 = vunpack.c.l.b16 %v1946
      %v1965 = vunpack.c.l.b16 %v1947
      %v1966 = vunpack.c.l.b16 %v1948
      %v1967 = vunpack.c.l.b16 %v1949
      %v1968 = vunpack.c.l.b16 %v1950
      %v1969 = vunpack.c.l.b16 %v1951
      %v1970 = vpack.c.b16 %v1963, %v1962
      %v1971 = vpack.c.b16 %v1965, %v1964
      %v1972 = vpack.c.b16 %v1967, %v1966
      %v1973 = vpack.c.b16 %v1969, %v1968
      %v1979 = vsel %vm418, %v1953, 0
      %1981 = vmatprep.subr.bf16.mxu0 0
      %1982 = vmatpush1.bf16.msra.mxu0 0
      %1983 = vmatprep.subr.bf16.mxu0 0
      %1984 = vmatpush1.bf16.msra.mxu0 0
      %1985 = vmatprep.subr.bf16.mxu0 0
      %1986 = vmatpush1.bf16.msra.mxu0 0
      %1987 = vmatprep.subr.bf16.mxu0 0
      %1988 = vmatpush1.bf16.msra.mxu0 0
      %1989 = vmatprep.subr.bf16.mxu0 0
      %1990 = vmatpush1.bf16.msra.mxu0 %v1973
      %1991 = vmatprep.subr.bf16.mxu0 0
      %1992 = vmatpush1.bf16.msra.mxu0 %v1972
      %1993 = vmatprep.subr.bf16.mxu0 0
      %1994 = vmatpush1.bf16.msra.mxu0 %v1971
      %1995 = vmatprep.subr.bf16.mxu0 0
      %1996 = vmatpush1.bf16.msra.mxu0 %v1970
      %1997 = vmatprep.subr.bf16.mxu0 0
      %1998 = vmatpush2.bf16.msra.mxu0 0
      %1999 = vmatprep.subr.bf16.mxu0 0
      %2000 = vmatpush2.bf16.msra.mxu0 0
      %2001 = vmatprep.subr.bf16.mxu0 0
      %2002 = vmatpush2.bf16.msra.mxu0 0
      %2003 = vmatprep.subr.bf16.mxu0 0
      %2004 = vmatpush2.bf16.msra.mxu0 0
      %2005 = vmatprep.subr.bf16.mxu0 0
      %2006 = vmatpush2.bf16.msra.mxu0 0
      %2007 = vmatprep.subr.bf16.mxu0 0
      %2008 = vmatpush2.bf16.msra.mxu0 0
      %2009 = vmatprep.subr.bf16.mxu0 0
      %2010 = vmatpush2.bf16.msra.mxu0 0
      %2011 = vmatprep.subr.bf16.mxu0 0
      %2012 = vmatpush2.bf16.msra.mxu0 0
      %2013 = vmatprep.mubr.bf16.mxu0 0
      %2014 = vmatmul.mubr.bf16.gmra.mxu0 %v423
      %v2015 = vpop.f32.mrf.mxu0
      %v2016 = vadd.f32 0.0, %v2015
      %v2017 = vpop.f32.mrf.mxu0
      %v2018 = vpop.f32.mrf.mxu0
      %v2019 = vadd.f32 0.0, %v2018
      %v2020 = vpop.f32.mrf.mxu0
      %2021 = vmatprep.mubr.bf16.mxu0 0
      %2022 = vmatmul.mubr.bf16.gmra.mxu0 %v426
      %v2023 = vpop.f32.mrf.mxu0
      %v2024 = vadd.f32 0.0, %v2023
      %v2025 = vpop.f32.mrf.mxu0
      %v2026 = vpop.f32.mrf.mxu0
      %v2027 = vadd.f32 0.0, %v2026
      %v2028 = vpop.f32.mrf.mxu0
      %2029 = vmatprep.mubr.bf16.mxu0 0
      %2030 = vmatmul.mubr.bf16.gmra.mxu0 %v429
      %v2031 = vpop.f32.mrf.mxu0
      %v2032 = vadd.f32 0.0, %v2031
      %v2033 = vpop.f32.mrf.mxu0
      %v2034 = vpop.f32.mrf.mxu0
      %v2035 = vadd.f32 0.0, %v2034
      %v2036 = vpop.f32.mrf.mxu0
      %2037 = vmatprep.mubr.bf16.mxu0 0
      %2038 = vmatmul.mubr.bf16.gmra.mxu0 %v1979
      %v2039 = vpop.f32.mrf.mxu0
      %v2040 = vadd.f32 0.0, %v2039
      %v2041 = vpop.f32.mrf.mxu0
      %v2042 = vpop.f32.mrf.mxu0
      %v2043 = vadd.f32 0.0, %v2042
      %v2044 = vpop.f32.mrf.mxu0
      %2045 = vdwg.mxu0
      %v2046 = vadd.f32 %v1921, %v2016
      %v2047 = vadd.f32 %v1922, %v2019
      %v2048 = vadd.f32 %v1923, %v2024
      %v2049 = vadd.f32 %v1924, %v2027
      %v2050 = vadd.f32 %v1925, %v2032
      %v2051 = vadd.f32 %v1926, %v2035
      %v2052 = vadd.f32 %v1927, %v2040
      %v2053 = vadd.f32 %v1928, %v2043
      %v2055 = vrot.slane %v244, 5
      %v2056 = vrot.slane %v2055, 4
      %v2057 = vrot.slane %v245, 5
      %v2058 = vsel %vm627, %v2056, %v2057
      %s2067 = scalar_lea.vmem %s1, 384
      %v2068 = vld [vmem:[%s2067] sm:$0xf]
      %v2069 = vld [vmem:[%s2067 + $0x4] sm:$0xf]
      %v2070 = vld [vmem:[%s2067 + $0x8] sm:$0xf]
      %v2071 = vld [vmem:[%s2067 + $0xc] sm:$0xf]
      %v2072 = vld [vmem:[%s2067 + $0x10] sm:$0xf]
      %v2073 = vld [vmem:[%s2067 + $0x14] sm:$0xf]
      %v2074 = vld [vmem:[%s2067 + $0x18] sm:$0xf]
      %v2075 = vld [vmem:[%s2067 + $0x1c] sm:$0xf]
      %v2076 = vunpack.c.l.b16 %v2058
      %v2077 = vpack.c.b16 %v2076, %v1443
      %v2086 = vunpack.c.l.b16 %v2068
      %v2087 = vunpack.c.l.b16 %v2069
      %v2088 = vunpack.c.l.b16 %v2070
      %v2089 = vunpack.c.l.b16 %v2071
      %v2090 = vunpack.c.l.b16 %v2072
      %v2091 = vunpack.c.l.b16 %v2073
      %v2092 = vunpack.c.l.b16 %v2074
      %v2093 = vunpack.c.l.b16 %v2075
      %v2094 = vpack.c.b16 %v2087, %v2086
      %v2095 = vpack.c.b16 %v2089, %v2088
      %v2096 = vpack.c.b16 %v2091, %v2090
      %v2097 = vpack.c.b16 %v2093, %v2092
      %v2103 = vsel %vm418, %v2077, 0
      %2105 = vmatprep.subr.bf16.mxu0 0
      %2106 = vmatpush1.bf16.msra.mxu0 0
      %2107 = vmatprep.subr.bf16.mxu0 0
      %2108 = vmatpush1.bf16.msra.mxu0 0
      %2109 = vmatprep.subr.bf16.mxu0 0
      %2110 = vmatpush1.bf16.msra.mxu0 0
      %2111 = vmatprep.subr.bf16.mxu0 0
      %2112 = vmatpush1.bf16.msra.mxu0 0
      %2113 = vmatprep.subr.bf16.mxu0 0
      %2114 = vmatpush1.bf16.msra.mxu0 %v2097
      %2115 = vmatprep.subr.bf16.mxu0 0
      %2116 = vmatpush1.bf16.msra.mxu0 %v2096
      %2117 = vmatprep.subr.bf16.mxu0 0
      %2118 = vmatpush1.bf16.msra.mxu0 %v2095
      %2119 = vmatprep.subr.bf16.mxu0 0
      %2120 = vmatpush1.bf16.msra.mxu0 %v2094
      %2121 = vmatprep.subr.bf16.mxu0 0
      %2122 = vmatpush2.bf16.msra.mxu0 0
      %2123 = vmatprep.subr.bf16.mxu0 0
      %2124 = vmatpush2.bf16.msra.mxu0 0
      %2125 = vmatprep.subr.bf16.mxu0 0
      %2126 = vmatpush2.bf16.msra.mxu0 0
      %2127 = vmatprep.subr.bf16.mxu0 0
      %2128 = vmatpush2.bf16.msra.mxu0 0
      %2129 = vmatprep.subr.bf16.mxu0 0
      %2130 = vmatpush2.bf16.msra.mxu0 0
      %2131 = vmatprep.subr.bf16.mxu0 0
      %2132 = vmatpush2.bf16.msra.mxu0 0
      %2133 = vmatprep.subr.bf16.mxu0 0
      %2134 = vmatpush2.bf16.msra.mxu0 0
      %2135 = vmatprep.subr.bf16.mxu0 0
      %2136 = vmatpush2.bf16.msra.mxu0 0
      %2137 = vmatprep.mubr.bf16.mxu0 0
      %2138 = vmatmul.mubr.bf16.gmra.mxu0 %v709
      %v2139 = vpop.f32.mrf.mxu0
      %v2140 = vadd.f32 0.0, %v2139
      %v2141 = vpop.f32.mrf.mxu0
      %v2142 = vpop.f32.mrf.mxu0
      %v2143 = vadd.f32 0.0, %v2142
      %v2144 = vpop.f32.mrf.mxu0
      %2145 = vmatprep.mubr.bf16.mxu0 0
      %2146 = vmatmul.mubr.bf16.gmra.mxu0 %v712
      %v2147 = vpop.f32.mrf.mxu0
      %v2148 = vadd.f32 0.0, %v2147
      %v2149 = vpop.f32.mrf.mxu0
      %v2150 = vpop.f32.mrf.mxu0
      %v2151 = vadd.f32 0.0, %v2150
      %v2152 = vpop.f32.mrf.mxu0
      %2153 = vmatprep.mubr.bf16.mxu0 0
      %2154 = vmatmul.mubr.bf16.gmra.mxu0 %v715
      %v2155 = vpop.f32.mrf.mxu0
      %v2156 = vadd.f32 0.0, %v2155
      %v2157 = vpop.f32.mrf.mxu0
      %v2158 = vpop.f32.mrf.mxu0
      %v2159 = vadd.f32 0.0, %v2158
      %v2160 = vpop.f32.mrf.mxu0
      %2161 = vmatprep.mubr.bf16.mxu0 0
      %2162 = vmatmul.mubr.bf16.gmra.mxu0 %v2103
      %v2163 = vpop.f32.mrf.mxu0
      %v2164 = vadd.f32 0.0, %v2163
      %v2165 = vpop.f32.mrf.mxu0
      %v2166 = vpop.f32.mrf.mxu0
      %v2167 = vadd.f32 0.0, %v2166
      %v2168 = vpop.f32.mrf.mxu0
      %2169 = vdwg.mxu0
      %v2170 = vadd.f32 %v2046, %v2140
      %v2171 = vadd.f32 %v2047, %v2143
      %v2172 = vadd.f32 %v2048, %v2148
      %v2173 = vadd.f32 %v2049, %v2151
      %v2174 = vadd.f32 %v2050, %v2156
      %v2175 = vadd.f32 %v2051, %v2159
      %v2176 = vadd.f32 %v2052, %v2164
      %v2177 = vadd.f32 %v2053, %v2167
      %v2178 = vrot.slane %v1930, 5
      %v2179 = vrot.slane %v1933, 6
      %v2180 = vor.u32 %v2178, %v2179
      %v2181 = vrot.slane %v2180, 4
      %v2182 = vshrl.u32 %v245, 16
      %v2184 = vrot.slane %v2182, 5
      %v2185 = vrot.slane %v1939, 6
      %v2186 = vor.u32 %v2184, %v2185
      %v2187 = vsel %vm792, %v2181, %v2186
      %s2188 = scalar_lea.vmem %s1, 416
      %v2189 = vld [vmem:[%s2188] sm:$0xf]
      %v2190 = vld [vmem:[%s2188 + $0x4] sm:$0xf]
      %v2191 = vld [vmem:[%s2188 + $0x8] sm:$0xf]
      %v2192 = vld [vmem:[%s2188 + $0xc] sm:$0xf]
      %v2193 = vld [vmem:[%s2188 + $0x10] sm:$0xf]
      %v2194 = vld [vmem:[%s2188 + $0x14] sm:$0xf]
      %v2195 = vld [vmem:[%s2188 + $0x18] sm:$0xf]
      %v2196 = vld [vmem:[%s2188 + $0x1c] sm:$0xf]
      %v2197 = vunpack.c.l.b16 %v2187
      %v2198 = vpack.c.b16 %v2197, %v1576
      %v2207 = vunpack.c.l.b16 %v2189
      %v2208 = vunpack.c.l.b16 %v2190
      %v2209 = vunpack.c.l.b16 %v2191
      %v2210 = vunpack.c.l.b16 %v2192
      %v2211 = vunpack.c.l.b16 %v2193
      %v2212 = vunpack.c.l.b16 %v2194
      %v2213 = vunpack.c.l.b16 %v2195
      %v2214 = vunpack.c.l.b16 %v2196
      %v2215 = vpack.c.b16 %v2208, %v2207
      %v2216 = vpack.c.b16 %v2210, %v2209
      %v2217 = vpack.c.b16 %v2212, %v2211
      %v2218 = vpack.c.b16 %v2214, %v2213
      %v2224 = vsel %vm418, %v2198, 0
      %2226 = vmatprep.subr.bf16.mxu0 0
      %2227 = vmatpush1.bf16.msra.mxu0 0
      %2228 = vmatprep.subr.bf16.mxu0 0
      %2229 = vmatpush1.bf16.msra.mxu0 0
      %2230 = vmatprep.subr.bf16.mxu0 0
      %2231 = vmatpush1.bf16.msra.mxu0 0
      %2232 = vmatprep.subr.bf16.mxu0 0
      %2233 = vmatpush1.bf16.msra.mxu0 0
      %2234 = vmatprep.subr.bf16.mxu0 0
      %2235 = vmatpush1.bf16.msra.mxu0 %v2218
      %2236 = vmatprep.subr.bf16.mxu0 0
      %2237 = vmatpush1.bf16.msra.mxu0 %v2217
      %2238 = vmatprep.subr.bf16.mxu0 0
      %2239 = vmatpush1.bf16.msra.mxu0 %v2216
      %2240 = vmatprep.subr.bf16.mxu0 0
      %2241 = vmatpush1.bf16.msra.mxu0 %v2215
      %2242 = vmatprep.subr.bf16.mxu0 0
      %2243 = vmatpush2.bf16.msra.mxu0 0
      %2244 = vmatprep.subr.bf16.mxu0 0
      %2245 = vmatpush2.bf16.msra.mxu0 0
      %2246 = vmatprep.subr.bf16.mxu0 0
      %2247 = vmatpush2.bf16.msra.mxu0 0
      %2248 = vmatprep.subr.bf16.mxu0 0
      %2249 = vmatpush2.bf16.msra.mxu0 0
      %2250 = vmatprep.subr.bf16.mxu0 0
      %2251 = vmatpush2.bf16.msra.mxu0 0
      %2252 = vmatprep.subr.bf16.mxu0 0
      %2253 = vmatpush2.bf16.msra.mxu0 0
      %2254 = vmatprep.subr.bf16.mxu0 0
      %2255 = vmatpush2.bf16.msra.mxu0 0
      %2256 = vmatprep.subr.bf16.mxu0 0
      %2257 = vmatpush2.bf16.msra.mxu0 0
      %2258 = vmatprep.mubr.bf16.mxu0 0
      %2259 = vmatmul.mubr.bf16.gmra.mxu0 %v922
      %v2260 = vpop.f32.mrf.mxu0
      %v2261 = vadd.f32 0.0, %v2260
      %v2262 = vpop.f32.mrf.mxu0
      %v2263 = vpop.f32.mrf.mxu0
      %v2264 = vadd.f32 0.0, %v2263
      %v2265 = vpop.f32.mrf.mxu0
      %2266 = vmatprep.mubr.bf16.mxu0 0
      %2267 = vmatmul.mubr.bf16.gmra.mxu0 %v925
      %v2268 = vpop.f32.mrf.mxu0
      %v2269 = vadd.f32 0.0, %v2268
      %v2270 = vpop.f32.mrf.mxu0
      %v2271 = vpop.f32.mrf.mxu0
      %v2272 = vadd.f32 0.0, %v2271
      %v2273 = vpop.f32.mrf.mxu0
      %2274 = vmatprep.mubr.bf16.mxu0 0
      %2275 = vmatmul.mubr.bf16.gmra.mxu0 %v928
      %v2276 = vpop.f32.mrf.mxu0
      %v2277 = vadd.f32 0.0, %v2276
      %v2278 = vpop.f32.mrf.mxu0
      %v2279 = vpop.f32.mrf.mxu0
      %v2280 = vadd.f32 0.0, %v2279
      %v2281 = vpop.f32.mrf.mxu0
      %2282 = vmatprep.mubr.bf16.mxu0 0
      %2283 = vmatmul.mubr.bf16.gmra.mxu0 %v2224
      %v2284 = vpop.f32.mrf.mxu0
      %v2285 = vadd.f32 0.0, %v2284
      %v2286 = vpop.f32.mrf.mxu0
      %v2287 = vpop.f32.mrf.mxu0
      %v2288 = vadd.f32 0.0, %v2287
      %v2289 = vpop.f32.mrf.mxu0
      %2290 = vdwg.mxu0
      %v2291 = vadd.f32 %v2170, %v2261
      %v2292 = vadd.f32 %v2171, %v2264
      %v2293 = vadd.f32 %v2172, %v2269
      %v2294 = vadd.f32 %v2173, %v2272
      %v2295 = vadd.f32 %v2174, %v2277
      %v2296 = vadd.f32 %v2175, %v2280
      %v2297 = vadd.f32 %v2176, %v2285
      %v2298 = vadd.f32 %v2177, %v2288
      %v2299 = vrot.slane %v244, 6
      %v2300 = vrot.slane %v2299, 4
      %v2301 = vrot.slane %v245, 6
      %v2302 = vsel %vm1005, %v2300, %v2301
      %s2303 = scalar_lea.vmem %s1, 448
      %v2304 = vld [vmem:[%s2303] sm:$0xf]
      %v2305 = vld [vmem:[%s2303 + $0x4] sm:$0xf]
      %v2306 = vld [vmem:[%s2303 + $0x8] sm:$0xf]
      %v2307 = vld [vmem:[%s2303 + $0xc] sm:$0xf]
      %v2308 = vld [vmem:[%s2303 + $0x10] sm:$0xf]
      %v2309 = vld [vmem:[%s2303 + $0x14] sm:$0xf]
      %v2310 = vld [vmem:[%s2303 + $0x18] sm:$0xf]
      %v2311 = vld [vmem:[%s2303 + $0x1c] sm:$0xf]
      %v2312 = vunpack.c.l.b16 %v2302
      %v2313 = vpack.c.b16 %v2312, %v1703
      %v2322 = vunpack.c.l.b16 %v2304
      %v2323 = vunpack.c.l.b16 %v2305
      %v2324 = vunpack.c.l.b16 %v2306
      %v2325 = vunpack.c.l.b16 %v2307
      %v2326 = vunpack.c.l.b16 %v2308
      %v2327 = vunpack.c.l.b16 %v2309
      %v2328 = vunpack.c.l.b16 %v2310
      %v2329 = vunpack.c.l.b16 %v2311
      %v2330 = vpack.c.b16 %v2323, %v2322
      %v2331 = vpack.c.b16 %v2325, %v2324
      %v2332 = vpack.c.b16 %v2327, %v2326
      %v2333 = vpack.c.b16 %v2329, %v2328
      %v2339 = vsel %vm418, %v2313, 0
      %2341 = vmatprep.subr.bf16.mxu0 0
      %2342 = vmatpush1.bf16.msra.mxu0 0
      %2343 = vmatprep.subr.bf16.mxu0 0
      %2344 = vmatpush1.bf16.msra.mxu0 0
      %2345 = vmatprep.subr.bf16.mxu0 0
      %2346 = vmatpush1.bf16.msra.mxu0 0
      %2347 = vmatprep.subr.bf16.mxu0 0
      %2348 = vmatpush1.bf16.msra.mxu0 0
      %2349 = vmatprep.subr.bf16.mxu0 0
      %2350 = vmatpush1.bf16.msra.mxu0 %v2333
      %2351 = vmatprep.subr.bf16.mxu0 0
      %2352 = vmatpush1.bf16.msra.mxu0 %v2332
      %2353 = vmatprep.subr.bf16.mxu0 0
      %2354 = vmatpush1.bf16.msra.mxu0 %v2331
      %2355 = vmatprep.subr.bf16.mxu0 0
      %2356 = vmatpush1.bf16.msra.mxu0 %v2330
      %2357 = vmatprep.subr.bf16.mxu0 0
      %2358 = vmatpush2.bf16.msra.mxu0 0
      %2359 = vmatprep.subr.bf16.mxu0 0
      %2360 = vmatpush2.bf16.msra.mxu0 0
      %2361 = vmatprep.subr.bf16.mxu0 0
      %2362 = vmatpush2.bf16.msra.mxu0 0
      %2363 = vmatprep.subr.bf16.mxu0 0
      %2364 = vmatpush2.bf16.msra.mxu0 0
      %2365 = vmatprep.subr.bf16.mxu0 0
      %2366 = vmatpush2.bf16.msra.mxu0 0
      %2367 = vmatprep.subr.bf16.mxu0 0
      %2368 = vmatpush2.bf16.msra.mxu0 0
      %2369 = vmatprep.subr.bf16.mxu0 0
      %2370 = vmatpush2.bf16.msra.mxu0 0
      %2371 = vmatprep.subr.bf16.mxu0 0
      %2372 = vmatpush2.bf16.msra.mxu0 0
      %2373 = vmatprep.mubr.bf16.mxu0 0
      %2374 = vmatmul.mubr.bf16.gmra.mxu0 %v1087
      %v2375 = vpop.f32.mrf.mxu0
      %v2376 = vadd.f32 0.0, %v2375
      %v2377 = vpop.f32.mrf.mxu0
      %v2378 = vpop.f32.mrf.mxu0
      %v2379 = vadd.f32 0.0, %v2378
      %v2380 = vpop.f32.mrf.mxu0
      %2381 = vmatprep.mubr.bf16.mxu0 0
      %2382 = vmatmul.mubr.bf16.gmra.mxu0 %v1090
      %v2383 = vpop.f32.mrf.mxu0
      %v2384 = vadd.f32 0.0, %v2383
      %v2385 = vpop.f32.mrf.mxu0
      %v2386 = vpop.f32.mrf.mxu0
      %v2387 = vadd.f32 0.0, %v2386
      %v2388 = vpop.f32.mrf.mxu0
      %2389 = vmatprep.mubr.bf16.mxu0 0
      %2390 = vmatmul.mubr.bf16.gmra.mxu0 %v1093
      %v2391 = vpop.f32.mrf.mxu0
      %v2392 = vadd.f32 0.0, %v2391
      %v2393 = vpop.f32.mrf.mxu0
      %v2394 = vpop.f32.mrf.mxu0
      %v2395 = vadd.f32 0.0, %v2394
      %v2396 = vpop.f32.mrf.mxu0
      %2397 = vmatprep.mubr.bf16.mxu0 0
      %2398 = vmatmul.mubr.bf16.gmra.mxu0 %v2339
      %v2399 = vpop.f32.mrf.mxu0
      %v2400 = vadd.f32 0.0, %v2399
      %v2401 = vpop.f32.mrf.mxu0
      %v2402 = vpop.f32.mrf.mxu0
      %v2403 = vadd.f32 0.0, %v2402
      %v2404 = vpop.f32.mrf.mxu0
      %2405 = vdwg.mxu0
      %v2406 = vadd.f32 %v2291, %v2376
      %v2407 = vadd.f32 %v2292, %v2379
      %v2408 = vadd.f32 %v2293, %v2384
      %v2409 = vadd.f32 %v2294, %v2387
      %v2410 = vadd.f32 %v2295, %v2392
      %v2411 = vadd.f32 %v2296, %v2395
      %v2412 = vadd.f32 %v2297, %v2400
      %v2413 = vadd.f32 %v2298, %v2403
      %s2414 = scalar_lea.vmem %s1, 480
      %v2415 = vld [vmem:[%s2414] sm:$0xf]
      %v2416 = vld [vmem:[%s2414 + $0x4] sm:$0xf]
      %v2417 = vld [vmem:[%s2414 + $0x8] sm:$0xf]
      %v2418 = vld [vmem:[%s2414 + $0xc] sm:$0xf]
      %v2419 = vld [vmem:[%s2414 + $0x10] sm:$0xf]
      %v2420 = vld [vmem:[%s2414 + $0x14] sm:$0xf]
      %v2421 = vld [vmem:[%s2414 + $0x18] sm:$0xf]
      %v2422 = vld [vmem:[%s2414 + $0x1c] sm:$0xf]
      %v2424 = vunpack.c.l.b16 %v246
      %v2425 = vpack.c.b16 %v2424, %v1827
      %v2434 = vunpack.c.l.b16 %v2415
      %v2435 = vunpack.c.l.b16 %v2416
      %v2436 = vunpack.c.l.b16 %v2417
      %v2437 = vunpack.c.l.b16 %v2418
      %v2438 = vunpack.c.l.b16 %v2419
      %v2439 = vunpack.c.l.b16 %v2420
      %v2440 = vunpack.c.l.b16 %v2421
      %v2441 = vunpack.c.l.b16 %v2422
      %v2442 = vpack.c.b16 %v2435, %v2434
      %v2443 = vpack.c.b16 %v2437, %v2436
      %v2444 = vpack.c.b16 %v2439, %v2438
      %v2445 = vpack.c.b16 %v2441, %v2440
      %v2451 = vsel %vm418, %v2425, 0
      %2453 = vmatprep.subr.bf16.mxu0 0
      %2454 = vmatpush1.bf16.msra.mxu0 0
      %2455 = vmatprep.subr.bf16.mxu0 0
      %2456 = vmatpush1.bf16.msra.mxu0 0
      %2457 = vmatprep.subr.bf16.mxu0 0
      %2458 = vmatpush1.bf16.msra.mxu0 0
      %2459 = vmatprep.subr.bf16.mxu0 0
      %2460 = vmatpush1.bf16.msra.mxu0 0
      %2461 = vmatprep.subr.bf16.mxu0 0
      %2462 = vmatpush1.bf16.msra.mxu0 %v2445
      %2463 = vmatprep.subr.bf16.mxu0 0
      %2464 = vmatpush1.bf16.msra.mxu0 %v2444
      %2465 = vmatprep.subr.bf16.mxu0 0
      %2466 = vmatpush1.bf16.msra.mxu0 %v2443
      %2467 = vmatprep.subr.bf16.mxu0 0
      %2468 = vmatpush1.bf16.msra.mxu0 %v2442
      %2469 = vmatprep.subr.bf16.mxu0 0
      %2470 = vmatpush2.bf16.msra.mxu0 0
      %2471 = vmatprep.subr.bf16.mxu0 0
      %2472 = vmatpush2.bf16.msra.mxu0 0
      %2473 = vmatprep.subr.bf16.mxu0 0
      %2474 = vmatpush2.bf16.msra.mxu0 0
      %2475 = vmatprep.subr.bf16.mxu0 0
      %2476 = vmatpush2.bf16.msra.mxu0 0
      %2477 = vmatprep.subr.bf16.mxu0 0
      %2478 = vmatpush2.bf16.msra.mxu0 0
      %2479 = vmatprep.subr.bf16.mxu0 0
      %2480 = vmatpush2.bf16.msra.mxu0 0
      %2481 = vmatprep.subr.bf16.mxu0 0
      %2482 = vmatpush2.bf16.msra.mxu0 0
      %2483 = vmatprep.subr.bf16.mxu0 0
      %2484 = vmatpush2.bf16.msra.mxu0 0
      %2485 = vmatprep.mubr.bf16.mxu0 0
      %2486 = vmatmul.mubr.bf16.gmra.mxu0 %v1211
      %v2487 = vpop.f32.mrf.mxu0
      %v2488 = vadd.f32 0.0, %v2487
      %v2489 = vpop.f32.mrf.mxu0
      %v2490 = vpop.f32.mrf.mxu0
      %v2491 = vadd.f32 0.0, %v2490
      %v2492 = vpop.f32.mrf.mxu0
      %2493 = vmatprep.mubr.bf16.mxu0 0
      %2494 = vmatmul.mubr.bf16.gmra.mxu0 %v1214
      %v2495 = vpop.f32.mrf.mxu0
      %v2496 = vadd.f32 0.0, %v2495
      %v2497 = vpop.f32.mrf.mxu0
      %v2498 = vpop.f32.mrf.mxu0
      %v2499 = vadd.f32 0.0, %v2498
      %v2500 = vpop.f32.mrf.mxu0
      %2501 = vmatprep.mubr.bf16.mxu0 0
      %2502 = vmatmul.mubr.bf16.gmra.mxu0 %v1217
      %v2503 = vpop.f32.mrf.mxu0
      %v2504 = vadd.f32 0.0, %v2503
      %v2505 = vpop.f32.mrf.mxu0
      %v2506 = vpop.f32.mrf.mxu0
      %v2507 = vadd.f32 0.0, %v2506
      %v2508 = vpop.f32.mrf.mxu0
      %2509 = vmatprep.mubr.bf16.mxu0 0
      %2510 = vmatmul.mubr.bf16.gmra.mxu0 %v2451
      %v2511 = vpop.f32.mrf.mxu0
      %v2512 = vadd.f32 0.0, %v2511
      %v2513 = vpop.f32.mrf.mxu0
      %v2514 = vpop.f32.mrf.mxu0
      %v2515 = vadd.f32 0.0, %v2514
      %v2516 = vpop.f32.mrf.mxu0
      %2517 = vdwg.mxu0
      %v2518 = vadd.f32 %v2406, %v2488
      %v2519 = vadd.f32 %v2407, %v2491
      %v2520 = vadd.f32 %v2408, %v2496
      %v2521 = vadd.f32 %v2409, %v2499
      %v2522 = vadd.f32 %v2410, %v2504
      %v2523 = vadd.f32 %v2411, %v2507
      %v2524 = vadd.f32 %v2412, %v2512
      %v2525 = vadd.f32 %v2413, %v2515
      %v2527 = vshrl.u32 %v246, 16
      %v2529 = vrot.slane %v2527, 4
      %v2530 = vshll.u32 %v246, 16
      %v2532 = vrot.slane %v2530, 5
      %v2533 = vor.u32 %v2529, %v2532
      %v2534 = vrot.slane %v2533, 4
      %v2536 = vshll.u32 %v247, 16
      %v2538 = vrot.slane %v2536, 5
      %v2539 = vsel %vm260, %v2534, %v2538
      %s2540 = scalar_lea.vmem %s1, 512
      %v2541 = vld [vmem:[%s2540] sm:$0xf]
      %v2542 = vld [vmem:[%s2540 + $0x4] sm:$0xf]
      %v2543 = vld [vmem:[%s2540 + $0x8] sm:$0xf]
      %v2544 = vld [vmem:[%s2540 + $0xc] sm:$0xf]
      %v2545 = vld [vmem:[%s2540 + $0x10] sm:$0xf]
      %v2546 = vld [vmem:[%s2540 + $0x14] sm:$0xf]
      %v2547 = vld [vmem:[%s2540 + $0x18] sm:$0xf]
      %v2548 = vld [vmem:[%s2540 + $0x1c] sm:$0xf]
      %v2549 = vunpack.c.l.b16 %v2539
      %v2550 = vpack.c.b16 %v2549, %v1952
      %v2559 = vunpack.c.l.b16 %v2541
      %v2560 = vunpack.c.l.b16 %v2542
      %v2561 = vunpack.c.l.b16 %v2543
      %v2562 = vunpack.c.l.b16 %v2544
      %v2563 = vunpack.c.l.b16 %v2545
      %v2564 = vunpack.c.l.b16 %v2546
      %v2565 = vunpack.c.l.b16 %v2547
      %v2566 = vunpack.c.l.b16 %v2548
      %v2567 = vpack.c.b16 %v2560, %v2559
      %v2568 = vpack.c.b16 %v2562, %v2561
      %v2569 = vpack.c.b16 %v2564, %v2563
      %v2570 = vpack.c.b16 %v2566, %v2565
      %v2576 = vsel %vm418, %v2550, 0
      %2578 = vmatprep.subr.bf16.mxu0 0
      %2579 = vmatpush1.bf16.msra.mxu0 0
      %2580 = vmatprep.subr.bf16.mxu0 0
      %2581 = vmatpush1.bf16.msra.mxu0 0
      %2582 = vmatprep.subr.bf16.mxu0 0
      %2583 = vmatpush1.bf16.msra.mxu0 0
      %2584 = vmatprep.subr.bf16.mxu0 0
      %2585 = vmatpush1.bf16.msra.mxu0 0
      %2586 = vmatprep.subr.bf16.mxu0 0
      %2587 = vmatpush1.bf16.msra.mxu0 %v2570
      %2588 = vmatprep.subr.bf16.mxu0 0
      %2589 = vmatpush1.bf16.msra.mxu0 %v2569
      %2590 = vmatprep.subr.bf16.mxu0 0
      %2591 = vmatpush1.bf16.msra.mxu0 %v2568
      %2592 = vmatprep.subr.bf16.mxu0 0
      %2593 = vmatpush1.bf16.msra.mxu0 %v2567
      %2594 = vmatprep.subr.bf16.mxu0 0
      %2595 = vmatpush2.bf16.msra.mxu0 0
      %2596 = vmatprep.subr.bf16.mxu0 0
      %2597 = vmatpush2.bf16.msra.mxu0 0
      %2598 = vmatprep.subr.bf16.mxu0 0
      %2599 = vmatpush2.bf16.msra.mxu0 0
      %2600 = vmatprep.subr.bf16.mxu0 0
      %2601 = vmatpush2.bf16.msra.mxu0 0
      %2602 = vmatprep.subr.bf16.mxu0 0
      %2603 = vmatpush2.bf16.msra.mxu0 0
      %2604 = vmatprep.subr.bf16.mxu0 0
      %2605 = vmatpush2.bf16.msra.mxu0 0
      %2606 = vmatprep.subr.bf16.mxu0 0
      %2607 = vmatpush2.bf16.msra.mxu0 0
      %2608 = vmatprep.subr.bf16.mxu0 0
      %2609 = vmatpush2.bf16.msra.mxu0 0
      %2610 = vmatprep.mubr.bf16.mxu0 0
      %2611 = vmatmul.mubr.bf16.gmra.mxu0 %v1348
      %v2612 = vpop.f32.mrf.mxu0
      %v2613 = vadd.f32 0.0, %v2612
      %v2614 = vpop.f32.mrf.mxu0
      %v2615 = vpop.f32.mrf.mxu0
      %v2616 = vadd.f32 0.0, %v2615
      %v2617 = vpop.f32.mrf.mxu0
      %2618 = vmatprep.mubr.bf16.mxu0 0
      %2619 = vmatmul.mubr.bf16.gmra.mxu0 %v1351
      %v2620 = vpop.f32.mrf.mxu0
      %v2621 = vadd.f32 0.0, %v2620
      %v2622 = vpop.f32.mrf.mxu0
      %v2623 = vpop.f32.mrf.mxu0
      %v2624 = vadd.f32 0.0, %v2623
      %v2625 = vpop.f32.mrf.mxu0
      %2626 = vmatprep.mubr.bf16.mxu0 0
      %2627 = vmatmul.mubr.bf16.gmra.mxu0 %v1354
      %v2628 = vpop.f32.mrf.mxu0
      %v2629 = vadd.f32 0.0, %v2628
      %v2630 = vpop.f32.mrf.mxu0
      %v2631 = vpop.f32.mrf.mxu0
      %v2632 = vadd.f32 0.0, %v2631
      %v2633 = vpop.f32.mrf.mxu0
      %2634 = vmatprep.mubr.bf16.mxu0 0
      %2635 = vmatmul.mubr.bf16.gmra.mxu0 %v2576
      %v2636 = vpop.f32.mrf.mxu0
      %v2637 = vadd.f32 0.0, %v2636
      %v2638 = vpop.f32.mrf.mxu0
      %v2639 = vpop.f32.mrf.mxu0
      %v2640 = vadd.f32 0.0, %v2639
      %v2641 = vpop.f32.mrf.mxu0
      %2642 = vdwg.mxu0
      %v2643 = vadd.f32 %v2518, %v2613
      %v2644 = vadd.f32 %v2519, %v2616
      %v2645 = vadd.f32 %v2520, %v2621
      %v2646 = vadd.f32 %v2521, %v2624
      %v2647 = vadd.f32 %v2522, %v2629
      %v2648 = vadd.f32 %v2523, %v2632
      %v2649 = vadd.f32 %v2524, %v2637
      %v2650 = vadd.f32 %v2525, %v2640
      %v2652 = vrot.slane %v246, 5
      %v2653 = vrot.slane %v2652, 4
      %v2654 = vrot.slane %v247, 5
      %v2655 = vsel %vm627, %v2653, %v2654
      %s2656 = scalar_lea.vmem %s1, 544
      %v2657 = vld [vmem:[%s2656] sm:$0xf]
      %v2658 = vld [vmem:[%s2656 + $0x4] sm:$0xf]
      %v2659 = vld [vmem:[%s2656 + $0x8] sm:$0xf]
      %v2660 = vld [vmem:[%s2656 + $0xc] sm:$0xf]
      %v2661 = vld [vmem:[%s2656 + $0x10] sm:$0xf]
      %v2662 = vld [vmem:[%s2656 + $0x14] sm:$0xf]
      %v2663 = vld [vmem:[%s2656 + $0x18] sm:$0xf]
      %v2664 = vld [vmem:[%s2656 + $0x1c] sm:$0xf]
      %v2665 = vunpack.c.l.b16 %v2655
      %v2666 = vpack.c.b16 %v2665, %v2076
      %v2675 = vunpack.c.l.b16 %v2657
      %v2676 = vunpack.c.l.b16 %v2658
      %v2677 = vunpack.c.l.b16 %v2659
      %v2678 = vunpack.c.l.b16 %v2660
      %v2679 = vunpack.c.l.b16 %v2661
      %v2680 = vunpack.c.l.b16 %v2662
      %v2681 = vunpack.c.l.b16 %v2663
      %v2682 = vunpack.c.l.b16 %v2664
      %v2683 = vpack.c.b16 %v2676, %v2675
      %v2684 = vpack.c.b16 %v2678, %v2677
      %v2685 = vpack.c.b16 %v2680, %v2679
      %v2686 = vpack.c.b16 %v2682, %v2681
      %v2692 = vsel %vm418, %v2666, 0
      %2694 = vmatprep.subr.bf16.mxu0 0
      %2695 = vmatpush1.bf16.msra.mxu0 0
      %2696 = vmatprep.subr.bf16.mxu0 0
      %2697 = vmatpush1.bf16.msra.mxu0 0
      %2698 = vmatprep.subr.bf16.mxu0 0
      %2699 = vmatpush1.bf16.msra.mxu0 0
      %2700 = vmatprep.subr.bf16.mxu0 0
      %2701 = vmatpush1.bf16.msra.mxu0 0
      %2702 = vmatprep.subr.bf16.mxu0 0
      %2703 = vmatpush1.bf16.msra.mxu0 %v2686
      %2704 = vmatprep.subr.bf16.mxu0 0
      %2705 = vmatpush1.bf16.msra.mxu0 %v2685
      %2706 = vmatprep.subr.bf16.mxu0 0
      %2707 = vmatpush1.bf16.msra.mxu0 %v2684
      %2708 = vmatprep.subr.bf16.mxu0 0
      %2709 = vmatpush1.bf16.msra.mxu0 %v2683
      %2710 = vmatprep.subr.bf16.mxu0 0
      %2711 = vmatpush2.bf16.msra.mxu0 0
      %2712 = vmatprep.subr.bf16.mxu0 0
      %2713 = vmatpush2.bf16.msra.mxu0 0
      %2714 = vmatprep.subr.bf16.mxu0 0
      %2715 = vmatpush2.bf16.msra.mxu0 0
      %2716 = vmatprep.subr.bf16.mxu0 0
      %2717 = vmatpush2.bf16.msra.mxu0 0
      %2718 = vmatprep.subr.bf16.mxu0 0
      %2719 = vmatpush2.bf16.msra.mxu0 0
      %2720 = vmatprep.subr.bf16.mxu0 0
      %2721 = vmatpush2.bf16.msra.mxu0 0
      %2722 = vmatprep.subr.bf16.mxu0 0
      %2723 = vmatpush2.bf16.msra.mxu0 0
      %2724 = vmatprep.subr.bf16.mxu0 0
      %2725 = vmatpush2.bf16.msra.mxu0 0
      %2726 = vmatprep.mubr.bf16.mxu0 0
      %2727 = vmatmul.mubr.bf16.gmra.mxu0 %v1476
      %v2728 = vpop.f32.mrf.mxu0
      %v2729 = vadd.f32 0.0, %v2728
      %v2730 = vpop.f32.mrf.mxu0
      %v2731 = vpop.f32.mrf.mxu0
      %v2732 = vadd.f32 0.0, %v2731
      %v2733 = vpop.f32.mrf.mxu0
      %2734 = vmatprep.mubr.bf16.mxu0 0
      %2735 = vmatmul.mubr.bf16.gmra.mxu0 %v1479
      %v2736 = vpop.f32.mrf.mxu0
      %v2737 = vadd.f32 0.0, %v2736
      %v2738 = vpop.f32.mrf.mxu0
      %v2739 = vpop.f32.mrf.mxu0
      %v2740 = vadd.f32 0.0, %v2739
      %v2741 = vpop.f32.mrf.mxu0
      %2742 = vmatprep.mubr.bf16.mxu0 0
      %2743 = vmatmul.mubr.bf16.gmra.mxu0 %v1482
      %v2744 = vpop.f32.mrf.mxu0
      %v2745 = vadd.f32 0.0, %v2744
      %v2746 = vpop.f32.mrf.mxu0
      %v2747 = vpop.f32.mrf.mxu0
      %v2748 = vadd.f32 0.0, %v2747
      %v2749 = vpop.f32.mrf.mxu0
      %2750 = vmatprep.mubr.bf16.mxu0 0
      %2751 = vmatmul.mubr.bf16.gmra.mxu0 %v2692
      %v2752 = vpop.f32.mrf.mxu0
      %v2753 = vadd.f32 0.0, %v2752
      %v2754 = vpop.f32.mrf.mxu0
      %v2755 = vpop.f32.mrf.mxu0
      %v2756 = vadd.f32 0.0, %v2755
      %v2757 = vpop.f32.mrf.mxu0
      %2758 = vdwg.mxu0
      %v2759 = vadd.f32 %v2643, %v2729
      %v2760 = vadd.f32 %v2644, %v2732
      %v2761 = vadd.f32 %v2645, %v2737
      %v2762 = vadd.f32 %v2646, %v2740
      %v2763 = vadd.f32 %v2647, %v2745
      %v2764 = vadd.f32 %v2648, %v2748
      %v2765 = vadd.f32 %v2649, %v2753
      %v2766 = vadd.f32 %v2650, %v2756
      %v2767 = vrot.slane %v2527, 5
      %v2768 = vrot.slane %v2530, 6
      %v2769 = vor.u32 %v2767, %v2768
      %v2770 = vrot.slane %v2769, 4
      %v2771 = vshrl.u32 %v247, 16
      %v2773 = vrot.slane %v2771, 5
      %v2774 = vrot.slane %v2536, 6
      %v2775 = vor.u32 %v2773, %v2774
      %v2776 = vsel %vm792, %v2770, %v2775
      %s2777 = scalar_lea.vmem %s1, 576
      %v2778 = vld [vmem:[%s2777] sm:$0xf]
      %v2779 = vld [vmem:[%s2777 + $0x4] sm:$0xf]
      %v2780 = vld [vmem:[%s2777 + $0x8] sm:$0xf]
      %v2781 = vld [vmem:[%s2777 + $0xc] sm:$0xf]
      %v2782 = vld [vmem:[%s2777 + $0x10] sm:$0xf]
      %v2783 = vld [vmem:[%s2777 + $0x14] sm:$0xf]
      %v2784 = vld [vmem:[%s2777 + $0x18] sm:$0xf]
      %v2785 = vld [vmem:[%s2777 + $0x1c] sm:$0xf]
      %v2786 = vunpack.c.l.b16 %v2776
      %v2787 = vpack.c.b16 %v2786, %v2197
      %v2796 = vunpack.c.l.b16 %v2778
      %v2797 = vunpack.c.l.b16 %v2779
      %v2798 = vunpack.c.l.b16 %v2780
      %v2799 = vunpack.c.l.b16 %v2781
      %v2800 = vunpack.c.l.b16 %v2782
      %v2801 = vunpack.c.l.b16 %v2783
      %v2802 = vunpack.c.l.b16 %v2784
      %v2803 = vunpack.c.l.b16 %v2785
      %v2804 = vpack.c.b16 %v2797, %v2796
      %v2805 = vpack.c.b16 %v2799, %v2798
      %v2806 = vpack.c.b16 %v2801, %v2800
      %v2807 = vpack.c.b16 %v2803, %v2802
      %v2813 = vsel %vm418, %v2787, 0
      %2815 = vmatprep.subr.bf16.mxu0 0
      %2816 = vmatpush1.bf16.msra.mxu0 0
      %2817 = vmatprep.subr.bf16.mxu0 0
      %2818 = vmatpush1.bf16.msra.mxu0 0
      %2819 = vmatprep.subr.bf16.mxu0 0
      %2820 = vmatpush1.bf16.msra.mxu0 0
      %2821 = vmatprep.subr.bf16.mxu0 0
      %2822 = vmatpush1.bf16.msra.mxu0 0
      %2823 = vmatprep.subr.bf16.mxu0 0
      %2824 = vmatpush1.bf16.msra.mxu0 %v2807
      %2825 = vmatprep.subr.bf16.mxu0 0
      %2826 = vmatpush1.bf16.msra.mxu0 %v2806
      %2827 = vmatprep.subr.bf16.mxu0 0
      %2828 = vmatpush1.bf16.msra.mxu0 %v2805
      %2829 = vmatprep.subr.bf16.mxu0 0
      %2830 = vmatpush1.bf16.msra.mxu0 %v2804
      %2831 = vmatprep.subr.bf16.mxu0 0
      %2832 = vmatpush2.bf16.msra.mxu0 0
      %2833 = vmatprep.subr.bf16.mxu0 0
      %2834 = vmatpush2.bf16.msra.mxu0 0
      %2835 = vmatprep.subr.bf16.mxu0 0
      %2836 = vmatpush2.bf16.msra.mxu0 0
      %2837 = vmatprep.subr.bf16.mxu0 0
      %2838 = vmatpush2.bf16.msra.mxu0 0
      %2839 = vmatprep.subr.bf16.mxu0 0
      %2840 = vmatpush2.bf16.msra.mxu0 0
      %2841 = vmatprep.subr.bf16.mxu0 0
      %2842 = vmatpush2.bf16.msra.mxu0 0
      %2843 = vmatprep.subr.bf16.mxu0 0
      %2844 = vmatpush2.bf16.msra.mxu0 0
      %2845 = vmatprep.subr.bf16.mxu0 0
      %2846 = vmatpush2.bf16.msra.mxu0 0
      %2847 = vmatprep.mubr.bf16.mxu0 0
      %2848 = vmatmul.mubr.bf16.gmra.mxu0 %v1609
      %v2849 = vpop.f32.mrf.mxu0
      %v2850 = vadd.f32 0.0, %v2849
      %v2851 = vpop.f32.mrf.mxu0
      %v2852 = vpop.f32.mrf.mxu0
      %v2853 = vadd.f32 0.0, %v2852
      %v2854 = vpop.f32.mrf.mxu0
      %2855 = vmatprep.mubr.bf16.mxu0 0
      %2856 = vmatmul.mubr.bf16.gmra.mxu0 %v1612
      %v2857 = vpop.f32.mrf.mxu0
      %v2858 = vadd.f32 0.0, %v2857
      %v2859 = vpop.f32.mrf.mxu0
      %v2860 = vpop.f32.mrf.mxu0
      %v2861 = vadd.f32 0.0, %v2860
      %v2862 = vpop.f32.mrf.mxu0
      %2863 = vmatprep.mubr.bf16.mxu0 0
      %2864 = vmatmul.mubr.bf16.gmra.mxu0 %v1615
      %v2865 = vpop.f32.mrf.mxu0
      %v2866 = vadd.f32 0.0, %v2865
      %v2867 = vpop.f32.mrf.mxu0
      %v2868 = vpop.f32.mrf.mxu0
      %v2869 = vadd.f32 0.0, %v2868
      %v2870 = vpop.f32.mrf.mxu0
      %2871 = vmatprep.mubr.bf16.mxu0 0
      %2872 = vmatmul.mubr.bf16.gmra.mxu0 %v2813
      %v2873 = vpop.f32.mrf.mxu0
      %v2874 = vadd.f32 0.0, %v2873
      %v2875 = vpop.f32.mrf.mxu0
      %v2876 = vpop.f32.mrf.mxu0
      %v2877 = vadd.f32 0.0, %v2876
      %v2878 = vpop.f32.mrf.mxu0
      %2879 = vdwg.mxu0
      %v2880 = vadd.f32 %v2759, %v2850
      %v2881 = vadd.f32 %v2760, %v2853
      %v2882 = vadd.f32 %v2761, %v2858
      %v2883 = vadd.f32 %v2762, %v2861
      %v2884 = vadd.f32 %v2763, %v2866
      %v2885 = vadd.f32 %v2764, %v2869
      %v2886 = vadd.f32 %v2765, %v2874
      %v2887 = vadd.f32 %v2766, %v2877
      %v2888 = vrot.slane %v246, 6
      %v2889 = vrot.slane %v2888, 4
      %v2890 = vrot.slane %v247, 6
      %v2891 = vsel %vm1005, %v2889, %v2890
      %s2892 = scalar_lea.vmem %s1, 608
      %v2893 = vld [vmem:[%s2892] sm:$0xf]
      %v2894 = vld [vmem:[%s2892 + $0x4] sm:$0xf]
      %v2895 = vld [vmem:[%s2892 + $0x8] sm:$0xf]
      %v2896 = vld [vmem:[%s2892 + $0xc] sm:$0xf]
      %v2897 = vld [vmem:[%s2892 + $0x10] sm:$0xf]
      %v2898 = vld [vmem:[%s2892 + $0x14] sm:$0xf]
      %v2899 = vld [vmem:[%s2892 + $0x18] sm:$0xf]
      %v2900 = vld [vmem:[%s2892 + $0x1c] sm:$0xf]
      %v2901 = vunpack.c.l.b16 %v2891
      %v2902 = vpack.c.b16 %v2901, %v2312
      %v2911 = vunpack.c.l.b16 %v2893
      %v2912 = vunpack.c.l.b16 %v2894
      %v2913 = vunpack.c.l.b16 %v2895
      %v2914 = vunpack.c.l.b16 %v2896
      %v2915 = vunpack.c.l.b16 %v2897
      %v2916 = vunpack.c.l.b16 %v2898
      %v2917 = vunpack.c.l.b16 %v2899
      %v2918 = vunpack.c.l.b16 %v2900
      %v2919 = vpack.c.b16 %v2912, %v2911
      %v2920 = vpack.c.b16 %v2914, %v2913
      %v2921 = vpack.c.b16 %v2916, %v2915
      %v2922 = vpack.c.b16 %v2918, %v2917
      %v2928 = vsel %vm418, %v2902, 0
      %2930 = vmatprep.subr.bf16.mxu0 0
      %2931 = vmatpush1.bf16.msra.mxu0 0
      %2932 = vmatprep.subr.bf16.mxu0 0
      %2933 = vmatpush1.bf16.msra.mxu0 0
      %2934 = vmatprep.subr.bf16.mxu0 0
      %2935 = vmatpush1.bf16.msra.mxu0 0
      %2936 = vmatprep.subr.bf16.mxu0 0
      %2937 = vmatpush1.bf16.msra.mxu0 0
      %2938 = vmatprep.subr.bf16.mxu0 0
      %2939 = vmatpush1.bf16.msra.mxu0 %v2922
      %2940 = vmatprep.subr.bf16.mxu0 0
      %2941 = vmatpush1.bf16.msra.mxu0 %v2921
      %2942 = vmatprep.subr.bf16.mxu0 0
      %2943 = vmatpush1.bf16.msra.mxu0 %v2920
      %2944 = vmatprep.subr.bf16.mxu0 0
      %2945 = vmatpush1.bf16.msra.mxu0 %v2919
      %2946 = vmatprep.subr.bf16.mxu0 0
      %2947 = vmatpush2.bf16.msra.mxu0 0
      %2948 = vmatprep.subr.bf16.mxu0 0
      %2949 = vmatpush2.bf16.msra.mxu0 0
      %2950 = vmatprep.subr.bf16.mxu0 0
      %2951 = vmatpush2.bf16.msra.mxu0 0
      %2952 = vmatprep.subr.bf16.mxu0 0
      %2953 = vmatpush2.bf16.msra.mxu0 0
      %2954 = vmatprep.subr.bf16.mxu0 0
      %2955 = vmatpush2.bf16.msra.mxu0 0
      %2956 = vmatprep.subr.bf16.mxu0 0
      %2957 = vmatpush2.bf16.msra.mxu0 0
      %2958 = vmatprep.subr.bf16.mxu0 0
      %2959 = vmatpush2.bf16.msra.mxu0 0
      %2960 = vmatprep.subr.bf16.mxu0 0
      %2961 = vmatpush2.bf16.msra.mxu0 0
      %2962 = vmatprep.mubr.bf16.mxu0 0
      %2963 = vmatmul.mubr.bf16.gmra.mxu0 %v1736
      %v2964 = vpop.f32.mrf.mxu0
      %v2965 = vadd.f32 0.0, %v2964
      %v2966 = vpop.f32.mrf.mxu0
      %v2967 = vpop.f32.mrf.mxu0
      %v2968 = vadd.f32 0.0, %v2967
      %v2969 = vpop.f32.mrf.mxu0
      %2970 = vmatprep.mubr.bf16.mxu0 0
      %2971 = vmatmul.mubr.bf16.gmra.mxu0 %v1739
      %v2972 = vpop.f32.mrf.mxu0
      %v2973 = vadd.f32 0.0, %v2972
      %v2974 = vpop.f32.mrf.mxu0
      %v2975 = vpop.f32.mrf.mxu0
      %v2976 = vadd.f32 0.0, %v2975
      %v2977 = vpop.f32.mrf.mxu0
      %2978 = vmatprep.mubr.bf16.mxu0 0
      %2979 = vmatmul.mubr.bf16.gmra.mxu0 %v1742
      %v2980 = vpop.f32.mrf.mxu0
      %v2981 = vadd.f32 0.0, %v2980
      %v2982 = vpop.f32.mrf.mxu0
      %v2983 = vpop.f32.mrf.mxu0
      %v2984 = vadd.f32 0.0, %v2983
      %v2985 = vpop.f32.mrf.mxu0
      %2986 = vmatprep.mubr.bf16.mxu0 0
      %2987 = vmatmul.mubr.bf16.gmra.mxu0 %v2928
      %v2988 = vpop.f32.mrf.mxu0
      %v2989 = vadd.f32 0.0, %v2988
      %v2990 = vpop.f32.mrf.mxu0
      %v2991 = vpop.f32.mrf.mxu0
      %v2992 = vadd.f32 0.0, %v2991
      %v2993 = vpop.f32.mrf.mxu0
      %2994 = vdwg.mxu0
      %v2995 = vadd.f32 %v2880, %v2965
      %v2996 = vadd.f32 %v2881, %v2968
      %v2997 = vadd.f32 %v2882, %v2973
      %v2998 = vadd.f32 %v2883, %v2976
      %v2999 = vadd.f32 %v2884, %v2981
      %v3000 = vadd.f32 %v2885, %v2984
      %v3001 = vadd.f32 %v2886, %v2989
      %v3002 = vadd.f32 %v2887, %v2992
      %s3003 = scalar_lea.vmem %s1, 640
      %v3004 = vld [vmem:[%s3003] sm:$0xf]
      %v3005 = vld [vmem:[%s3003 + $0x4] sm:$0xf]
      %v3006 = vld [vmem:[%s3003 + $0x8] sm:$0xf]
      %v3007 = vld [vmem:[%s3003 + $0xc] sm:$0xf]
      %v3008 = vld [vmem:[%s3003 + $0x10] sm:$0xf]
      %v3009 = vld [vmem:[%s3003 + $0x14] sm:$0xf]
      %v3010 = vld [vmem:[%s3003 + $0x18] sm:$0xf]
      %v3011 = vld [vmem:[%s3003 + $0x1c] sm:$0xf]
      %v3013 = vunpack.c.l.b16 %v248
      %v3014 = vpack.c.b16 %v3013, %v2424
      %v3023 = vunpack.c.l.b16 %v3004
      %v3024 = vunpack.c.l.b16 %v3005
      %v3025 = vunpack.c.l.b16 %v3006
      %v3026 = vunpack.c.l.b16 %v3007
      %v3027 = vunpack.c.l.b16 %v3008
      %v3028 = vunpack.c.l.b16 %v3009
      %v3029 = vunpack.c.l.b16 %v3010
      %v3030 = vunpack.c.l.b16 %v3011
      %v3031 = vpack.c.b16 %v3024, %v3023
      %v3032 = vpack.c.b16 %v3026, %v3025
      %v3033 = vpack.c.b16 %v3028, %v3027
      %v3034 = vpack.c.b16 %v3030, %v3029
      %v3040 = vsel %vm418, %v3014, 0
      %3042 = vmatprep.subr.bf16.mxu0 0
      %3043 = vmatpush1.bf16.msra.mxu0 0
      %3044 = vmatprep.subr.bf16.mxu0 0
      %3045 = vmatpush1.bf16.msra.mxu0 0
      %3046 = vmatprep.subr.bf16.mxu0 0
      %3047 = vmatpush1.bf16.msra.mxu0 0
      %3048 = vmatprep.subr.bf16.mxu0 0
      %3049 = vmatpush1.bf16.msra.mxu0 0
      %3050 = vmatprep.subr.bf16.mxu0 0
      %3051 = vmatpush1.bf16.msra.mxu0 %v3034
      %3052 = vmatprep.subr.bf16.mxu0 0
      %3053 = vmatpush1.bf16.msra.mxu0 %v3033
      %3054 = vmatprep.subr.bf16.mxu0 0
      %3055 = vmatpush1.bf16.msra.mxu0 %v3032
      %3056 = vmatprep.subr.bf16.mxu0 0
      %3057 = vmatpush1.bf16.msra.mxu0 %v3031
      %3058 = vmatprep.subr.bf16.mxu0 0
      %3059 = vmatpush2.bf16.msra.mxu0 0
      %3060 = vmatprep.subr.bf16.mxu0 0
      %3061 = vmatpush2.bf16.msra.mxu0 0
      %3062 = vmatprep.subr.bf16.mxu0 0
      %3063 = vmatpush2.bf16.msra.mxu0 0
      %3064 = vmatprep.subr.bf16.mxu0 0
      %3065 = vmatpush2.bf16.msra.mxu0 0
      %3066 = vmatprep.subr.bf16.mxu0 0
      %3067 = vmatpush2.bf16.msra.mxu0 0
      %3068 = vmatprep.subr.bf16.mxu0 0
      %3069 = vmatpush2.bf16.msra.mxu0 0
      %3070 = vmatprep.subr.bf16.mxu0 0
      %3071 = vmatpush2.bf16.msra.mxu0 0
      %3072 = vmatprep.subr.bf16.mxu0 0
      %3073 = vmatpush2.bf16.msra.mxu0 0
      %3074 = vmatprep.mubr.bf16.mxu0 0
      %3075 = vmatmul.mubr.bf16.gmra.mxu0 %v547
      %v3076 = vpop.f32.mrf.mxu0
      %v3077 = vadd.f32 0.0, %v3076
      %v3078 = vpop.f32.mrf.mxu0
      %v3079 = vpop.f32.mrf.mxu0
      %v3080 = vadd.f32 0.0, %v3079
      %v3081 = vpop.f32.mrf.mxu0
      %3082 = vmatprep.mubr.bf16.mxu0 0
      %3083 = vmatmul.mubr.bf16.gmra.mxu0 %v550
      %v3084 = vpop.f32.mrf.mxu0
      %v3085 = vadd.f32 0.0, %v3084
      %v3086 = vpop.f32.mrf.mxu0
      %v3087 = vpop.f32.mrf.mxu0
      %v3088 = vadd.f32 0.0, %v3087
      %v3089 = vpop.f32.mrf.mxu0
      %3090 = vmatprep.mubr.bf16.mxu0 0
      %3091 = vmatmul.mubr.bf16.gmra.mxu0 %v1854
      %v3092 = vpop.f32.mrf.mxu0
      %v3093 = vadd.f32 0.0, %v3092
      %v3094 = vpop.f32.mrf.mxu0
      %v3095 = vpop.f32.mrf.mxu0
      %v3096 = vadd.f32 0.0, %v3095
      %v3097 = vpop.f32.mrf.mxu0
      %3098 = vmatprep.mubr.bf16.mxu0 0
      %3099 = vmatmul.mubr.bf16.gmra.mxu0 %v3040
      %v3100 = vpop.f32.mrf.mxu0
      %v3101 = vadd.f32 0.0, %v3100
      %v3102 = vpop.f32.mrf.mxu0
      %v3103 = vpop.f32.mrf.mxu0
      %v3104 = vadd.f32 0.0, %v3103
      %v3105 = vpop.f32.mrf.mxu0
      %3106 = vdwg.mxu0
      %v3107 = vadd.f32 %v2995, %v3077
      %v3108 = vadd.f32 %v2996, %v3080
      %v3109 = vadd.f32 %v2997, %v3085
      %v3110 = vadd.f32 %v2998, %v3088
      %v3111 = vadd.f32 %v2999, %v3093
      %v3112 = vadd.f32 %v3000, %v3096
      %v3113 = vadd.f32 %v3001, %v3101
      %v3114 = vadd.f32 %v3002, %v3104
      %v3116 = vshrl.u32 %v248, 16
      %v3118 = vrot.slane %v3116, 4
      %v3119 = vshll.u32 %v248, 16
      %v3121 = vrot.slane %v3119, 5
      %v3122 = vor.u32 %v3118, %v3121
      %v3123 = vrot.slane %v3122, 4
      %v3125 = vshll.u32 %v249, 16
      %v3127 = vrot.slane %v3125, 5
      %v3128 = vsel %vm260, %v3123, %v3127
      %s3129 = scalar_lea.vmem %s1, 672
      %v3130 = vld [vmem:[%s3129] sm:$0xf]
      %v3131 = vld [vmem:[%s3129 + $0x4] sm:$0xf]
      %v3132 = vld [vmem:[%s3129 + $0x8] sm:$0xf]
      %v3133 = vld [vmem:[%s3129 + $0xc] sm:$0xf]
      %v3134 = vld [vmem:[%s3129 + $0x10] sm:$0xf]
      %v3135 = vld [vmem:[%s3129 + $0x14] sm:$0xf]
      %v3136 = vld [vmem:[%s3129 + $0x18] sm:$0xf]
      %v3137 = vld [vmem:[%s3129 + $0x1c] sm:$0xf]
      %v3138 = vunpack.c.l.b16 %v3128
      %v3139 = vpack.c.b16 %v3138, %v2549
      %v3148 = vunpack.c.l.b16 %v3130
      %v3149 = vunpack.c.l.b16 %v3131
      %v3150 = vunpack.c.l.b16 %v3132
      %v3151 = vunpack.c.l.b16 %v3133
      %v3152 = vunpack.c.l.b16 %v3134
      %v3153 = vunpack.c.l.b16 %v3135
      %v3154 = vunpack.c.l.b16 %v3136
      %v3155 = vunpack.c.l.b16 %v3137
      %v3156 = vpack.c.b16 %v3149, %v3148
      %v3157 = vpack.c.b16 %v3151, %v3150
      %v3158 = vpack.c.b16 %v3153, %v3152
      %v3159 = vpack.c.b16 %v3155, %v3154
      %v3165 = vsel %vm418, %v3139, 0
      %3167 = vmatprep.subr.bf16.mxu0 0
      %3168 = vmatpush1.bf16.msra.mxu0 0
      %3169 = vmatprep.subr.bf16.mxu0 0
      %3170 = vmatpush1.bf16.msra.mxu0 0
      %3171 = vmatprep.subr.bf16.mxu0 0
      %3172 = vmatpush1.bf16.msra.mxu0 0
      %3173 = vmatprep.subr.bf16.mxu0 0
      %3174 = vmatpush1.bf16.msra.mxu0 0
      %3175 = vmatprep.subr.bf16.mxu0 0
      %3176 = vmatpush1.bf16.msra.mxu0 %v3159
      %3177 = vmatprep.subr.bf16.mxu0 0
      %3178 = vmatpush1.bf16.msra.mxu0 %v3158
      %3179 = vmatprep.subr.bf16.mxu0 0
      %3180 = vmatpush1.bf16.msra.mxu0 %v3157
      %3181 = vmatprep.subr.bf16.mxu0 0
      %3182 = vmatpush1.bf16.msra.mxu0 %v3156
      %3183 = vmatprep.subr.bf16.mxu0 0
      %3184 = vmatpush2.bf16.msra.mxu0 0
      %3185 = vmatprep.subr.bf16.mxu0 0
      %3186 = vmatpush2.bf16.msra.mxu0 0
      %3187 = vmatprep.subr.bf16.mxu0 0
      %3188 = vmatpush2.bf16.msra.mxu0 0
      %3189 = vmatprep.subr.bf16.mxu0 0
      %3190 = vmatpush2.bf16.msra.mxu0 0
      %3191 = vmatprep.subr.bf16.mxu0 0
      %3192 = vmatpush2.bf16.msra.mxu0 0
      %3193 = vmatprep.subr.bf16.mxu0 0
      %3194 = vmatpush2.bf16.msra.mxu0 0
      %3195 = vmatprep.subr.bf16.mxu0 0
      %3196 = vmatpush2.bf16.msra.mxu0 0
      %3197 = vmatprep.subr.bf16.mxu0 0
      %3198 = vmatpush2.bf16.msra.mxu0 0
      %3199 = vmatprep.mubr.bf16.mxu0 0
      %3200 = vmatmul.mubr.bf16.gmra.mxu0 %v426
      %v3201 = vpop.f32.mrf.mxu0
      %v3202 = vadd.f32 0.0, %v3201
      %v3203 = vpop.f32.mrf.mxu0
      %v3204 = vpop.f32.mrf.mxu0
      %v3205 = vadd.f32 0.0, %v3204
      %v3206 = vpop.f32.mrf.mxu0
      %3207 = vmatprep.mubr.bf16.mxu0 0
      %3208 = vmatmul.mubr.bf16.gmra.mxu0 %v429
      %v3209 = vpop.f32.mrf.mxu0
      %v3210 = vadd.f32 0.0, %v3209
      %v3211 = vpop.f32.mrf.mxu0
      %v3212 = vpop.f32.mrf.mxu0
      %v3213 = vadd.f32 0.0, %v3212
      %v3214 = vpop.f32.mrf.mxu0
      %3215 = vmatprep.mubr.bf16.mxu0 0
      %3216 = vmatmul.mubr.bf16.gmra.mxu0 %v1979
      %v3217 = vpop.f32.mrf.mxu0
      %v3218 = vadd.f32 0.0, %v3217
      %v3219 = vpop.f32.mrf.mxu0
      %v3220 = vpop.f32.mrf.mxu0
      %v3221 = vadd.f32 0.0, %v3220
      %v3222 = vpop.f32.mrf.mxu0
      %3223 = vmatprep.mubr.bf16.mxu0 0
      %3224 = vmatmul.mubr.bf16.gmra.mxu0 %v3165
      %v3225 = vpop.f32.mrf.mxu0
      %v3226 = vadd.f32 0.0, %v3225
      %v3227 = vpop.f32.mrf.mxu0
      %v3228 = vpop.f32.mrf.mxu0
      %v3229 = vadd.f32 0.0, %v3228
      %v3230 = vpop.f32.mrf.mxu0
      %3231 = vdwg.mxu0
      %v3232 = vadd.f32 %v3107, %v3202
      %v3233 = vadd.f32 %v3108, %v3205
      %v3234 = vadd.f32 %v3109, %v3210
      %v3235 = vadd.f32 %v3110, %v3213
      %v3236 = vadd.f32 %v3111, %v3218
      %v3237 = vadd.f32 %v3112, %v3221
      %v3238 = vadd.f32 %v3113, %v3226
      %v3239 = vadd.f32 %v3114, %v3229
      %v3241 = vrot.slane %v248, 5
      %v3242 = vrot.slane %v3241, 4
      %v3243 = vrot.slane %v249, 5
      %v3244 = vsel %vm627, %v3242, %v3243
      %s3245 = scalar_lea.vmem %s1, 704
      %v3246 = vld [vmem:[%s3245] sm:$0xf]
      %v3247 = vld [vmem:[%s3245 + $0x4] sm:$0xf]
      %v3248 = vld [vmem:[%s3245 + $0x8] sm:$0xf]
      %v3249 = vld [vmem:[%s3245 + $0xc] sm:$0xf]
      %v3250 = vld [vmem:[%s3245 + $0x10] sm:$0xf]
      %v3251 = vld [vmem:[%s3245 + $0x14] sm:$0xf]
      %v3252 = vld [vmem:[%s3245 + $0x18] sm:$0xf]
      %v3253 = vld [vmem:[%s3245 + $0x1c] sm:$0xf]
      %v3254 = vunpack.c.l.b16 %v3244
      %v3255 = vpack.c.b16 %v3254, %v2665
      %v3264 = vunpack.c.l.b16 %v3246
      %v3265 = vunpack.c.l.b16 %v3247
      %v3266 = vunpack.c.l.b16 %v3248
      %v3267 = vunpack.c.l.b16 %v3249
      %v3268 = vunpack.c.l.b16 %v3250
      %v3269 = vunpack.c.l.b16 %v3251
      %v3270 = vunpack.c.l.b16 %v3252
      %v3271 = vunpack.c.l.b16 %v3253
      %v3272 = vpack.c.b16 %v3265, %v3264
      %v3273 = vpack.c.b16 %v3267, %v3266
      %v3274 = vpack.c.b16 %v3269, %v3268
      %v3275 = vpack.c.b16 %v3271, %v3270
      %v3281 = vsel %vm418, %v3255, 0
      %3283 = vmatprep.subr.bf16.mxu0 0
      %3284 = vmatpush1.bf16.msra.mxu0 0
      %3285 = vmatprep.subr.bf16.mxu0 0
      %3286 = vmatpush1.bf16.msra.mxu0 0
      %3287 = vmatprep.subr.bf16.mxu0 0
      %3288 = vmatpush1.bf16.msra.mxu0 0
      %3289 = vmatprep.subr.bf16.mxu0 0
      %3290 = vmatpush1.bf16.msra.mxu0 0
      %3291 = vmatprep.subr.bf16.mxu0 0
      %3292 = vmatpush1.bf16.msra.mxu0 %v3275
      %3293 = vmatprep.subr.bf16.mxu0 0
      %3294 = vmatpush1.bf16.msra.mxu0 %v3274
      %3295 = vmatprep.subr.bf16.mxu0 0
      %3296 = vmatpush1.bf16.msra.mxu0 %v3273
      %3297 = vmatprep.subr.bf16.mxu0 0
      %3298 = vmatpush1.bf16.msra.mxu0 %v3272
      %3299 = vmatprep.subr.bf16.mxu0 0
      %3300 = vmatpush2.bf16.msra.mxu0 0
      %3301 = vmatprep.subr.bf16.mxu0 0
      %3302 = vmatpush2.bf16.msra.mxu0 0
      %3303 = vmatprep.subr.bf16.mxu0 0
      %3304 = vmatpush2.bf16.msra.mxu0 0
      %3305 = vmatprep.subr.bf16.mxu0 0
      %3306 = vmatpush2.bf16.msra.mxu0 0
      %3307 = vmatprep.subr.bf16.mxu0 0
      %3308 = vmatpush2.bf16.msra.mxu0 0
      %3309 = vmatprep.subr.bf16.mxu0 0
      %3310 = vmatpush2.bf16.msra.mxu0 0
      %3311 = vmatprep.subr.bf16.mxu0 0
      %3312 = vmatpush2.bf16.msra.mxu0 0
      %3313 = vmatprep.subr.bf16.mxu0 0
      %3314 = vmatpush2.bf16.msra.mxu0 0
      %3315 = vmatprep.mubr.bf16.mxu0 0
      %3316 = vmatmul.mubr.bf16.gmra.mxu0 %v712
      %v3317 = vpop.f32.mrf.mxu0
      %v3318 = vadd.f32 0.0, %v3317
      %v3319 = vpop.f32.mrf.mxu0
      %v3320 = vpop.f32.mrf.mxu0
      %v3321 = vadd.f32 0.0, %v3320
      %v3322 = vpop.f32.mrf.mxu0
      %3323 = vmatprep.mubr.bf16.mxu0 0
      %3324 = vmatmul.mubr.bf16.gmra.mxu0 %v715
      %v3325 = vpop.f32.mrf.mxu0
      %v3326 = vadd.f32 0.0, %v3325
      %v3327 = vpop.f32.mrf.mxu0
      %v3328 = vpop.f32.mrf.mxu0
      %v3329 = vadd.f32 0.0, %v3328
      %v3330 = vpop.f32.mrf.mxu0
      %3331 = vmatprep.mubr.bf16.mxu0 0
      %3332 = vmatmul.mubr.bf16.gmra.mxu0 %v2103
      %v3333 = vpop.f32.mrf.mxu0
      %v3334 = vadd.f32 0.0, %v3333
      %v3335 = vpop.f32.mrf.mxu0
      %v3336 = vpop.f32.mrf.mxu0
      %v3337 = vadd.f32 0.0, %v3336
      %v3338 = vpop.f32.mrf.mxu0
      %3339 = vmatprep.mubr.bf16.mxu0 0
      %3340 = vmatmul.mubr.bf16.gmra.mxu0 %v3281
      %v3341 = vpop.f32.mrf.mxu0
      %v3342 = vadd.f32 0.0, %v3341
      %v3343 = vpop.f32.mrf.mxu0
      %v3344 = vpop.f32.mrf.mxu0
      %v3345 = vadd.f32 0.0, %v3344
      %v3346 = vpop.f32.mrf.mxu0
      %3347 = vdwg.mxu0
      %v3348 = vadd.f32 %v3232, %v3318
      %v3349 = vadd.f32 %v3233, %v3321
      %v3350 = vadd.f32 %v3234, %v3326
      %v3351 = vadd.f32 %v3235, %v3329
      %v3352 = vadd.f32 %v3236, %v3334
      %v3353 = vadd.f32 %v3237, %v3337
      %v3354 = vadd.f32 %v3238, %v3342
      %v3355 = vadd.f32 %v3239, %v3345
      %v3356 = vrot.slane %v3116, 5
      %v3357 = vrot.slane %v3119, 6
      %v3358 = vor.u32 %v3356, %v3357
      %v3359 = vrot.slane %v3358, 4
      %v3360 = vshrl.u32 %v249, 16
      %v3362 = vrot.slane %v3360, 5
      %v3363 = vrot.slane %v3125, 6
      %v3364 = vor.u32 %v3362, %v3363
      %v3365 = vsel %vm792, %v3359, %v3364
      %s3366 = scalar_lea.vmem %s1, 736
      %v3367 = vld [vmem:[%s3366] sm:$0xf]
      %v3368 = vld [vmem:[%s3366 + $0x4] sm:$0xf]
      %v3369 = vld [vmem:[%s3366 + $0x8] sm:$0xf]
      %v3370 = vld [vmem:[%s3366 + $0xc] sm:$0xf]
      %v3371 = vld [vmem:[%s3366 + $0x10] sm:$0xf]
      %v3372 = vld [vmem:[%s3366 + $0x14] sm:$0xf]
      %v3373 = vld [vmem:[%s3366 + $0x18] sm:$0xf]
      %v3374 = vld [vmem:[%s3366 + $0x1c] sm:$0xf]
      %v3375 = vunpack.c.l.b16 %v3365
      %v3376 = vpack.c.b16 %v3375, %v2786
      %v3385 = vunpack.c.l.b16 %v3367
      %v3386 = vunpack.c.l.b16 %v3368
      %v3387 = vunpack.c.l.b16 %v3369
      %v3388 = vunpack.c.l.b16 %v3370
      %v3389 = vunpack.c.l.b16 %v3371
      %v3390 = vunpack.c.l.b16 %v3372
      %v3391 = vunpack.c.l.b16 %v3373
      %v3392 = vunpack.c.l.b16 %v3374
      %v3393 = vpack.c.b16 %v3386, %v3385
      %v3394 = vpack.c.b16 %v3388, %v3387
      %v3395 = vpack.c.b16 %v3390, %v3389
      %v3396 = vpack.c.b16 %v3392, %v3391
      %v3402 = vsel %vm418, %v3376, 0
      %3404 = vmatprep.subr.bf16.mxu0 0
      %3405 = vmatpush1.bf16.msra.mxu0 0
      %3406 = vmatprep.subr.bf16.mxu0 0
      %3407 = vmatpush1.bf16.msra.mxu0 0
      %3408 = vmatprep.subr.bf16.mxu0 0
      %3409 = vmatpush1.bf16.msra.mxu0 0
      %3410 = vmatprep.subr.bf16.mxu0 0
      %3411 = vmatpush1.bf16.msra.mxu0 0
      %3412 = vmatprep.subr.bf16.mxu0 0
      %3413 = vmatpush1.bf16.msra.mxu0 %v3396
      %3414 = vmatprep.subr.bf16.mxu0 0
      %3415 = vmatpush1.bf16.msra.mxu0 %v3395
      %3416 = vmatprep.subr.bf16.mxu0 0
      %3417 = vmatpush1.bf16.msra.mxu0 %v3394
      %3418 = vmatprep.subr.bf16.mxu0 0
      %3419 = vmatpush1.bf16.msra.mxu0 %v3393
      %3420 = vmatprep.subr.bf16.mxu0 0
      %3421 = vmatpush2.bf16.msra.mxu0 0
      %3422 = vmatprep.subr.bf16.mxu0 0
      %3423 = vmatpush2.bf16.msra.mxu0 0
      %3424 = vmatprep.subr.bf16.mxu0 0
      %3425 = vmatpush2.bf16.msra.mxu0 0
      %3426 = vmatprep.subr.bf16.mxu0 0
      %3427 = vmatpush2.bf16.msra.mxu0 0
      %3428 = vmatprep.subr.bf16.mxu0 0
      %3429 = vmatpush2.bf16.msra.mxu0 0
      %3430 = vmatprep.subr.bf16.mxu0 0
      %3431 = vmatpush2.bf16.msra.mxu0 0
      %3432 = vmatprep.subr.bf16.mxu0 0
      %3433 = vmatpush2.bf16.msra.mxu0 0
      %3434 = vmatprep.subr.bf16.mxu0 0
      %3435 = vmatpush2.bf16.msra.mxu0 0
      %3436 = vmatprep.mubr.bf16.mxu0 0
      %3437 = vmatmul.mubr.bf16.gmra.mxu0 %v925
      %v3438 = vpop.f32.mrf.mxu0
      %v3439 = vadd.f32 0.0, %v3438
      %v3440 = vpop.f32.mrf.mxu0
      %v3441 = vpop.f32.mrf.mxu0
      %v3442 = vadd.f32 0.0, %v3441
      %v3443 = vpop.f32.mrf.mxu0
      %3444 = vmatprep.mubr.bf16.mxu0 0
      %3445 = vmatmul.mubr.bf16.gmra.mxu0 %v928
      %v3446 = vpop.f32.mrf.mxu0
      %v3447 = vadd.f32 0.0, %v3446
      %v3448 = vpop.f32.mrf.mxu0
      %v3449 = vpop.f32.mrf.mxu0
      %v3450 = vadd.f32 0.0, %v3449
      %v3451 = vpop.f32.mrf.mxu0
      %3452 = vmatprep.mubr.bf16.mxu0 0
      %3453 = vmatmul.mubr.bf16.gmra.mxu0 %v2224
      %v3454 = vpop.f32.mrf.mxu0
      %v3455 = vadd.f32 0.0, %v3454
      %v3456 = vpop.f32.mrf.mxu0
      %v3457 = vpop.f32.mrf.mxu0
      %v3458 = vadd.f32 0.0, %v3457
      %v3459 = vpop.f32.mrf.mxu0
      %3460 = vmatprep.mubr.bf16.mxu0 0
      %3461 = vmatmul.mubr.bf16.gmra.mxu0 %v3402
      %v3462 = vpop.f32.mrf.mxu0
      %v3463 = vadd.f32 0.0, %v3462
      %v3464 = vpop.f32.mrf.mxu0
      %v3465 = vpop.f32.mrf.mxu0
      %v3466 = vadd.f32 0.0, %v3465
      %v3467 = vpop.f32.mrf.mxu0
      %3468 = vdwg.mxu0
      %v3469 = vadd.f32 %v3348, %v3439
      %v3470 = vadd.f32 %v3349, %v3442
      %v3471 = vadd.f32 %v3350, %v3447
      %v3472 = vadd.f32 %v3351, %v3450
      %v3473 = vadd.f32 %v3352, %v3455
      %v3474 = vadd.f32 %v3353, %v3458
      %v3475 = vadd.f32 %v3354, %v3463
      %v3476 = vadd.f32 %v3355, %v3466
      %v3477 = vrot.slane %v248, 6
      %v3478 = vrot.slane %v3477, 4
      %v3479 = vrot.slane %v249, 6
      %v3480 = vsel %vm1005, %v3478, %v3479
      %s3481 = scalar_lea.vmem %s1, 768
      %v3482 = vld [vmem:[%s3481] sm:$0xf]
      %v3483 = vld [vmem:[%s3481 + $0x4] sm:$0xf]
      %v3484 = vld [vmem:[%s3481 + $0x8] sm:$0xf]
      %v3485 = vld [vmem:[%s3481 + $0xc] sm:$0xf]
      %v3486 = vld [vmem:[%s3481 + $0x10] sm:$0xf]
      %v3487 = vld [vmem:[%s3481 + $0x14] sm:$0xf]
      %v3488 = vld [vmem:[%s3481 + $0x18] sm:$0xf]
      %v3489 = vld [vmem:[%s3481 + $0x1c] sm:$0xf]
      %v3490 = vunpack.c.l.b16 %v3480
      %v3491 = vpack.c.b16 %v3490, %v2901
      %v3500 = vunpack.c.l.b16 %v3482
      %v3501 = vunpack.c.l.b16 %v3483
      %v3502 = vunpack.c.l.b16 %v3484
      %v3503 = vunpack.c.l.b16 %v3485
      %v3504 = vunpack.c.l.b16 %v3486
      %v3505 = vunpack.c.l.b16 %v3487
      %v3506 = vunpack.c.l.b16 %v3488
      %v3507 = vunpack.c.l.b16 %v3489
      %v3508 = vpack.c.b16 %v3501, %v3500
      %v3509 = vpack.c.b16 %v3503, %v3502
      %v3510 = vpack.c.b16 %v3505, %v3504
      %v3511 = vpack.c.b16 %v3507, %v3506
      %v3517 = vsel %vm418, %v3491, 0
      %3519 = vmatprep.subr.bf16.mxu0 0
      %3520 = vmatpush1.bf16.msra.mxu0 0
      %3521 = vmatprep.subr.bf16.mxu0 0
      %3522 = vmatpush1.bf16.msra.mxu0 0
      %3523 = vmatprep.subr.bf16.mxu0 0
      %3524 = vmatpush1.bf16.msra.mxu0 0
      %3525 = vmatprep.subr.bf16.mxu0 0
      %3526 = vmatpush1.bf16.msra.mxu0 0
      %3527 = vmatprep.subr.bf16.mxu0 0
      %3528 = vmatpush1.bf16.msra.mxu0 %v3511
      %3529 = vmatprep.subr.bf16.mxu0 0
      %3530 = vmatpush1.bf16.msra.mxu0 %v3510
      %3531 = vmatprep.subr.bf16.mxu0 0
      %3532 = vmatpush1.bf16.msra.mxu0 %v3509
      %3533 = vmatprep.subr.bf16.mxu0 0
      %3534 = vmatpush1.bf16.msra.mxu0 %v3508
      %3535 = vmatprep.subr.bf16.mxu0 0
      %3536 = vmatpush2.bf16.msra.mxu0 0
      %3537 = vmatprep.subr.bf16.mxu0 0
      %3538 = vmatpush2.bf16.msra.mxu0 0
      %3539 = vmatprep.subr.bf16.mxu0 0
      %3540 = vmatpush2.bf16.msra.mxu0 0
      %3541 = vmatprep.subr.bf16.mxu0 0
      %3542 = vmatpush2.bf16.msra.mxu0 0
      %3543 = vmatprep.subr.bf16.mxu0 0
      %3544 = vmatpush2.bf16.msra.mxu0 0
      %3545 = vmatprep.subr.bf16.mxu0 0
      %3546 = vmatpush2.bf16.msra.mxu0 0
      %3547 = vmatprep.subr.bf16.mxu0 0
      %3548 = vmatpush2.bf16.msra.mxu0 0
      %3549 = vmatprep.subr.bf16.mxu0 0
      %3550 = vmatpush2.bf16.msra.mxu0 0
      %3551 = vmatprep.mubr.bf16.mxu0 0
      %3552 = vmatmul.mubr.bf16.gmra.mxu0 %v1090
      %v3553 = vpop.f32.mrf.mxu0
      %v3554 = vadd.f32 0.0, %v3553
      %v3555 = vpop.f32.mrf.mxu0
      %v3556 = vpop.f32.mrf.mxu0
      %v3557 = vadd.f32 0.0, %v3556
      %v3558 = vpop.f32.mrf.mxu0
      %3559 = vmatprep.mubr.bf16.mxu0 0
      %3560 = vmatmul.mubr.bf16.gmra.mxu0 %v1093
      %v3561 = vpop.f32.mrf.mxu0
      %v3562 = vadd.f32 0.0, %v3561
      %v3563 = vpop.f32.mrf.mxu0
      %v3564 = vpop.f32.mrf.mxu0
      %v3565 = vadd.f32 0.0, %v3564
      %v3566 = vpop.f32.mrf.mxu0
      %3567 = vmatprep.mubr.bf16.mxu0 0
      %3568 = vmatmul.mubr.bf16.gmra.mxu0 %v2339
      %v3569 = vpop.f32.mrf.mxu0
      %v3570 = vadd.f32 0.0, %v3569
      %v3571 = vpop.f32.mrf.mxu0
      %v3572 = vpop.f32.mrf.mxu0
      %v3573 = vadd.f32 0.0, %v3572
      %v3574 = vpop.f32.mrf.mxu0
      %3575 = vmatprep.mubr.bf16.mxu0 0
      %3576 = vmatmul.mubr.bf16.gmra.mxu0 %v3517
      %v3577 = vpop.f32.mrf.mxu0
      %v3578 = vadd.f32 0.0, %v3577
      %v3579 = vpop.f32.mrf.mxu0
      %v3580 = vpop.f32.mrf.mxu0
      %v3581 = vadd.f32 0.0, %v3580
      %v3582 = vpop.f32.mrf.mxu0
      %3583 = vdwg.mxu0
      %v3584 = vadd.f32 %v3469, %v3554
      %v3585 = vadd.f32 %v3470, %v3557
      %v3586 = vadd.f32 %v3471, %v3562
      %v3587 = vadd.f32 %v3472, %v3565
      %v3588 = vadd.f32 %v3473, %v3570
      %v3589 = vadd.f32 %v3474, %v3573
      %v3590 = vadd.f32 %v3475, %v3578
      %v3591 = vadd.f32 %v3476, %v3581
      %v3592 = vmax.f32 %v3584, 0.0
      %v3593 = vmax.f32 %v3585, 0.0
      %v3594 = vmax.f32 %v3586, 0.0
      %v3595 = vmax.f32 %v3587, 0.0
      %v3596 = vmax.f32 %v3588, 0.0
      %v3597 = vmax.f32 %v3589, 0.0
      %v3598 = vmax.f32 %v3590, 0.0
      %v3599 = vmax.f32 %v3591, 0.0
      %v3600 = vunpack.c.l.bf16 %v639
      %v3601 = vunpack.c.l.bf16 %v643
      %v3602 = vunpack.c.l.bf16 %v647
      %v3603 = vunpack.c.l.bf16 %v651
      %v3604 = vunpack.c.l.bf16 %v655
      %v3605 = vunpack.c.l.bf16 %v659
      %v3606 = vunpack.c.l.bf16 %v1433
      %v3607 = vunpack.c.l.bf16 %v2058
      %3616 = vrot.lane.b32.xlu0 %v3600, 64
      %v3617 = vpop.permute.xlu0 %3616
      %3618 = vrot.lane.b32.xlu0 %v3601, 64
      %v3619 = vpop.permute.xlu0 %3618
      %3620 = vrot.lane.b32.xlu0 %v3602, 64
      %v3621 = vpop.permute.xlu0 %3620
      %3622 = vrot.lane.b32.xlu0 %v3603, 64
      %v3623 = vpop.permute.xlu0 %3622
      %3624 = vrot.lane.b32.xlu0 %v3604, 64
      %v3625 = vpop.permute.xlu0 %3624
      %3626 = vrot.lane.b32.xlu0 %v3605, 64
      %v3627 = vpop.permute.xlu0 %3626
      %3628 = vrot.lane.b32.xlu0 %v3606, 64
      %v3629 = vpop.permute.xlu0 %3628
      %3630 = vrot.lane.b32.xlu0 %v3607, 64
      %v3631 = vpop.permute.xlu0 %3630
      %v3640 = vsel %vm418, %v3600, %v3617
      %v3641 = vsel %vm418, %v3601, %v3619
      %v3642 = vsel %vm418, %v3602, %v3621
      %v3643 = vsel %vm418, %v3603, %v3623
      %v3644 = vsel %vm418, %v3604, %v3625
      %v3645 = vsel %vm418, %v3605, %v3627
      %v3646 = vsel %vm418, %v3606, %v3629
      %v3647 = vsel %vm418, %v3607, %v3631
      %v3648 = vadd.f32 %v3592, %v3640
      %v3649 = vadd.f32 %v3593, %v3641
      %v3650 = vadd.f32 %v3594, %v3642
      %v3651 = vadd.f32 %v3595, %v3643
      %v3652 = vadd.f32 %v3596, %v3644
      %v3653 = vadd.f32 %v3597, %v3645
      %v3654 = vadd.f32 %v3598, %v3646
      %v3655 = vadd.f32 %v3599, %v3647
      %v3656 = vld [vmem:[%s2] sm:$0xff]
      %v3657 = vld [vmem:[%s2 + $0x8] sm:$0xff]
      %v3659 = vsel %vm418, %v3656, 0
      %v3662 = vsel %vm418, %v3657, 0
      %3664 = vmatprep.subr.mxu0 0.0
      %3665 = vmatpush1.msra.mxu0 0.0
      %3666 = vmatprep.subr.mxu0 0.0
      %3667 = vmatpush1.msra.mxu0 0.0
      %3668 = vmatprep.subr.mxu0 0.0
      %3669 = vmatpush1.msra.mxu0 0.0
      %3670 = vmatprep.subr.mxu0 0.0
      %3671 = vmatpush1.msra.mxu0 0.0
      %3672 = vmatprep.subr.mxu0 0.0
      %3673 = vmatpush1.msra.mxu0 0.0
      %3674 = vmatprep.subr.mxu0 0.0
      %3675 = vmatpush1.msra.mxu0 0.0
      %3676 = vmatprep.subr.mxu0 0.0
      %3677 = vmatpush1.msra.mxu0 0.0
      %3678 = vmatprep.subr.mxu0 0.0
      %3679 = vmatpush1.msra.mxu0 0.0
      %3680 = vmatprep.subr.mxu0 0.0
      %3681 = vmatpush1.msra.mxu0 %v3655
      %3682 = vmatprep.subr.mxu0 0.0
      %3683 = vmatpush1.msra.mxu0 %v3654
      %3684 = vmatprep.subr.mxu0 0.0
      %3685 = vmatpush1.msra.mxu0 %v3653
      %3686 = vmatprep.subr.mxu0 0.0
      %3687 = vmatpush1.msra.mxu0 %v3652
      %3688 = vmatprep.subr.mxu0 0.0
      %3689 = vmatpush1.msra.mxu0 %v3651
      %3690 = vmatprep.subr.mxu0 0.0
      %3691 = vmatpush1.msra.mxu0 %v3650
      %3692 = vmatprep.subr.mxu0 0.0
      %3693 = vmatpush1.msra.mxu0 %v3649
      %3694 = vmatprep.subr.mxu0 0.0
      %3695 = vmatpush1.msra.mxu0 %v3648
      %3696 = vmatprep.subr.mxu0 0.0
      %3697 = vmatpush2.msra.mxu0 0.0
      %3698 = vmatprep.subr.mxu0 0.0
      %3699 = vmatpush2.msra.mxu0 0.0
      %3700 = vmatprep.subr.mxu0 0.0
      %3701 = vmatpush2.msra.mxu0 0.0
      %3702 = vmatprep.subr.mxu0 0.0
      %3703 = vmatpush2.msra.mxu0 0.0
      %3704 = vmatprep.subr.mxu0 0.0
      %3705 = vmatpush2.msra.mxu0 0.0
      %3706 = vmatprep.subr.mxu0 0.0
      %3707 = vmatpush2.msra.mxu0 0.0
      %3708 = vmatprep.subr.mxu0 0.0
      %3709 = vmatpush2.msra.mxu0 0.0
      %3710 = vmatprep.subr.mxu0 0.0
      %3711 = vmatpush2.msra.mxu0 0.0
      %3712 = vmatprep.subr.mxu0 0.0
      %3713 = vmatpush2.msra.mxu0 0.0
      %3714 = vmatprep.subr.mxu0 0.0
      %3715 = vmatpush2.msra.mxu0 0.0
      %3716 = vmatprep.subr.mxu0 0.0
      %3717 = vmatpush2.msra.mxu0 0.0
      %3718 = vmatprep.subr.mxu0 0.0
      %3719 = vmatpush2.msra.mxu0 0.0
      %3720 = vmatprep.subr.mxu0 0.0
      %3721 = vmatpush2.msra.mxu0 0.0
      %3722 = vmatprep.subr.mxu0 0.0
      %3723 = vmatpush2.msra.mxu0 0.0
      %3724 = vmatprep.subr.mxu0 0.0
      %3725 = vmatpush2.msra.mxu0 0.0
      %3726 = vmatprep.subr.mxu0 0.0
      %3727 = vmatpush2.msra.mxu0 0.0
      %3728 = vmatprep.mubr.f32.mxu0 0.0
      %3729 = vmatmul.mubr.f32.gmra.mxu0 %v3659
      %v3730 = vpop.f32.mrf.mxu0
      %v3731 = vadd.f32 0.0, %v3730
      %v3732 = vpop.f32.mrf.mxu0
      %3733 = vmatprep.mubr.f32.mxu0 0.0
      %3734 = vmatmul.mubr.f32.gmra.mxu0 %v3662
      %v3735 = vpop.f32.mrf.mxu0
      %v3736 = vadd.f32 0.0, %v3735
      %v3737 = vpop.f32.mrf.mxu0
      %3738 = vdwg.mxu0
      %v3739 = vld [vmem:[%s3] sm:$0xff]
      %v3740 = vld [vmem:[%s3 + $0x8] sm:$0xff]
      %v3741 = vld [vmem:[%s3 + $0x10] sm:$0xff]
      %v3742 = vld [vmem:[%s3 + $0x18] sm:$0xff]
      %v3743 = vld [vmem:[%s3 + $0x20] sm:$0xff]
      %v3744 = vld [vmem:[%s3 + $0x28] sm:$0xff]
      %v3745 = vld [vmem:[%s3 + $0x30] sm:$0xff]
      %v3746 = vld [vmem:[%s3 + $0x38] sm:$0xff]
      %v3747 = vld [vmem:[%s3 + $0x40] sm:$0xff]
      %v3748 = vld [vmem:[%s3 + $0x48] sm:$0xff]
      %v3749 = vld [vmem:[%s3 + $0x50] sm:$0xff]
      %v3750 = vld [vmem:[%s3 + $0x58] sm:$0xff]
      %v3751 = vld [vmem:[%s3 + $0x60] sm:$0xff]
      %v3752 = vld [vmem:[%s3 + $0x68] sm:$0xff]
      %v3753 = vld [vmem:[%s3 + $0x70] sm:$0xff]
      %v3754 = vld [vmem:[%s3 + $0x78] sm:$0xff]
      %v3755 = vld [vmem:[%s4] sm:$0x1]
      %v3757 = vlaneseq
      %v3758 = vshrl.u32 %v3757, 7
      %v3759 = vsub.s32 0, %v3758
      %v3760 = vrot.slane %v3755, %v3759
      %3762 = vmatprep.subr.mxu0 0.0
      %3763 = vmatpush1.msra.mxu0 %v3754
      %3764 = vmatprep.subr.mxu0 0.0
      %3765 = vmatpush1.msra.mxu0 %v3753
      %3766 = vmatprep.subr.mxu0 0.0
      %3767 = vmatpush1.msra.mxu0 %v3752
      %3768 = vmatprep.subr.mxu0 0.0
      %3769 = vmatpush1.msra.mxu0 %v3751
      %3770 = vmatprep.subr.mxu0 0.0
      %3771 = vmatpush1.msra.mxu0 %v3750
      %3772 = vmatprep.subr.mxu0 0.0
      %3773 = vmatpush1.msra.mxu0 %v3749
      %3774 = vmatprep.subr.mxu0 0.0
      %3775 = vmatpush1.msra.mxu0 %v3748
      %3776 = vmatprep.subr.mxu0 0.0
      %3777 = vmatpush1.msra.mxu0 %v3747
      %3778 = vmatprep.subr.mxu0 0.0
      %3779 = vmatpush1.msra.mxu0 %v3746
      %3780 = vmatprep.subr.mxu0 0.0
      %3781 = vmatpush1.msra.mxu0 %v3745
      %3782 = vmatprep.subr.mxu0 0.0
      %3783 = vmatpush1.msra.mxu0 %v3744
      %3784 = vmatprep.subr.mxu0 0.0
      %3785 = vmatpush1.msra.mxu0 %v3743
      %3786 = vmatprep.subr.mxu0 0.0
      %3787 = vmatpush1.msra.mxu0 %v3742
      %3788 = vmatprep.subr.mxu0 0.0
      %3789 = vmatpush1.msra.mxu0 %v3741
      %3790 = vmatprep.subr.mxu0 0.0
      %3791 = vmatpush1.msra.mxu0 %v3740
      %3792 = vmatprep.subr.mxu0 0.0
      %3793 = vmatpush1.msra.mxu0 %v3739
      %3794 = vmatprep.subr.mxu0 0.0
      %3795 = vmatpush2.msra.mxu0 0.0
      %3796 = vmatprep.subr.mxu0 0.0
      %3797 = vmatpush2.msra.mxu0 0.0
      %3798 = vmatprep.subr.mxu0 0.0
      %3799 = vmatpush2.msra.mxu0 0.0
      %3800 = vmatprep.subr.mxu0 0.0
      %3801 = vmatpush2.msra.mxu0 0.0
      %3802 = vmatprep.subr.mxu0 0.0
      %3803 = vmatpush2.msra.mxu0 0.0
      %3804 = vmatprep.subr.mxu0 0.0
      %3805 = vmatpush2.msra.mxu0 0.0
      %3806 = vmatprep.subr.mxu0 0.0
      %3807 = vmatpush2.msra.mxu0 0.0
      %3808 = vmatprep.subr.mxu0 0.0
      %3809 = vmatpush2.msra.mxu0 0.0
      %3810 = vmatprep.subr.mxu0 0.0
      %3811 = vmatpush2.msra.mxu0 0.0
      %3812 = vmatprep.subr.mxu0 0.0
      %3813 = vmatpush2.msra.mxu0 0.0
      %3814 = vmatprep.subr.mxu0 0.0
      %3815 = vmatpush2.msra.mxu0 0.0
      %3816 = vmatprep.subr.mxu0 0.0
      %3817 = vmatpush2.msra.mxu0 0.0
      %3818 = vmatprep.subr.mxu0 0.0
      %3819 = vmatpush2.msra.mxu0 0.0
      %3820 = vmatprep.subr.mxu0 0.0
      %3821 = vmatpush2.msra.mxu0 0.0
      %3822 = vmatprep.subr.mxu0 0.0
      %3823 = vmatpush2.msra.mxu0 0.0
      %3824 = vmatprep.subr.mxu0 0.0
      %3825 = vmatpush2.msra.mxu0 0.0
      %3826 = vmatprep.mubr.f32.mxu0 0.0
      %3827 = vmatmul.mubr.f32.gmra.mxu0 %v3731
      %v3828 = vpop.f32.mrf.mxu0
      %v3829 = vadd.f32 %v3760, %v3828
      %v3830 = vpop.f32.mrf.mxu0
      %3831 = vmatprep.mubr.f32.mxu0 0.0
      %3832 = vmatmul.mubr.f32.gmra.mxu0 %v3736
      %v3833 = vpop.f32.mrf.mxu0
      %v3834 = vadd.f32 %v3760, %v3833
      %v3835 = vpop.f32.mrf.mxu0
      %3836 = vdwg.mxu0
      %3837 = vst.msk [vmem:[%s224] sm:$0xff] %vm418, %v3829
      %3838 = vst.msk [vmem:[%s224 + $0x8] sm:$0xff] %vm418, %v3834
      %p3839 = scmp.lt.s32.totalorder %s16, 1
      %s3840 = scalar_select %p3839, %s16, 1
      %s3841 = smul.addr %s3840, 2
      %s3842 = smul.addr %s3841, 8
      %s3843 = scalar_lea.vmem %s5, %s3842
      // Predicated region
      $region41: #{convblock_forward.1} parent=39 // pred_check
        %p3844 = pneg %p144
      $region42: #{convblock_forward.1} parent=39 // pred_check_branch
        %3846 = sbr.rel (%p3844) target = $region44
      $region43: #{convblock_forward.1} parent=39 // pred_region
        _
      $region44: #{convblock_forward.1} parent=39 // pred_fallthru
        _
    $region40: #{convblock_forward.1} parent=5 // pred_fallthru
      _
    %p3847 = scmp.le.s32.totalorder 2, %s11
    // Predicated region
    $region45: #{convblock_forward.1} parent=5 // pred_check
      %p3848 = pneg %p3847
    $region46: #{convblock_forward.1} parent=5 // pred_check_branch
      %3850 = sbr.rel (%p3848) target = $region48
    $region47: #{convblock_forward.1} parent=5 // pred_region
      %s3851 = ssub.s32 %s11, 2
      // Predicated region
      $region49: #{convblock_forward.1} parent=47 // pred_check
        %p3852 = pneg %p150
      $region50: #{convblock_forward.1} parent=47 // pred_check_branch
        %3854 = sbr.rel (%p3852) target = $region52
      $region51: #{convblock_forward.1} parent=47 // pred_region
        %p3855 = scmp.lt.s32.totalorder %s17, 1
        %s3856 = scalar_select %p3855, %s17, 1
        %s3857 = smul.addr %s3856, 2
        %s3858 = smul.addr %s3857, 8
        %s3859 = scalar_lea.vmem %s5, %s3858
      $region52: #{convblock_forward.1} parent=47 // pred_fallthru
        _
    $region48: #{convblock_forward.1} parent=5 // pred_fallthru
      _
  $region6: #{convblock_forward.1} parent=0 // loop_footer
    %s15 = sadd.s32 1, %s11
  $region7: #{convblock_forward.1} parent=0 // loop_footer_branch
    %10 = sbr.rel target = $region3
  $region8: #{convblock_forward.1} parent=0 // loop_exit
    _

</llo_original>
